<compile_context>
chip_gen: v7x
topology: tpu7x:2x2x1
jax: 0.10.0
libtpu: 0.0.40
codegen_flags: <defaults>
</compile_context>

<pallas_src>
import functools

import jax
import jax.numpy as jnp
from jax.experimental import pallas as pl
from jax.experimental.pallas import tpu as pltpu

F32 = jnp.float32
BF16 = jnp.bfloat16


# ----------------------------------------------------------------------------
# Packed-operand layout (row offsets into the single bf16 weight slab and the
# single f32 bias slab).  All offsets are multiples of 8 sublanes; every block
# is 128 lanes wide.  Assumes hidden_size == 128.
# ----------------------------------------------------------------------------
_WP_LAYOUT = (
    ("w2d", 384), ("w1", 384), ("w2", 384), ("w3", 384),   # fused conv taps
    ("wi", 768),                                           # GRU x-proj, 6 gates
    ("whf", 384), ("whb", 384),                            # GRU h-proj, 3 gates each
    ("wfc", 256),                                           # seq_fc
    ("wf1", 128), ("wf2", 128), ("wf3", 128),               # feature MLP
    ("wh1s", 128), ("wh1f", 128), ("wh2", 128),             # head (BN folded)
)
_WP_OFF = {}
_r = 0
for _n, _c in _WP_LAYOUT:
    _WP_OFF[_n] = _r
    _r += _c
_WP_ROWS = _r                       # = 4096

_BIAS_ROW = dict(b2d=0, b1=1, b2=2, b3=3,
                 bi=4,              # 6 rows: [r,z,n] fwd then [r,z,n] bwd
                 bhf=10, bhb=13,    # 3 rows each
                 bfc=16, bf1=17, bf2=18, bf3=19, bh1=20, bh2=21)
_BP_ROWS = 24


# ----------------------------------------------------------------------------
# In-kernel math helpers
# ----------------------------------------------------------------------------
def _erf(x):
    # Abramowitz & Stegun 7.1.26 rational approximation, f32-accurate.
    a1, a2, a3, a4, a5 = 0.254829592, -0.284496736, 1.421413741, -1.453152027, 1.061405429
    p = 0.3275911
    sgn = jnp.where(x >= 0.0, 1.0, -1.0)
    ax = jnp.abs(x)
    t = pl.reciprocal(1.0 + p * ax, approx=True)          # EUP slot
    poly = ((((a5 * t + a4) * t + a3) * t + a2) * t + a1) * t
    return sgn * (1.0 - poly * jnp.exp(-ax * ax))


def _gelu(x):
    # nn.GELU() default (approximate='none'): 0.5*x*(1+erf(x/sqrt(2)))
    return 0.5 * x * (1.0 + _erf(x * 0.7071067811865476))


def _sigmoid(x):
    return pl.reciprocal(1.0 + jnp.exp(-x), approx=True)  # EUP slot


def _dot(a, b):
    return jnp.dot(a, b, preferred_element_type=jnp.float32)


# ----------------------------------------------------------------------------
# Fully fused forward kernel
# ----------------------------------------------------------------------------
def _fused_forward_kernel(x_ref, feat_ref, wp_ref, bp_ref, o_ref, *, bk, w_len, hidden):
    BK, W, H = bk, w_len, hidden

    def wslab(name, rows, extra=0):
        off = _WP_OFF[name] + extra
        return wp_ref[off:off + rows, :]                   # bf16 view load

    def brow(name, gate=0):
        r = _BIAS_ROW[name] + gate
        return bp_ref[r:r + 1, :]                          # (1, 128) f32

    def conv3_gelu(a, wname, bname, L):
        # Conv1d(k=3, pad=1) on a time-major (L*BK, 128) f32 activation:
        # the +-1-length-shifted copies are built with XLU rolls (wrapped rows
        # masked to zero), concatenated along lanes, and contracted in ONE
        # (N, 384) @ (384, 128) bf16 matmul against the folded-BN weight.
        n = a.shape[0]
        ri = jax.lax.broadcasted_iota(jnp.int32, (n, 1), 0)
        zero = jnp.zeros_like(a)
        left = jnp.where(ri < BK, zero, pltpu.roll(a, BK, axis=0))            # a[w-1]
        right = jnp.where(ri >= (L - 1) * BK, zero, pltpu.roll(a, n - BK, axis=0))  # a[w+1]
        taps = jnp.concatenate([left, a, right], axis=1).astype(BF16)          # (n, 384)
        y = _dot(taps, wslab(wname, 3 * 128)) + brow(bname)
        return _gelu(y)

    def avgpool2(y, L):
        # AvgPool1d(2) on time-major rows: average consecutive length positions
        # via one static-slice add (no selector matmul).
        C = y.shape[1]
        y3 = y.reshape(L // 2, 2 * BK, C)
        return ((y3[:, :BK, :] + y3[:, BK:, :]) * 0.5).reshape((L // 2) * BK, C)

    # ---- seq_processor ------------------------------------------------------
    # Conv2d(2,128,(2,3),pad=(0,1)) collapses H=2 into the channel axis -> a
    # 3-tap conv over W with 4 effective input channels (padded to 128 lanes),
    # folded BN2d + GELU.  Then 3 x (Conv1d + BN + GELU + AvgPool1d(2)).
    a = conv3_gelu(x_ref[0], "w2d", "b2d", W)              # (W*BK, 128) f32
    L = W
    for wname, bname in (("w1", "b1"), ("w2", "b2"), ("w3", "b3")):
        a = avgpool2(conv3_gelu(a, wname, bname, L), L)
        L //= 2
    T = L                                                   # = W // 8

    # ---- bidirectional GRU (gate order [r, z, n]) ---------------------------
    # Input projection for BOTH directions / all 6 gates hoisted out of the
    # time loop (one matmul each over all timesteps).
    a_bf = a.astype(BF16)                                   # (T*BK, 128)
    gr_f, gz_f, gn_f, gr_b, gz_b, gn_b = [
        _dot(a_bf, wslab("wi", H, g * H)) + brow("bi", g) for g in range(6)]

    whf = [wslab("whf", H, g * H) for g in range(3)]
    whb = [wslab("whb", H, g * H) for g in range(3)]
    bhf = [brow("bhf", g) for g in range(3)]
    bhb = [brow("bhb", g) for g in range(3)]

    h_f = jnp.zeros((BK, H), F32)
    h_b = jnp.zeros((BK, H), F32)

    def gru_cell(gr, gz, gn, h, wh, bh):
        h_bf = h.astype(BF16)
        ghr = _dot(h_bf, wh[0]) + bh[0]
        ghz = _dot(h_bf, wh[1]) + bh[1]
        ghn = _dot(h_bf, wh[2]) + bh[2]                     # b_hn stays inside r*(.)
        r = _sigmoid(gr + ghr)
        z = _sigmoid(gz + ghz)
        n = jnp.tanh(gn + r * ghn)
        return (1.0 - z) * n + z * h

    for t in range(T):        # T is small & static after three pools -> unrolled;
        # forward and backward directions interleave in the same loop.
        sf = slice(t * BK, (t + 1) * BK)
        sb = slice((T - 1 - t) * BK, (T - t) * BK)
        h_f = gru_cell(gr_f[sf], gz_f[sf], gn_f[sf], h_f, whf, bhf)
        h_b = gru_cell(gr_b[sb], gz_b[sb], gn_b[sb], h_b, whb, bhb)

    h_cat = jnp.concatenate([h_f, h_b], axis=1).astype(BF16)     # (BK, 2H)
    seq_feat = _dot(h_cat, wslab("wfc", 2 * H)) + brow("bfc")    # (BK,128): 12 real

    # ---- feature_processor (Dropout == identity at inference) ---------------
    f = feat_ref[...].astype(BF16)                               # (BK, 128) padded
    f = jnp.maximum(_dot(f, wslab("wf1", 128)) + brow("bf1"), 0.0)
    f = jnp.maximum(_dot(f.astype(BF16), wslab("wf2", 128)) + brow("bf2"), 0.0)
    femb = _dot(f.astype(BF16), wslab("wf3", 128)) + brow("bf3")

    # ---- head: BN1d(140) folded; cat([seq(12), feat(128)]) @ W split into two
    # row-block matmuls so no 140-wide tensor ever exists.
    z1 = (_dot(seq_feat.astype(BF16), wslab("wh1s", 128))
          + _dot(femb.astype(BF16), wslab("wh1f", 128)) + brow("bh1"))
    z1 = jnp.maximum(z1, 0.0)                                    # (BK,128): 64 real
    o_ref[...] = _dot(z1.astype(BF16), wslab("wh2", 128)) + brow("bh2")   # 3 real


# ----------------------------------------------------------------------------
# Parameter preparation: BN folding, fused conv taps, lane padding, packing
# ----------------------------------------------------------------------------
def fold_params(p, hidden_size=128, num_features=20):
    """Fold BatchNorm into weights/biases, build fused 3-tap conv weights,
    zero-pad every channel axis to 128 lanes, and pack everything into one
    bf16 weight slab (_WP_ROWS, 128) plus one f32 bias slab (_BP_ROWS, 128)."""
    assert hidden_size == 128, "packed layout assumes hidden_size == 128"
    H = hidden_size

    def bn_scale_shift(bn, eps=1e-5):
        s = jnp.asarray(bn["gamma"], F32) / jnp.sqrt(jnp.asarray(bn["var"], F32) + eps)
        t = jnp.asarray(bn["beta"], F32) - jnp.asarray(bn["mean"], F32) * s
        return s, t

    def pad2(x, rows, cols=128):
        x = jnp.asarray(x, F32)
        return jnp.pad(x, ((0, rows - x.shape[0]), (0, cols - x.shape[1])))

    def pad_row(x, cols=128):
        x = jnp.asarray(x, F32).reshape(1, -1)
        return jnp.pad(x, ((0, 0), (0, cols - x.shape[1])))

    def fused_conv(w_im2col, b, bn, cin, cout):
        # im2col rows ordered (cin, k) with k fastest -> taps (k=3, cin, cout);
        # fold BN, pad to (3, 128, 128), stack taps along rows -> (384, 128).
        s, t = bn_scale_shift(bn)
        taps = jnp.asarray(w_im2col, F32).reshape(cin, 3, cout).transpose(1, 0, 2)
        taps = taps * s[None, None, :]
        bias = jnp.asarray(b, F32) * s + t
        taps = jnp.pad(taps, ((0, 0), (0, 128 - cin), (0, 128 - cout)))
        return taps.reshape(3 * 128, 128), pad_row(bias)

    pieces, biases = {}, {}

    # Conv2d(2,128,(2,3)): row index c*6+h*3+kw == (c*2+h)*3+kw -> same layout
    # as a k=3 Conv1d with 4 input channels (columns ordered c*2+h).
    pieces["w2d"], biases["b2d"] = fused_conv(p["conv2d_w"], p["conv2d_b"], p["bn2d"], 4, 128)
    pieces["w1"], biases["b1"] = fused_conv(p["conv1_w"], p["conv1_b"], p["bn1"], 128, 108)
    pieces["w2"], biases["b2"] = fused_conv(p["conv2_w"], p["conv2_b"], p["bn2"], 108, 108)
    pieces["w3"], biases["b3"] = fused_conv(p["conv3_w"], p["conv3_b"], p["bn3"], 108, 128)

    # GRU: split the (in, 3H) projections into per-gate (in, H) row blocks.
    wi_f = jnp.asarray(p["gru_wi_f"], F32)
    wi_b = jnp.asarray(p["gru_wi_b"], F32)
    pieces["wi"] = jnp.concatenate(
        [wi_f[:, g * H:(g + 1) * H] for g in range(3)]
        + [wi_b[:, g * H:(g + 1) * H] for g in range(3)], axis=0)        # (768,128)
    whf = jnp.asarray(p["gru_wh_f"], F32)
    whb = jnp.asarray(p["gru_wh_b"], F32)
    pieces["whf"] = jnp.concatenate([whf[:, g * H:(g + 1) * H] for g in range(3)], axis=0)
    pieces["whb"] = jnp.concatenate([whb[:, g * H:(g + 1) * H] for g in range(3)], axis=0)

    pieces["wfc"] = pad2(p["seq_fc_w"], 2 * H)
    biases["bfc"] = pad_row(p["seq_fc_b"])

    pieces["wf1"] = pad2(p["feat1_w"], 128)
    pieces["wf2"] = pad2(p["feat2_w"], 128)
    pieces["wf3"] = pad2(p["feat3_w"], 128)
    biases["bf1"] = pad_row(p["feat1_b"])
    biases["bf2"] = pad_row(p["feat2_b"])
    biases["bf3"] = pad_row(p["feat3_b"])

    # head: BN1d(140) folded into the first Linear, split by input row blocks
    # (12 seq_fc lanes vs 128 feature_emb lanes).
    s_h, t_h = bn_scale_shift(p["bn_head"])
    h1 = jnp.asarray(p["head1_w"], F32)                                   # (140, 64)
    pieces["wh1s"] = pad2(s_h[:12, None] * h1[:12, :], 128)
    pieces["wh1f"] = pad2(s_h[12:, None] * h1[12:, :], 128)
    biases["bh1"] = pad_row(t_h @ h1 + jnp.asarray(p["head1_b"], F32))
    pieces["wh2"] = pad2(p["head2_w"], 128)
    biases["bh2"] = pad_row(p["head2_b"])

    # ---- pack the weight slab (order must follow _WP_LAYOUT) ----------------
    wp = jnp.concatenate([pieces[name] for name, _ in _WP_LAYOUT], axis=0)
    assert wp.shape == (_WP_ROWS, 128)
    wp = wp.astype(BF16)

    # ---- pack the bias slab (order must follow _BIAS_ROW) -------------------
    bi_f = jnp.asarray(p["gru_bi_f"], F32)
    bi_b = jnp.asarray(p["gru_bi_b"], F32)
    bh_f = jnp.asarray(p["gru_bh_f"], F32)
    bh_b = jnp.asarray(p["gru_bh_b"], F32)
    rows = [biases["b2d"], biases["b1"], biases["b2"], biases["b3"]]
    rows += [bi_f[g * H:(g + 1) * H].reshape(1, H) for g in range(3)]
    rows += [bi_b[g * H:(g + 1) * H].reshape(1, H) for g in range(3)]
    rows += [bh_f[g * H:(g + 1) * H].reshape(1, H) for g in range(3)]
    rows += [bh_b[g * H:(g + 1) * H].reshape(1, H) for g in range(3)]
    rows += [biases["bfc"], biases["bf1"], biases["bf2"], biases["bf3"],
             biases["bh1"], biases["bh2"]]
    bp = jnp.concatenate(rows, axis=0)
    bp = jnp.pad(bp, ((0, _BP_ROWS - bp.shape[0]), (0, 0)))
    assert bp.shape == (_BP_ROWS, 128)

    return wp, bp


# ----------------------------------------------------------------------------
# Deterministic parameter init (synthetic; shapes follow the PyTorch module)
# ----------------------------------------------------------------------------
def init_params(key, hidden_size=128, num_features=20):
    keys = iter(jax.random.split(key, 64))

    def nrm(shape, scale=0.1):
        return scale * jax.random.normal(next(keys), shape, F32)

    def bn(c):
        return dict(gamma=1.0 + nrm((c,), 0.05), beta=nrm((c,), 0.05),
                    mean=nrm((c,), 0.05),
                    var=1.0 + 0.1 * jax.random.uniform(next(keys), (c,), F32))

    H = hidden_size
    p = {}
    # seq_processor (conv weights stored in im2col layout (Cin*k, Cout), k fastest)
    p["conv2d_w"], p["conv2d_b"], p["bn2d"] = nrm((2 * 2 * 3, 128)), nrm((128,)), bn(128)
    p["conv1_w"], p["conv1_b"], p["bn1"] = nrm((128 * 3, 108)), nrm((108,)), bn(108)
    p["conv2_w"], p["conv2_b"], p["bn2"] = nrm((108 * 3, 108)), nrm((108,)), bn(108)
    p["conv3_w"], p["conv3_b"], p["bn3"] = nrm((108 * 3, 128)), nrm((128,)), bn(128)
    # bidirectional GRU (1 layer), weights stored pre-transposed: (in, 3H), gates [r,z,n]
    for d in ("f", "b"):
        p[f"gru_wi_{d}"] = nrm((128, 3 * H))
        p[f"gru_wh_{d}"] = nrm((H, 3 * H))
        p[f"gru_bi_{d}"] = nrm((3 * H,))
        p[f"gru_bh_{d}"] = nrm((3 * H,))
    p["seq_fc_w"], p["seq_fc_b"] = nrm((2 * H, 12)), nrm((12,))
    # feature_processor
    p["feat1_w"], p["feat1_b"] = nrm((num_features, 96)), nrm((96,))
    p["feat2_w"], p["feat2_b"] = nrm((96, 64)), nrm((64,))
    p["feat3_w"], p["feat3_b"] = nrm((64, 128)), nrm((128,))
    # head
    p["bn_head"] = bn(140)
    p["head1_w"], p["head1_b"] = nrm((140, 64)), nrm((64,))
    p["head2_w"], p["head2_b"] = nrm((64, 3)), nrm((3,))
    return p


# ----------------------------------------------------------------------------
# Forward pass (single fused pallas_call)
# ----------------------------------------------------------------------------
def gene_interaction_forward(packed, seq_input, feature_input, hidden_size=128):
    wp, bp = packed
    B, _, _, W = seq_input.shape
    assert hidden_size == 128
    assert W % 8 == 0 and W >= 8, "need W divisible by 8 (three AvgPool1d(2) stages)"
    NF = feature_input.shape[1]

    # Batch-block size: full batch when tiny; otherwise <=64 and at least two
    # grid blocks so the "parallel" axis can shard across TensorCores (v7x).
    if B % 8 == 0 and B >= 16:
        bk = min(64, B // 2)
        bk -= bk % 8
        while B % bk:
            bk -= 8
    else:
        bk = B
    G = B // bk

    # Time-major, channels-last seq input, pre-blocked per grid step:
    # block g holds rows (w*bk + b_local), column (c*2 + h), padded to 128 lanes.
    x0 = seq_input.astype(F32).transpose(3, 0, 1, 2).reshape(W, B, 4)
    x0 = jnp.pad(x0, ((0, 0), (0, 0), (0, 128 - 4)))
    x0 = x0.reshape(W, G, bk, 128).transpose(1, 0, 2, 3).reshape(G, W * bk, 128)
    feat = jnp.pad(feature_input.astype(F32), ((0, 0), (0, 128 - NF)))

    # Advisory cost estimate for XLA's scheduler.
    conv_rows = W + W + W // 2 + W // 4
    t_steps = W // 8
    mm_per_b = (conv_rows * 384 * 128 + t_steps * 12 * 128 * 128
                + 2 * 128 * 128 + 3 * 128 * 128 + 3 * 128 * 128)
    cost = pl.CostEstimate(
        flops=2 * B * mm_per_b,
        transcendentals=B * (conv_rows * 128 * 2 + t_steps * 6 * 128),
        bytes_accessed=int(x0.size * 4 + feat.size * 4 + B * 128 * 4
                           + wp.size * 2 + bp.size * 4))

    kernel = functools.partial(_fused_forward_kernel, bk=bk, w_len=W, hidden=hidden_size)
    out_pad = pl.pallas_call(
        kernel,
        grid=(G,),
        in_specs=[
            pl.BlockSpec((1, W * bk, 128), lambda i: (i, 0, 0)),   # seq input block
            pl.BlockSpec((bk, 128), lambda i: (i, 0)),             # feature block
            pl.BlockSpec((_WP_ROWS, 128), lambda i: (0, 0)),       # packed bf16 weights
            pl.BlockSpec((_BP_ROWS, 128), lambda i: (0, 0)),       # packed f32 biases
        ],
        out_specs=pl.BlockSpec((bk, 128), lambda i: (i, 0)),
        out_shape=jax.ShapeDtypeStruct((B, 128), F32),
        compiler_params=pltpu.CompilerParams(
            dimension_semantics=("parallel",),
            vmem_limit_bytes=32 * 1024 * 1024),
        cost_estimate=cost,
    )(x0, feat, wp, bp)
    return out_pad[:, :3]     # drop lane padding of the 3-wide head output


# ----------------------------------------------------------------------------
if __name__ == "__main__":
    key = jax.random.PRNGKey(0)
    kp, ks, kf = jax.random.split(key, 3)

    B, W = 2, 16                                    # seq length 16 -> 8 -> 4 -> 2
    params = init_params(kp)
    packed = fold_params(params)
    seq_input = jax.random.normal(ks, (B, 2, 2, W), F32)       # NCHW (B, 2, H=2, W)
    feature_input = jax.random.normal(kf, (B, 20), F32)

    fwd = jax.jit(gene_interaction_forward)
    out = jax.block_until_ready(fwd(packed, seq_input, feature_input))
    assert out.shape == (B, 3) and out.dtype == jnp.float32
    print("KERNEL_OK")
</pallas_src>

<mosaic_0001>
module attributes {stable_mosaic.version = 11 : i64} {
  func.func @_fused_forward_kernel(%arg0: i32, %arg1: memref<1x32x128xf32, #tpu.memory_space<vmem>>, %arg2: memref<2x128xf32, #tpu.memory_space<vmem>>, %arg3: memref<4096x128xbf16, #tpu.memory_space<vmem>>, %arg4: memref<24x128xf32, #tpu.memory_space<vmem>>, %arg5: memref<2x128xf32, #tpu.memory_space<vmem>>) attributes {dimension_semantics = [#tpu.dimension_semantics<parallel>], iteration_bounds = array<i64: 1>, scalar_prefetch = 0 : i64, scratch_operands = 0 : i64, tpu.core_type = #tpu.core_type<tc>, window_params = [{transform_indices = @transform_0, window_bounds = array<i64: 1, 32, 128>}, {transform_indices = @transform_1, window_bounds = array<i64: 2, 128>}, {pipeline_mode = #tpu.pipeline_mode<synchronous>, transform_indices = @transform_2, window_bounds = array<i64: 4096, 128>}, {pipeline_mode = #tpu.pipeline_mode<synchronous>, transform_indices = @transform_3, window_bounds = array<i64: 24, 128>}, {transform_indices = @transform_4, window_bounds = array<i64: 2, 128>}]} {
    %c0 = arith.constant 0 : index
    %c0_0 = arith.constant 0 : index
    %c0_1 = arith.constant 0 : index
    %0 = vector.load %arg1[%c0, %c0_0, %c0_1] : memref<1x32x128xf32, #tpu.memory_space<vmem>>, vector<1x32x128xf32>
    %1 = vector.shape_cast %0 : vector<1x32x128xf32> to vector<32x128xf32>
    %2 = tpu.iota {dimensions = array<i32: 0>} : vector<32x1xi32>
    %cst = arith.constant 0.000000e+00 : f32
    %3 = vector.broadcast %cst : f32 to vector<32x128xf32>
    %c2_i32 = arith.constant 2 : i32
    %4 = vector.broadcast %c2_i32 : i32 to vector<32x1xi32>
    %5 = arith.cmpi slt, %2, %4 : vector<32x1xi32>
    %c2_i32_2 = arith.constant 2 : i32
    %6 = tpu.dynamic_rotate %1 by %c2_i32_2 dim 0 : vector<32x128xf32>, i32 -> vector<32x128xf32>
    %7 = vector.shape_cast %5 : vector<32x1xi1> to vector<32x1xi1>
    %8 = vector.broadcast %7 : vector<32x1xi1> to vector<32x128xi1>
    %9 = arith.select %8, %3, %6 : vector<32x128xi1>, vector<32x128xf32>
    %c30_i32 = arith.constant 30 : i32
    %10 = vector.broadcast %c30_i32 : i32 to vector<32x1xi32>
    %11 = arith.cmpi sge, %2, %10 : vector<32x1xi32>
    %c30_i32_3 = arith.constant 30 : i32
    %12 = tpu.dynamic_rotate %1 by %c30_i32_3 dim 0 : vector<32x128xf32>, i32 -> vector<32x128xf32>
    %13 = vector.shape_cast %11 : vector<32x1xi1> to vector<32x1xi1>
    %14 = vector.broadcast %13 : vector<32x1xi1> to vector<32x128xi1>
    %15 = arith.select %14, %3, %12 : vector<32x128xi1>, vector<32x128xf32>
    %16 = tpu.concatenate %9, %1, %15 in 1 : vector<32x128xf32>, vector<32x128xf32>, vector<32x128xf32> -> vector<32x384xf32>
    %17 = arith.truncf %16 : vector<32x384xf32> to vector<32x384xbf16>
    %c0_4 = arith.constant 0 : index
    %c0_5 = arith.constant 0 : index
    %18 = vector.load %arg3[%c0_4, %c0_5] : memref<4096x128xbf16, #tpu.memory_space<vmem>>, vector<384x128xbf16>
    %cst_6 = arith.constant dense<0.000000e+00> : vector<32x128xf32>
    %19 = tpu.matmul %17, %18, %cst_6 {dimension_numbers = #tpu.dot_dimension_numbers<[1], [0], [0], [1], [0, 0, 1, 1], [], []>} : vector<32x384xbf16>, vector<384x128xbf16>, vector<32x128xf32> -> vector<32x128xf32>
    %c0_7 = arith.constant 0 : index
    %c0_8 = arith.constant 0 : index
    %20 = vector.load %arg4[%c0_7, %c0_8] : memref<24x128xf32, #tpu.memory_space<vmem>>, vector<1x128xf32>
    %21 = vector.broadcast %20 : vector<1x128xf32> to vector<32x128xf32>
    %22 = arith.addf %19, %21 : vector<32x128xf32>
    %cst_9 = arith.constant 5.000000e-01 : f32
    %23 = vector.broadcast %cst_9 : f32 to vector<32x128xf32>
    %24 = arith.mulf %23, %22 : vector<32x128xf32>
    %cst_10 = arith.constant 0.707106769 : f32
    %25 = vector.broadcast %cst_10 : f32 to vector<32x128xf32>
    %26 = arith.mulf %22, %25 : vector<32x128xf32>
    %cst_11 = arith.constant 0.000000e+00 : f32
    %27 = vector.broadcast %cst_11 : f32 to vector<32x128xf32>
    %28 = arith.cmpf oge, %26, %27 : vector<32x128xf32>
    %cst_12 = arith.constant 1.000000e+00 : f32
    %cst_13 = arith.constant -1.000000e+00 : f32
    %29 = vector.broadcast %cst_12 : f32 to vector<32x128xf32>
    %30 = vector.broadcast %cst_13 : f32 to vector<32x128xf32>
    %31 = arith.select %28, %29, %30 : vector<32x128xi1>, vector<32x128xf32>
    %32 = math.absf %26 : vector<32x128xf32>
    %cst_14 = arith.constant 0.327591091 : f32
    %33 = vector.broadcast %cst_14 : f32 to vector<32x128xf32>
    %34 = arith.mulf %33, %32 : vector<32x128xf32>
    %cst_15 = arith.constant 1.000000e+00 : f32
    %35 = vector.broadcast %cst_15 : f32 to vector<32x128xf32>
    %36 = arith.addf %35, %34 : vector<32x128xf32>
    %37 = tpu.reciprocal %36 {approx = true} : vector<32x128xf32> -> vector<32x128xf32>
    %cst_16 = arith.constant 1.06140542 : f32
    %38 = vector.broadcast %cst_16 : f32 to vector<32x128xf32>
    %39 = arith.mulf %38, %37 : vector<32x128xf32>
    %cst_17 = arith.constant -1.45315206 : f32
    %40 = vector.broadcast %cst_17 : f32 to vector<32x128xf32>
    %41 = arith.addf %39, %40 : vector<32x128xf32>
    %42 = arith.mulf %41, %37 : vector<32x128xf32>
    %cst_18 = arith.constant 1.42141378 : f32
    %43 = vector.broadcast %cst_18 : f32 to vector<32x128xf32>
    %44 = arith.addf %42, %43 : vector<32x128xf32>
    %45 = arith.mulf %44, %37 : vector<32x128xf32>
    %cst_19 = arith.constant -0.284496725 : f32
    %46 = vector.broadcast %cst_19 : f32 to vector<32x128xf32>
    %47 = arith.addf %45, %46 : vector<32x128xf32>
    %48 = arith.mulf %47, %37 : vector<32x128xf32>
    %cst_20 = arith.constant 0.254829586 : f32
    %49 = vector.broadcast %cst_20 : f32 to vector<32x128xf32>
    %50 = arith.addf %48, %49 : vector<32x128xf32>
    %51 = arith.mulf %50, %37 : vector<32x128xf32>
    %cst_21 = arith.constant 0.000000e+00 : f32
    %52 = vector.broadcast %cst_21 : f32 to vector<32x128xf32>
    %53 = arith.subf %52, %32 : vector<32x128xf32>
    %54 = arith.mulf %53, %32 : vector<32x128xf32>
    %55 = math.exp %54 : vector<32x128xf32>
    %56 = arith.mulf %51, %55 : vector<32x128xf32>
    %cst_22 = arith.constant 1.000000e+00 : f32
    %57 = vector.broadcast %cst_22 : f32 to vector<32x128xf32>
    %58 = arith.subf %57, %56 : vector<32x128xf32>
    %59 = arith.mulf %31, %58 : vector<32x128xf32>
    %cst_23 = arith.constant 1.000000e+00 : f32
    %60 = vector.broadcast %cst_23 : f32 to vector<32x128xf32>
    %61 = arith.addf %60, %59 : vector<32x128xf32>
    %62 = arith.mulf %24, %61 : vector<32x128xf32>
    %63 = tpu.iota {dimensions = array<i32: 0>} : vector<32x1xi32>
    %cst_24 = arith.constant 0.000000e+00 : f32
    %64 = vector.broadcast %cst_24 : f32 to vector<32x128xf32>
    %c2_i32_25 = arith.constant 2 : i32
    %65 = vector.broadcast %c2_i32_25 : i32 to vector<32x1xi32>
    %66 = arith.cmpi slt, %63, %65 : vector<32x1xi32>
    %c2_i32_26 = arith.constant 2 : i32
    %67 = tpu.dynamic_rotate %62 by %c2_i32_26 dim 0 : vector<32x128xf32>, i32 -> vector<32x128xf32>
    %68 = vector.shape_cast %66 : vector<32x1xi1> to vector<32x1xi1>
    %69 = vector.broadcast %68 : vector<32x1xi1> to vector<32x128xi1>
    %70 = arith.select %69, %64, %67 : vector<32x128xi1>, vector<32x128xf32>
    %c30_i32_27 = arith.constant 30 : i32
    %71 = vector.broadcast %c30_i32_27 : i32 to vector<32x1xi32>
    %72 = arith.cmpi sge, %63, %71 : vector<32x1xi32>
    %c30_i32_28 = arith.constant 30 : i32
    %73 = tpu.dynamic_rotate %62 by %c30_i32_28 dim 0 : vector<32x128xf32>, i32 -> vector<32x128xf32>
    %74 = vector.shape_cast %72 : vector<32x1xi1> to vector<32x1xi1>
    %75 = vector.broadcast %74 : vector<32x1xi1> to vector<32x128xi1>
    %76 = arith.select %75, %64, %73 : vector<32x128xi1>, vector<32x128xf32>
    %77 = tpu.concatenate %70, %62, %76 in 1 : vector<32x128xf32>, vector<32x128xf32>, vector<32x128xf32> -> vector<32x384xf32>
    %78 = arith.truncf %77 : vector<32x384xf32> to vector<32x384xbf16>
    %c384 = arith.constant 384 : index
    %c0_29 = arith.constant 0 : index
    %79 = vector.load %arg3[%c384, %c0_29] : memref<4096x128xbf16, #tpu.memory_space<vmem>>, vector<384x128xbf16>
    %cst_30 = arith.constant dense<0.000000e+00> : vector<32x128xf32>
    %80 = tpu.matmul %78, %79, %cst_30 {dimension_numbers = #tpu.dot_dimension_numbers<[1], [0], [0], [1], [0, 0, 1, 1], [], []>} : vector<32x384xbf16>, vector<384x128xbf16>, vector<32x128xf32> -> vector<32x128xf32>
    %c1 = arith.constant 1 : index
    %c0_31 = arith.constant 0 : index
    %81 = vector.load %arg4[%c1, %c0_31] : memref<24x128xf32, #tpu.memory_space<vmem>>, vector<1x128xf32>
    %82 = vector.broadcast %81 : vector<1x128xf32> to vector<32x128xf32>
    %83 = arith.addf %80, %82 : vector<32x128xf32>
    %cst_32 = arith.constant 5.000000e-01 : f32
    %84 = vector.broadcast %cst_32 : f32 to vector<32x128xf32>
    %85 = arith.mulf %84, %83 : vector<32x128xf32>
    %cst_33 = arith.constant 0.707106769 : f32
    %86 = vector.broadcast %cst_33 : f32 to vector<32x128xf32>
    %87 = arith.mulf %83, %86 : vector<32x128xf32>
    %cst_34 = arith.constant 0.000000e+00 : f32
    %88 = vector.broadcast %cst_34 : f32 to vector<32x128xf32>
    %89 = arith.cmpf oge, %87, %88 : vector<32x128xf32>
    %cst_35 = arith.constant 1.000000e+00 : f32
    %cst_36 = arith.constant -1.000000e+00 : f32
    %90 = vector.broadcast %cst_35 : f32 to vector<32x128xf32>
    %91 = vector.broadcast %cst_36 : f32 to vector<32x128xf32>
    %92 = arith.select %89, %90, %91 : vector<32x128xi1>, vector<32x128xf32>
    %93 = math.absf %87 : vector<32x128xf32>
    %cst_37 = arith.constant 0.327591091 : f32
    %94 = vector.broadcast %cst_37 : f32 to vector<32x128xf32>
    %95 = arith.mulf %94, %93 : vector<32x128xf32>
    %cst_38 = arith.constant 1.000000e+00 : f32
    %96 = vector.broadcast %cst_38 : f32 to vector<32x128xf32>
    %97 = arith.addf %96, %95 : vector<32x128xf32>
    %98 = tpu.reciprocal %97 {approx = true} : vector<32x128xf32> -> vector<32x128xf32>
    %cst_39 = arith.constant 1.06140542 : f32
    %99 = vector.broadcast %cst_39 : f32 to vector<32x128xf32>
    %100 = arith.mulf %99, %98 : vector<32x128xf32>
    %cst_40 = arith.constant -1.45315206 : f32
    %101 = vector.broadcast %cst_40 : f32 to vector<32x128xf32>
    %102 = arith.addf %100, %101 : vector<32x128xf32>
    %103 = arith.mulf %102, %98 : vector<32x128xf32>
    %cst_41 = arith.constant 1.42141378 : f32
    %104 = vector.broadcast %cst_41 : f32 to vector<32x128xf32>
    %105 = arith.addf %103, %104 : vector<32x128xf32>
    %106 = arith.mulf %105, %98 : vector<32x128xf32>
    %cst_42 = arith.constant -0.284496725 : f32
    %107 = vector.broadcast %cst_42 : f32 to vector<32x128xf32>
    %108 = arith.addf %106, %107 : vector<32x128xf32>
    %109 = arith.mulf %108, %98 : vector<32x128xf32>
    %cst_43 = arith.constant 0.254829586 : f32
    %110 = vector.broadcast %cst_43 : f32 to vector<32x128xf32>
    %111 = arith.addf %109, %110 : vector<32x128xf32>
    %112 = arith.mulf %111, %98 : vector<32x128xf32>
    %cst_44 = arith.constant 0.000000e+00 : f32
    %113 = vector.broadcast %cst_44 : f32 to vector<32x128xf32>
    %114 = arith.subf %113, %93 : vector<32x128xf32>
    %115 = arith.mulf %114, %93 : vector<32x128xf32>
    %116 = math.exp %115 : vector<32x128xf32>
    %117 = arith.mulf %112, %116 : vector<32x128xf32>
    %cst_45 = arith.constant 1.000000e+00 : f32
    %118 = vector.broadcast %cst_45 : f32 to vector<32x128xf32>
    %119 = arith.subf %118, %117 : vector<32x128xf32>
    %120 = arith.mulf %92, %119 : vector<32x128xf32>
    %cst_46 = arith.constant 1.000000e+00 : f32
    %121 = vector.broadcast %cst_46 : f32 to vector<32x128xf32>
    %122 = arith.addf %121, %120 : vector<32x128xf32>
    %123 = arith.mulf %85, %122 : vector<32x128xf32>
    %124 = vector.shape_cast %123 : vector<32x128xf32> to vector<8x4x128xf32>
    %125 = vector.extract_strided_slice %124 {offsets = [0, 0, 0], sizes = [8, 2, 128], strides = [1, 1, 1]} : vector<8x4x128xf32> to vector<8x2x128xf32>
    %126 = vector.extract_strided_slice %124 {offsets = [0, 2, 0], sizes = [8, 2, 128], strides = [1, 1, 1]} : vector<8x4x128xf32> to vector<8x2x128xf32>
    %127 = arith.addf %125, %126 : vector<8x2x128xf32>
    %cst_47 = arith.constant 5.000000e-01 : f32
    %128 = vector.broadcast %cst_47 : f32 to vector<8x2x128xf32>
    %129 = arith.mulf %127, %128 : vector<8x2x128xf32>
    %130 = vector.shape_cast %129 : vector<8x2x128xf32> to vector<16x128xf32>
    %131 = tpu.iota {dimensions = array<i32: 0>} : vector<16x1xi32>
    %cst_48 = arith.constant 0.000000e+00 : f32
    %132 = vector.broadcast %cst_48 : f32 to vector<16x128xf32>
    %c2_i32_49 = arith.constant 2 : i32
    %133 = vector.broadcast %c2_i32_49 : i32 to vector<16x1xi32>
    %134 = arith.cmpi slt, %131, %133 : vector<16x1xi32>
    %c2_i32_50 = arith.constant 2 : i32
    %135 = tpu.dynamic_rotate %130 by %c2_i32_50 dim 0 : vector<16x128xf32>, i32 -> vector<16x128xf32>
    %136 = vector.shape_cast %134 : vector<16x1xi1> to vector<16x1xi1>
    %137 = vector.broadcast %136 : vector<16x1xi1> to vector<16x128xi1>
    %138 = arith.select %137, %132, %135 : vector<16x128xi1>, vector<16x128xf32>
    %c14_i32 = arith.constant 14 : i32
    %139 = vector.broadcast %c14_i32 : i32 to vector<16x1xi32>
    %140 = arith.cmpi sge, %131, %139 : vector<16x1xi32>
    %c14_i32_51 = arith.constant 14 : i32
    %141 = tpu.dynamic_rotate %130 by %c14_i32_51 dim 0 : vector<16x128xf32>, i32 -> vector<16x128xf32>
    %142 = vector.shape_cast %140 : vector<16x1xi1> to vector<16x1xi1>
    %143 = vector.broadcast %142 : vector<16x1xi1> to vector<16x128xi1>
    %144 = arith.select %143, %132, %141 : vector<16x128xi1>, vector<16x128xf32>
    %145 = tpu.concatenate %138, %130, %144 in 1 : vector<16x128xf32>, vector<16x128xf32>, vector<16x128xf32> -> vector<16x384xf32>
    %146 = arith.truncf %145 : vector<16x384xf32> to vector<16x384xbf16>
    %c768 = arith.constant 768 : index
    %c0_52 = arith.constant 0 : index
    %147 = vector.load %arg3[%c768, %c0_52] : memref<4096x128xbf16, #tpu.memory_space<vmem>>, vector<384x128xbf16>
    %cst_53 = arith.constant dense<0.000000e+00> : vector<16x128xf32>
    %148 = tpu.matmul %146, %147, %cst_53 {dimension_numbers = #tpu.dot_dimension_numbers<[1], [0], [0], [1], [0, 0, 1, 1], [], []>} : vector<16x384xbf16>, vector<384x128xbf16>, vector<16x128xf32> -> vector<16x128xf32>
    %c2 = arith.constant 2 : index
    %c0_54 = arith.constant 0 : index
    %149 = vector.load %arg4[%c2, %c0_54] : memref<24x128xf32, #tpu.memory_space<vmem>>, vector<1x128xf32>
    %150 = vector.broadcast %149 : vector<1x128xf32> to vector<16x128xf32>
    %151 = arith.addf %148, %150 : vector<16x128xf32>
    %cst_55 = arith.constant 5.000000e-01 : f32
    %152 = vector.broadcast %cst_55 : f32 to vector<16x128xf32>
    %153 = arith.mulf %152, %151 : vector<16x128xf32>
    %cst_56 = arith.constant 0.707106769 : f32
    %154 = vector.broadcast %cst_56 : f32 to vector<16x128xf32>
    %155 = arith.mulf %151, %154 : vector<16x128xf32>
    %cst_57 = arith.constant 0.000000e+00 : f32
    %156 = vector.broadcast %cst_57 : f32 to vector<16x128xf32>
    %157 = arith.cmpf oge, %155, %156 : vector<16x128xf32>
    %cst_58 = arith.constant 1.000000e+00 : f32
    %cst_59 = arith.constant -1.000000e+00 : f32
    %158 = vector.broadcast %cst_58 : f32 to vector<16x128xf32>
    %159 = vector.broadcast %cst_59 : f32 to vector<16x128xf32>
    %160 = arith.select %157, %158, %159 : vector<16x128xi1>, vector<16x128xf32>
    %161 = math.absf %155 : vector<16x128xf32>
    %cst_60 = arith.constant 0.327591091 : f32
    %162 = vector.broadcast %cst_60 : f32 to vector<16x128xf32>
    %163 = arith.mulf %162, %161 : vector<16x128xf32>
    %cst_61 = arith.constant 1.000000e+00 : f32
    %164 = vector.broadcast %cst_61 : f32 to vector<16x128xf32>
    %165 = arith.addf %164, %163 : vector<16x128xf32>
    %166 = tpu.reciprocal %165 {approx = true} : vector<16x128xf32> -> vector<16x128xf32>
    %cst_62 = arith.constant 1.06140542 : f32
    %167 = vector.broadcast %cst_62 : f32 to vector<16x128xf32>
    %168 = arith.mulf %167, %166 : vector<16x128xf32>
    %cst_63 = arith.constant -1.45315206 : f32
    %169 = vector.broadcast %cst_63 : f32 to vector<16x128xf32>
    %170 = arith.addf %168, %169 : vector<16x128xf32>
    %171 = arith.mulf %170, %166 : vector<16x128xf32>
    %cst_64 = arith.constant 1.42141378 : f32
    %172 = vector.broadcast %cst_64 : f32 to vector<16x128xf32>
    %173 = arith.addf %171, %172 : vector<16x128xf32>
    %174 = arith.mulf %173, %166 : vector<16x128xf32>
    %cst_65 = arith.constant -0.284496725 : f32
    %175 = vector.broadcast %cst_65 : f32 to vector<16x128xf32>
    %176 = arith.addf %174, %175 : vector<16x128xf32>
    %177 = arith.mulf %176, %166 : vector<16x128xf32>
    %cst_66 = arith.constant 0.254829586 : f32
    %178 = vector.broadcast %cst_66 : f32 to vector<16x128xf32>
    %179 = arith.addf %177, %178 : vector<16x128xf32>
    %180 = arith.mulf %179, %166 : vector<16x128xf32>
    %cst_67 = arith.constant 0.000000e+00 : f32
    %181 = vector.broadcast %cst_67 : f32 to vector<16x128xf32>
    %182 = arith.subf %181, %161 : vector<16x128xf32>
    %183 = arith.mulf %182, %161 : vector<16x128xf32>
    %184 = math.exp %183 : vector<16x128xf32>
    %185 = arith.mulf %180, %184 : vector<16x128xf32>
    %cst_68 = arith.constant 1.000000e+00 : f32
    %186 = vector.broadcast %cst_68 : f32 to vector<16x128xf32>
    %187 = arith.subf %186, %185 : vector<16x128xf32>
    %188 = arith.mulf %160, %187 : vector<16x128xf32>
    %cst_69 = arith.constant 1.000000e+00 : f32
    %189 = vector.broadcast %cst_69 : f32 to vector<16x128xf32>
    %190 = arith.addf %189, %188 : vector<16x128xf32>
    %191 = arith.mulf %153, %190 : vector<16x128xf32>
    %192 = vector.shape_cast %191 : vector<16x128xf32> to vector<4x4x128xf32>
    %193 = vector.extract_strided_slice %192 {offsets = [0, 0, 0], sizes = [4, 2, 128], strides = [1, 1, 1]} : vector<4x4x128xf32> to vector<4x2x128xf32>
    %194 = vector.extract_strided_slice %192 {offsets = [0, 2, 0], sizes = [4, 2, 128], strides = [1, 1, 1]} : vector<4x4x128xf32> to vector<4x2x128xf32>
    %195 = arith.addf %193, %194 : vector<4x2x128xf32>
    %cst_70 = arith.constant 5.000000e-01 : f32
    %196 = vector.broadcast %cst_70 : f32 to vector<4x2x128xf32>
    %197 = arith.mulf %195, %196 : vector<4x2x128xf32>
    %198 = vector.shape_cast %197 : vector<4x2x128xf32> to vector<8x128xf32>
    %199 = tpu.iota {dimensions = array<i32: 0>} : vector<8x1xi32>
    %cst_71 = arith.constant 0.000000e+00 : f32
    %200 = vector.broadcast %cst_71 : f32 to vector<8x128xf32>
    %c2_i32_72 = arith.constant 2 : i32
    %201 = vector.broadcast %c2_i32_72 : i32 to vector<8x1xi32>
    %202 = arith.cmpi slt, %199, %201 : vector<8x1xi32>
    %c2_i32_73 = arith.constant 2 : i32
    %203 = tpu.dynamic_rotate %198 by %c2_i32_73 dim 0 : vector<8x128xf32>, i32 -> vector<8x128xf32>
    %204 = vector.shape_cast %202 : vector<8x1xi1> to vector<8x1xi1>
    %205 = vector.broadcast %204 : vector<8x1xi1> to vector<8x128xi1>
    %206 = arith.select %205, %200, %203 : vector<8x128xi1>, vector<8x128xf32>
    %c6_i32 = arith.constant 6 : i32
    %207 = vector.broadcast %c6_i32 : i32 to vector<8x1xi32>
    %208 = arith.cmpi sge, %199, %207 : vector<8x1xi32>
    %c6_i32_74 = arith.constant 6 : i32
    %209 = tpu.dynamic_rotate %198 by %c6_i32_74 dim 0 : vector<8x128xf32>, i32 -> vector<8x128xf32>
    %210 = vector.shape_cast %208 : vector<8x1xi1> to vector<8x1xi1>
    %211 = vector.broadcast %210 : vector<8x1xi1> to vector<8x128xi1>
    %212 = arith.select %211, %200, %209 : vector<8x128xi1>, vector<8x128xf32>
    %213 = tpu.concatenate %206, %198, %212 in 1 : vector<8x128xf32>, vector<8x128xf32>, vector<8x128xf32> -> vector<8x384xf32>
    %214 = arith.truncf %213 : vector<8x384xf32> to vector<8x384xbf16>
    %c1152 = arith.constant 1152 : index
    %c0_75 = arith.constant 0 : index
    %215 = vector.load %arg3[%c1152, %c0_75] : memref<4096x128xbf16, #tpu.memory_space<vmem>>, vector<384x128xbf16>
    %cst_76 = arith.constant dense<0.000000e+00> : vector<8x128xf32>
    %216 = tpu.matmul %214, %215, %cst_76 {dimension_numbers = #tpu.dot_dimension_numbers<[1], [0], [0], [1], [0, 0, 1, 1], [], []>} : vector<8x384xbf16>, vector<384x128xbf16>, vector<8x128xf32> -> vector<8x128xf32>
    %c3 = arith.constant 3 : index
    %c0_77 = arith.constant 0 : index
    %217 = vector.load %arg4[%c3, %c0_77] : memref<24x128xf32, #tpu.memory_space<vmem>>, vector<1x128xf32>
    %218 = vector.broadcast %217 : vector<1x128xf32> to vector<8x128xf32>
    %219 = arith.addf %216, %218 : vector<8x128xf32>
    %cst_78 = arith.constant 5.000000e-01 : f32
    %220 = vector.broadcast %cst_78 : f32 to vector<8x128xf32>
    %221 = arith.mulf %220, %219 : vector<8x128xf32>
    %cst_79 = arith.constant 0.707106769 : f32
    %222 = vector.broadcast %cst_79 : f32 to vector<8x128xf32>
    %223 = arith.mulf %219, %222 : vector<8x128xf32>
    %cst_80 = arith.constant 0.000000e+00 : f32
    %224 = vector.broadcast %cst_80 : f32 to vector<8x128xf32>
    %225 = arith.cmpf oge, %223, %224 : vector<8x128xf32>
    %cst_81 = arith.constant 1.000000e+00 : f32
    %cst_82 = arith.constant -1.000000e+00 : f32
    %226 = vector.broadcast %cst_81 : f32 to vector<8x128xf32>
    %227 = vector.broadcast %cst_82 : f32 to vector<8x128xf32>
    %228 = arith.select %225, %226, %227 : vector<8x128xi1>, vector<8x128xf32>
    %229 = math.absf %223 : vector<8x128xf32>
    %cst_83 = arith.constant 0.327591091 : f32
    %230 = vector.broadcast %cst_83 : f32 to vector<8x128xf32>
    %231 = arith.mulf %230, %229 : vector<8x128xf32>
    %cst_84 = arith.constant 1.000000e+00 : f32
    %232 = vector.broadcast %cst_84 : f32 to vector<8x128xf32>
    %233 = arith.addf %232, %231 : vector<8x128xf32>
    %234 = tpu.reciprocal %233 {approx = true} : vector<8x128xf32> -> vector<8x128xf32>
    %cst_85 = arith.constant 1.06140542 : f32
    %235 = vector.broadcast %cst_85 : f32 to vector<8x128xf32>
    %236 = arith.mulf %235, %234 : vector<8x128xf32>
    %cst_86 = arith.constant -1.45315206 : f32
    %237 = vector.broadcast %cst_86 : f32 to vector<8x128xf32>
    %238 = arith.addf %236, %237 : vector<8x128xf32>
    %239 = arith.mulf %238, %234 : vector<8x128xf32>
    %cst_87 = arith.constant 1.42141378 : f32
    %240 = vector.broadcast %cst_87 : f32 to vector<8x128xf32>
    %241 = arith.addf %239, %240 : vector<8x128xf32>
    %242 = arith.mulf %241, %234 : vector<8x128xf32>
    %cst_88 = arith.constant -0.284496725 : f32
    %243 = vector.broadcast %cst_88 : f32 to vector<8x128xf32>
    %244 = arith.addf %242, %243 : vector<8x128xf32>
    %245 = arith.mulf %244, %234 : vector<8x128xf32>
    %cst_89 = arith.constant 0.254829586 : f32
    %246 = vector.broadcast %cst_89 : f32 to vector<8x128xf32>
    %247 = arith.addf %245, %246 : vector<8x128xf32>
    %248 = arith.mulf %247, %234 : vector<8x128xf32>
    %cst_90 = arith.constant 0.000000e+00 : f32
    %249 = vector.broadcast %cst_90 : f32 to vector<8x128xf32>
    %250 = arith.subf %249, %229 : vector<8x128xf32>
    %251 = arith.mulf %250, %229 : vector<8x128xf32>
    %252 = math.exp %251 : vector<8x128xf32>
    %253 = arith.mulf %248, %252 : vector<8x128xf32>
    %cst_91 = arith.constant 1.000000e+00 : f32
    %254 = vector.broadcast %cst_91 : f32 to vector<8x128xf32>
    %255 = arith.subf %254, %253 : vector<8x128xf32>
    %256 = arith.mulf %228, %255 : vector<8x128xf32>
    %cst_92 = arith.constant 1.000000e+00 : f32
    %257 = vector.broadcast %cst_92 : f32 to vector<8x128xf32>
    %258 = arith.addf %257, %256 : vector<8x128xf32>
    %259 = arith.mulf %221, %258 : vector<8x128xf32>
    %260 = vector.shape_cast %259 : vector<8x128xf32> to vector<2x4x128xf32>
    %261 = vector.extract_strided_slice %260 {offsets = [0, 0, 0], sizes = [2, 2, 128], strides = [1, 1, 1]} : vector<2x4x128xf32> to vector<2x2x128xf32>
    %262 = vector.extract_strided_slice %260 {offsets = [0, 2, 0], sizes = [2, 2, 128], strides = [1, 1, 1]} : vector<2x4x128xf32> to vector<2x2x128xf32>
    %263 = arith.addf %261, %262 : vector<2x2x128xf32>
    %cst_93 = arith.constant 5.000000e-01 : f32
    %264 = vector.broadcast %cst_93 : f32 to vector<2x2x128xf32>
    %265 = arith.mulf %263, %264 : vector<2x2x128xf32>
    %266 = vector.shape_cast %265 : vector<2x2x128xf32> to vector<4x128xf32>
    %267 = arith.truncf %266 : vector<4x128xf32> to vector<4x128xbf16>
    %c1536 = arith.constant 1536 : index
    %c0_94 = arith.constant 0 : index
    %268 = vector.load %arg3[%c1536, %c0_94] : memref<4096x128xbf16, #tpu.memory_space<vmem>>, vector<128x128xbf16>
    %cst_95 = arith.constant dense<0.000000e+00> : vector<4x128xf32>
    %269 = tpu.matmul %267, %268, %cst_95 {dimension_numbers = #tpu.dot_dimension_numbers<[1], [0], [0], [1], [0, 0, 1, 1], [], []>} : vector<4x128xbf16>, vector<128x128xbf16>, vector<4x128xf32> -> vector<4x128xf32>
    %c4 = arith.constant 4 : index
    %c0_96 = arith.constant 0 : index
    %270 = vector.load %arg4[%c4, %c0_96] : memref<24x128xf32, #tpu.memory_space<vmem>>, vector<1x128xf32>
    %271 = vector.broadcast %270 : vector<1x128xf32> to vector<4x128xf32>
    %272 = arith.addf %269, %271 : vector<4x128xf32>
    %c1664 = arith.constant 1664 : index
    %c0_97 = arith.constant 0 : index
    %273 = vector.load %arg3[%c1664, %c0_97] : memref<4096x128xbf16, #tpu.memory_space<vmem>>, vector<128x128xbf16>
    %cst_98 = arith.constant dense<0.000000e+00> : vector<4x128xf32>
    %274 = tpu.matmul %267, %273, %cst_98 {dimension_numbers = #tpu.dot_dimension_numbers<[1], [0], [0], [1], [0, 0, 1, 1], [], []>} : vector<4x128xbf16>, vector<128x128xbf16>, vector<4x128xf32> -> vector<4x128xf32>
    %c5 = arith.constant 5 : index
    %c0_99 = arith.constant 0 : index
    %275 = vector.load %arg4[%c5, %c0_99] : memref<24x128xf32, #tpu.memory_space<vmem>>, vector<1x128xf32>
    %276 = vector.broadcast %275 : vector<1x128xf32> to vector<4x128xf32>
    %277 = arith.addf %274, %276 : vector<4x128xf32>
    %c1792 = arith.constant 1792 : index
    %c0_100 = arith.constant 0 : index
    %278 = vector.load %arg3[%c1792, %c0_100] : memref<4096x128xbf16, #tpu.memory_space<vmem>>, vector<128x128xbf16>
    %cst_101 = arith.constant dense<0.000000e+00> : vector<4x128xf32>
    %279 = tpu.matmul %267, %278, %cst_101 {dimension_numbers = #tpu.dot_dimension_numbers<[1], [0], [0], [1], [0, 0, 1, 1], [], []>} : vector<4x128xbf16>, vector<128x128xbf16>, vector<4x128xf32> -> vector<4x128xf32>
    %c6 = arith.constant 6 : index
    %c0_102 = arith.constant 0 : index
    %280 = vector.load %arg4[%c6, %c0_102] : memref<24x128xf32, #tpu.memory_space<vmem>>, vector<1x128xf32>
    %281 = vector.broadcast %280 : vector<1x128xf32> to vector<4x128xf32>
    %282 = arith.addf %279, %281 : vector<4x128xf32>
    %c1920 = arith.constant 1920 : index
    %c0_103 = arith.constant 0 : index
    %283 = vector.load %arg3[%c1920, %c0_103] : memref<4096x128xbf16, #tpu.memory_space<vmem>>, vector<128x128xbf16>
    %cst_104 = arith.constant dense<0.000000e+00> : vector<4x128xf32>
    %284 = tpu.matmul %267, %283, %cst_104 {dimension_numbers = #tpu.dot_dimension_numbers<[1], [0], [0], [1], [0, 0, 1, 1], [], []>} : vector<4x128xbf16>, vector<128x128xbf16>, vector<4x128xf32> -> vector<4x128xf32>
    %c7 = arith.constant 7 : index
    %c0_105 = arith.constant 0 : index
    %285 = vector.load %arg4[%c7, %c0_105] : memref<24x128xf32, #tpu.memory_space<vmem>>, vector<1x128xf32>
    %286 = vector.broadcast %285 : vector<1x128xf32> to vector<4x128xf32>
    %287 = arith.addf %284, %286 : vector<4x128xf32>
    %c2048 = arith.constant 2048 : index
    %c0_106 = arith.constant 0 : index
    %288 = vector.load %arg3[%c2048, %c0_106] : memref<4096x128xbf16, #tpu.memory_space<vmem>>, vector<128x128xbf16>
    %cst_107 = arith.constant dense<0.000000e+00> : vector<4x128xf32>
    %289 = tpu.matmul %267, %288, %cst_107 {dimension_numbers = #tpu.dot_dimension_numbers<[1], [0], [0], [1], [0, 0, 1, 1], [], []>} : vector<4x128xbf16>, vector<128x128xbf16>, vector<4x128xf32> -> vector<4x128xf32>
    %c8 = arith.constant 8 : index
    %c0_108 = arith.constant 0 : index
    %290 = vector.load %arg4[%c8, %c0_108] : memref<24x128xf32, #tpu.memory_space<vmem>>, vector<1x128xf32>
    %291 = vector.broadcast %290 : vector<1x128xf32> to vector<4x128xf32>
    %292 = arith.addf %289, %291 : vector<4x128xf32>
    %c2176 = arith.constant 2176 : index
    %c0_109 = arith.constant 0 : index
    %293 = vector.load %arg3[%c2176, %c0_109] : memref<4096x128xbf16, #tpu.memory_space<vmem>>, vector<128x128xbf16>
    %cst_110 = arith.constant dense<0.000000e+00> : vector<4x128xf32>
    %294 = tpu.matmul %267, %293, %cst_110 {dimension_numbers = #tpu.dot_dimension_numbers<[1], [0], [0], [1], [0, 0, 1, 1], [], []>} : vector<4x128xbf16>, vector<128x128xbf16>, vector<4x128xf32> -> vector<4x128xf32>
    %c9 = arith.constant 9 : index
    %c0_111 = arith.constant 0 : index
    %295 = vector.load %arg4[%c9, %c0_111] : memref<24x128xf32, #tpu.memory_space<vmem>>, vector<1x128xf32>
    %296 = vector.broadcast %295 : vector<1x128xf32> to vector<4x128xf32>
    %297 = arith.addf %294, %296 : vector<4x128xf32>
    %c2304 = arith.constant 2304 : index
    %c0_112 = arith.constant 0 : index
    %298 = vector.load %arg3[%c2304, %c0_112] : memref<4096x128xbf16, #tpu.memory_space<vmem>>, vector<128x128xbf16>
    %c2432 = arith.constant 2432 : index
    %c0_113 = arith.constant 0 : index
    %299 = vector.load %arg3[%c2432, %c0_113] : memref<4096x128xbf16, #tpu.memory_space<vmem>>, vector<128x128xbf16>
    %c2560 = arith.constant 2560 : index
    %c0_114 = arith.constant 0 : index
    %300 = vector.load %arg3[%c2560, %c0_114] : memref<4096x128xbf16, #tpu.memory_space<vmem>>, vector<128x128xbf16>
    %c2688 = arith.constant 2688 : index
    %c0_115 = arith.constant 0 : index
    %301 = vector.load %arg3[%c2688, %c0_115] : memref<4096x128xbf16, #tpu.memory_space<vmem>>, vector<128x128xbf16>
    %c2816 = arith.constant 2816 : index
    %c0_116 = arith.constant 0 : index
    %302 = vector.load %arg3[%c2816, %c0_116] : memref<4096x128xbf16, #tpu.memory_space<vmem>>, vector<128x128xbf16>
    %c2944 = arith.constant 2944 : index
    %c0_117 = arith.constant 0 : index
    %303 = vector.load %arg3[%c2944, %c0_117] : memref<4096x128xbf16, #tpu.memory_space<vmem>>, vector<128x128xbf16>
    %c10 = arith.constant 10 : index
    %c0_118 = arith.constant 0 : index
    %304 = vector.load %arg4[%c10, %c0_118] : memref<24x128xf32, #tpu.memory_space<vmem>>, vector<1x128xf32>
    %c11 = arith.constant 11 : index
    %c0_119 = arith.constant 0 : index
    %305 = vector.load %arg4[%c11, %c0_119] : memref<24x128xf32, #tpu.memory_space<vmem>>, vector<1x128xf32>
    %c12 = arith.constant 12 : index
    %c0_120 = arith.constant 0 : index
    %306 = vector.load %arg4[%c12, %c0_120] : memref<24x128xf32, #tpu.memory_space<vmem>>, vector<1x128xf32>
    %c13 = arith.constant 13 : index
    %c0_121 = arith.constant 0 : index
    %307 = vector.load %arg4[%c13, %c0_121] : memref<24x128xf32, #tpu.memory_space<vmem>>, vector<1x128xf32>
    %c14 = arith.constant 14 : index
    %c0_122 = arith.constant 0 : index
    %308 = vector.load %arg4[%c14, %c0_122] : memref<24x128xf32, #tpu.memory_space<vmem>>, vector<1x128xf32>
    %c15 = arith.constant 15 : index
    %c0_123 = arith.constant 0 : index
    %309 = vector.load %arg4[%c15, %c0_123] : memref<24x128xf32, #tpu.memory_space<vmem>>, vector<1x128xf32>
    %cst_124 = arith.constant 0.000000e+00 : f32
    %310 = vector.broadcast %cst_124 : f32 to vector<2x128xf32>
    %cst_125 = arith.constant 0.000000e+00 : f32
    %311 = vector.broadcast %cst_125 : f32 to vector<2x128xf32>
    %312 = vector.extract_strided_slice %272 {offsets = [0, 0], sizes = [2, 128], strides = [1, 1]} : vector<4x128xf32> to vector<2x128xf32>
    %313 = vector.extract_strided_slice %277 {offsets = [0, 0], sizes = [2, 128], strides = [1, 1]} : vector<4x128xf32> to vector<2x128xf32>
    %314 = vector.extract_strided_slice %282 {offsets = [0, 0], sizes = [2, 128], strides = [1, 1]} : vector<4x128xf32> to vector<2x128xf32>
    %315 = arith.truncf %310 : vector<2x128xf32> to vector<2x128xbf16>
    %cst_126 = arith.constant dense<0.000000e+00> : vector<2x128xf32>
    %316 = tpu.matmul %315, %298, %cst_126 {dimension_numbers = #tpu.dot_dimension_numbers<[1], [0], [0], [1], [0, 0, 1, 1], [], []>} : vector<2x128xbf16>, vector<128x128xbf16>, vector<2x128xf32> -> vector<2x128xf32>
    %317 = vector.broadcast %304 : vector<1x128xf32> to vector<2x128xf32>
    %318 = arith.addf %316, %317 : vector<2x128xf32>
    %cst_127 = arith.constant dense<0.000000e+00> : vector<2x128xf32>
    %319 = tpu.matmul %315, %299, %cst_127 {dimension_numbers = #tpu.dot_dimension_numbers<[1], [0], [0], [1], [0, 0, 1, 1], [], []>} : vector<2x128xbf16>, vector<128x128xbf16>, vector<2x128xf32> -> vector<2x128xf32>
    %320 = vector.broadcast %305 : vector<1x128xf32> to vector<2x128xf32>
    %321 = arith.addf %319, %320 : vector<2x128xf32>
    %cst_128 = arith.constant dense<0.000000e+00> : vector<2x128xf32>
    %322 = tpu.matmul %315, %300, %cst_128 {dimension_numbers = #tpu.dot_dimension_numbers<[1], [0], [0], [1], [0, 0, 1, 1], [], []>} : vector<2x128xbf16>, vector<128x128xbf16>, vector<2x128xf32> -> vector<2x128xf32>
    %323 = vector.broadcast %306 : vector<1x128xf32> to vector<2x128xf32>
    %324 = arith.addf %322, %323 : vector<2x128xf32>
    %325 = arith.addf %312, %318 : vector<2x128xf32>
    %cst_129 = arith.constant 0.000000e+00 : f32
    %326 = vector.broadcast %cst_129 : f32 to vector<2x128xf32>
    %327 = arith.subf %326, %325 : vector<2x128xf32>
    %328 = math.exp %327 : vector<2x128xf32>
    %cst_130 = arith.constant 1.000000e+00 : f32
    %329 = vector.broadcast %cst_130 : f32 to vector<2x128xf32>
    %330 = arith.addf %329, %328 : vector<2x128xf32>
    %331 = tpu.reciprocal %330 {approx = true} : vector<2x128xf32> -> vector<2x128xf32>
    %332 = arith.addf %313, %321 : vector<2x128xf32>
    %cst_131 = arith.constant 0.000000e+00 : f32
    %333 = vector.broadcast %cst_131 : f32 to vector<2x128xf32>
    %334 = arith.subf %333, %332 : vector<2x128xf32>
    %335 = math.exp %334 : vector<2x128xf32>
    %cst_132 = arith.constant 1.000000e+00 : f32
    %336 = vector.broadcast %cst_132 : f32 to vector<2x128xf32>
    %337 = arith.addf %336, %335 : vector<2x128xf32>
    %338 = tpu.reciprocal %337 {approx = true} : vector<2x128xf32> -> vector<2x128xf32>
    %339 = arith.mulf %331, %324 : vector<2x128xf32>
    %340 = arith.addf %314, %339 : vector<2x128xf32>
    %341 = math.tanh %340 : vector<2x128xf32>
    %cst_133 = arith.constant 1.000000e+00 : f32
    %342 = vector.broadcast %cst_133 : f32 to vector<2x128xf32>
    %343 = arith.subf %342, %338 : vector<2x128xf32>
    %344 = arith.mulf %343, %341 : vector<2x128xf32>
    %345 = arith.mulf %338, %310 : vector<2x128xf32>
    %346 = arith.addf %344, %345 : vector<2x128xf32>
    %347 = vector.extract_strided_slice %287 {offsets = [2, 0], sizes = [2, 128], strides = [1, 1]} : vector<4x128xf32> to vector<2x128xf32>
    %348 = vector.extract_strided_slice %292 {offsets = [2, 0], sizes = [2, 128], strides = [1, 1]} : vector<4x128xf32> to vector<2x128xf32>
    %349 = vector.extract_strided_slice %297 {offsets = [2, 0], sizes = [2, 128], strides = [1, 1]} : vector<4x128xf32> to vector<2x128xf32>
    %350 = arith.truncf %311 : vector<2x128xf32> to vector<2x128xbf16>
    %cst_134 = arith.constant dense<0.000000e+00> : vector<2x128xf32>
    %351 = tpu.matmul %350, %301, %cst_134 {dimension_numbers = #tpu.dot_dimension_numbers<[1], [0], [0], [1], [0, 0, 1, 1], [], []>} : vector<2x128xbf16>, vector<128x128xbf16>, vector<2x128xf32> -> vector<2x128xf32>
    %352 = vector.broadcast %307 : vector<1x128xf32> to vector<2x128xf32>
    %353 = arith.addf %351, %352 : vector<2x128xf32>
    %cst_135 = arith.constant dense<0.000000e+00> : vector<2x128xf32>
    %354 = tpu.matmul %350, %302, %cst_135 {dimension_numbers = #tpu.dot_dimension_numbers<[1], [0], [0], [1], [0, 0, 1, 1], [], []>} : vector<2x128xbf16>, vector<128x128xbf16>, vector<2x128xf32> -> vector<2x128xf32>
    %355 = vector.broadcast %308 : vector<1x128xf32> to vector<2x128xf32>
    %356 = arith.addf %354, %355 : vector<2x128xf32>
    %cst_136 = arith.constant dense<0.000000e+00> : vector<2x128xf32>
    %357 = tpu.matmul %350, %303, %cst_136 {dimension_numbers = #tpu.dot_dimension_numbers<[1], [0], [0], [1], [0, 0, 1, 1], [], []>} : vector<2x128xbf16>, vector<128x128xbf16>, vector<2x128xf32> -> vector<2x128xf32>
    %358 = vector.broadcast %309 : vector<1x128xf32> to vector<2x128xf32>
    %359 = arith.addf %357, %358 : vector<2x128xf32>
    %360 = arith.addf %347, %353 : vector<2x128xf32>
    %cst_137 = arith.constant 0.000000e+00 : f32
    %361 = vector.broadcast %cst_137 : f32 to vector<2x128xf32>
    %362 = arith.subf %361, %360 : vector<2x128xf32>
    %363 = math.exp %362 : vector<2x128xf32>
    %cst_138 = arith.constant 1.000000e+00 : f32
    %364 = vector.broadcast %cst_138 : f32 to vector<2x128xf32>
    %365 = arith.addf %364, %363 : vector<2x128xf32>
    %366 = tpu.reciprocal %365 {approx = true} : vector<2x128xf32> -> vector<2x128xf32>
    %367 = arith.addf %348, %356 : vector<2x128xf32>
    %cst_139 = arith.constant 0.000000e+00 : f32
    %368 = vector.broadcast %cst_139 : f32 to vector<2x128xf32>
    %369 = arith.subf %368, %367 : vector<2x128xf32>
    %370 = math.exp %369 : vector<2x128xf32>
    %cst_140 = arith.constant 1.000000e+00 : f32
    %371 = vector.broadcast %cst_140 : f32 to vector<2x128xf32>
    %372 = arith.addf %371, %370 : vector<2x128xf32>
    %373 = tpu.reciprocal %372 {approx = true} : vector<2x128xf32> -> vector<2x128xf32>
    %374 = arith.mulf %366, %359 : vector<2x128xf32>
    %375 = arith.addf %349, %374 : vector<2x128xf32>
    %376 = math.tanh %375 : vector<2x128xf32>
    %cst_141 = arith.constant 1.000000e+00 : f32
    %377 = vector.broadcast %cst_141 : f32 to vector<2x128xf32>
    %378 = arith.subf %377, %373 : vector<2x128xf32>
    %379 = arith.mulf %378, %376 : vector<2x128xf32>
    %380 = arith.mulf %373, %311 : vector<2x128xf32>
    %381 = arith.addf %379, %380 : vector<2x128xf32>
    %382 = vector.extract_strided_slice %272 {offsets = [2, 0], sizes = [2, 128], strides = [1, 1]} : vector<4x128xf32> to vector<2x128xf32>
    %383 = vector.extract_strided_slice %277 {offsets = [2, 0], sizes = [2, 128], strides = [1, 1]} : vector<4x128xf32> to vector<2x128xf32>
    %384 = vector.extract_strided_slice %282 {offsets = [2, 0], sizes = [2, 128], strides = [1, 1]} : vector<4x128xf32> to vector<2x128xf32>
    %385 = arith.truncf %346 : vector<2x128xf32> to vector<2x128xbf16>
    %cst_142 = arith.constant dense<0.000000e+00> : vector<2x128xf32>
    %386 = tpu.matmul %385, %298, %cst_142 {dimension_numbers = #tpu.dot_dimension_numbers<[1], [0], [0], [1], [0, 0, 1, 1], [], []>} : vector<2x128xbf16>, vector<128x128xbf16>, vector<2x128xf32> -> vector<2x128xf32>
    %387 = vector.broadcast %304 : vector<1x128xf32> to vector<2x128xf32>
    %388 = arith.addf %386, %387 : vector<2x128xf32>
    %cst_143 = arith.constant dense<0.000000e+00> : vector<2x128xf32>
    %389 = tpu.matmul %385, %299, %cst_143 {dimension_numbers = #tpu.dot_dimension_numbers<[1], [0], [0], [1], [0, 0, 1, 1], [], []>} : vector<2x128xbf16>, vector<128x128xbf16>, vector<2x128xf32> -> vector<2x128xf32>
    %390 = vector.broadcast %305 : vector<1x128xf32> to vector<2x128xf32>
    %391 = arith.addf %389, %390 : vector<2x128xf32>
    %cst_144 = arith.constant dense<0.000000e+00> : vector<2x128xf32>
    %392 = tpu.matmul %385, %300, %cst_144 {dimension_numbers = #tpu.dot_dimension_numbers<[1], [0], [0], [1], [0, 0, 1, 1], [], []>} : vector<2x128xbf16>, vector<128x128xbf16>, vector<2x128xf32> -> vector<2x128xf32>
    %393 = vector.broadcast %306 : vector<1x128xf32> to vector<2x128xf32>
    %394 = arith.addf %392, %393 : vector<2x128xf32>
    %395 = arith.addf %382, %388 : vector<2x128xf32>
    %cst_145 = arith.constant 0.000000e+00 : f32
    %396 = vector.broadcast %cst_145 : f32 to vector<2x128xf32>
    %397 = arith.subf %396, %395 : vector<2x128xf32>
    %398 = math.exp %397 : vector<2x128xf32>
    %cst_146 = arith.constant 1.000000e+00 : f32
    %399 = vector.broadcast %cst_146 : f32 to vector<2x128xf32>
    %400 = arith.addf %399, %398 : vector<2x128xf32>
    %401 = tpu.reciprocal %400 {approx = true} : vector<2x128xf32> -> vector<2x128xf32>
    %402 = arith.addf %383, %391 : vector<2x128xf32>
    %cst_147 = arith.constant 0.000000e+00 : f32
    %403 = vector.broadcast %cst_147 : f32 to vector<2x128xf32>
    %404 = arith.subf %403, %402 : vector<2x128xf32>
    %405 = math.exp %404 : vector<2x128xf32>
    %cst_148 = arith.constant 1.000000e+00 : f32
    %406 = vector.broadcast %cst_148 : f32 to vector<2x128xf32>
    %407 = arith.addf %406, %405 : vector<2x128xf32>
    %408 = tpu.reciprocal %407 {approx = true} : vector<2x128xf32> -> vector<2x128xf32>
    %409 = arith.mulf %401, %394 : vector<2x128xf32>
    %410 = arith.addf %384, %409 : vector<2x128xf32>
    %411 = math.tanh %410 : vector<2x128xf32>
    %cst_149 = arith.constant 1.000000e+00 : f32
    %412 = vector.broadcast %cst_149 : f32 to vector<2x128xf32>
    %413 = arith.subf %412, %408 : vector<2x128xf32>
    %414 = arith.mulf %413, %411 : vector<2x128xf32>
    %415 = arith.mulf %408, %346 : vector<2x128xf32>
    %416 = arith.addf %414, %415 : vector<2x128xf32>
    %417 = vector.extract_strided_slice %287 {offsets = [0, 0], sizes = [2, 128], strides = [1, 1]} : vector<4x128xf32> to vector<2x128xf32>
    %418 = vector.extract_strided_slice %292 {offsets = [0, 0], sizes = [2, 128], strides = [1, 1]} : vector<4x128xf32> to vector<2x128xf32>
    %419 = vector.extract_strided_slice %297 {offsets = [0, 0], sizes = [2, 128], strides = [1, 1]} : vector<4x128xf32> to vector<2x128xf32>
    %420 = arith.truncf %381 : vector<2x128xf32> to vector<2x128xbf16>
    %cst_150 = arith.constant dense<0.000000e+00> : vector<2x128xf32>
    %421 = tpu.matmul %420, %301, %cst_150 {dimension_numbers = #tpu.dot_dimension_numbers<[1], [0], [0], [1], [0, 0, 1, 1], [], []>} : vector<2x128xbf16>, vector<128x128xbf16>, vector<2x128xf32> -> vector<2x128xf32>
    %422 = vector.broadcast %307 : vector<1x128xf32> to vector<2x128xf32>
    %423 = arith.addf %421, %422 : vector<2x128xf32>
    %cst_151 = arith.constant dense<0.000000e+00> : vector<2x128xf32>
    %424 = tpu.matmul %420, %302, %cst_151 {dimension_numbers = #tpu.dot_dimension_numbers<[1], [0], [0], [1], [0, 0, 1, 1], [], []>} : vector<2x128xbf16>, vector<128x128xbf16>, vector<2x128xf32> -> vector<2x128xf32>
    %425 = vector.broadcast %308 : vector<1x128xf32> to vector<2x128xf32>
    %426 = arith.addf %424, %425 : vector<2x128xf32>
    %cst_152 = arith.constant dense<0.000000e+00> : vector<2x128xf32>
    %427 = tpu.matmul %420, %303, %cst_152 {dimension_numbers = #tpu.dot_dimension_numbers<[1], [0], [0], [1], [0, 0, 1, 1], [], []>} : vector<2x128xbf16>, vector<128x128xbf16>, vector<2x128xf32> -> vector<2x128xf32>
    %428 = vector.broadcast %309 : vector<1x128xf32> to vector<2x128xf32>
    %429 = arith.addf %427, %428 : vector<2x128xf32>
    %430 = arith.addf %417, %423 : vector<2x128xf32>
    %cst_153 = arith.constant 0.000000e+00 : f32
    %431 = vector.broadcast %cst_153 : f32 to vector<2x128xf32>
    %432 = arith.subf %431, %430 : vector<2x128xf32>
    %433 = math.exp %432 : vector<2x128xf32>
    %cst_154 = arith.constant 1.000000e+00 : f32
    %434 = vector.broadcast %cst_154 : f32 to vector<2x128xf32>
    %435 = arith.addf %434, %433 : vector<2x128xf32>
    %436 = tpu.reciprocal %435 {approx = true} : vector<2x128xf32> -> vector<2x128xf32>
    %437 = arith.addf %418, %426 : vector<2x128xf32>
    %cst_155 = arith.constant 0.000000e+00 : f32
    %438 = vector.broadcast %cst_155 : f32 to vector<2x128xf32>
    %439 = arith.subf %438, %437 : vector<2x128xf32>
    %440 = math.exp %439 : vector<2x128xf32>
    %cst_156 = arith.constant 1.000000e+00 : f32
    %441 = vector.broadcast %cst_156 : f32 to vector<2x128xf32>
    %442 = arith.addf %441, %440 : vector<2x128xf32>
    %443 = tpu.reciprocal %442 {approx = true} : vector<2x128xf32> -> vector<2x128xf32>
    %444 = arith.mulf %436, %429 : vector<2x128xf32>
    %445 = arith.addf %419, %444 : vector<2x128xf32>
    %446 = math.tanh %445 : vector<2x128xf32>
    %cst_157 = arith.constant 1.000000e+00 : f32
    %447 = vector.broadcast %cst_157 : f32 to vector<2x128xf32>
    %448 = arith.subf %447, %443 : vector<2x128xf32>
    %449 = arith.mulf %448, %446 : vector<2x128xf32>
    %450 = arith.mulf %443, %381 : vector<2x128xf32>
    %451 = arith.addf %449, %450 : vector<2x128xf32>
    %452 = tpu.concatenate %416, %451 in 1 : vector<2x128xf32>, vector<2x128xf32> -> vector<2x256xf32>
    %453 = arith.truncf %452 : vector<2x256xf32> to vector<2x256xbf16>
    %c3072 = arith.constant 3072 : index
    %c0_158 = arith.constant 0 : index
    %454 = vector.load %arg3[%c3072, %c0_158] : memref<4096x128xbf16, #tpu.memory_space<vmem>>, vector<256x128xbf16>
    %cst_159 = arith.constant dense<0.000000e+00> : vector<2x128xf32>
    %455 = tpu.matmul %453, %454, %cst_159 {dimension_numbers = #tpu.dot_dimension_numbers<[1], [0], [0], [1], [0, 0, 1, 1], [], []>} : vector<2x256xbf16>, vector<256x128xbf16>, vector<2x128xf32> -> vector<2x128xf32>
    %c16 = arith.constant 16 : index
    %c0_160 = arith.constant 0 : index
    %456 = vector.load %arg4[%c16, %c0_160] : memref<24x128xf32, #tpu.memory_space<vmem>>, vector<1x128xf32>
    %457 = vector.broadcast %456 : vector<1x128xf32> to vector<2x128xf32>
    %458 = arith.addf %455, %457 : vector<2x128xf32>
    %c0_161 = arith.constant 0 : index
    %c0_162 = arith.constant 0 : index
    %459 = vector.load %arg2[%c0_161, %c0_162] : memref<2x128xf32, #tpu.memory_space<vmem>>, vector<2x128xf32>
    %460 = arith.truncf %459 : vector<2x128xf32> to vector<2x128xbf16>
    %c3328 = arith.constant 3328 : index
    %c0_163 = arith.constant 0 : index
    %461 = vector.load %arg3[%c3328, %c0_163] : memref<4096x128xbf16, #tpu.memory_space<vmem>>, vector<128x128xbf16>
    %cst_164 = arith.constant dense<0.000000e+00> : vector<2x128xf32>
    %462 = tpu.matmul %460, %461, %cst_164 {dimension_numbers = #tpu.dot_dimension_numbers<[1], [0], [0], [1], [0, 0, 1, 1], [], []>} : vector<2x128xbf16>, vector<128x128xbf16>, vector<2x128xf32> -> vector<2x128xf32>
    %c17 = arith.constant 17 : index
    %c0_165 = arith.constant 0 : index
    %463 = vector.load %arg4[%c17, %c0_165] : memref<24x128xf32, #tpu.memory_space<vmem>>, vector<1x128xf32>
    %464 = vector.broadcast %463 : vector<1x128xf32> to vector<2x128xf32>
    %465 = arith.addf %462, %464 : vector<2x128xf32>
    %cst_166 = arith.constant 0.000000e+00 : f32
    %466 = vector.broadcast %cst_166 : f32 to vector<2x128xf32>
    %467 = arith.maximumf %465, %466 : vector<2x128xf32>
    %468 = arith.truncf %467 : vector<2x128xf32> to vector<2x128xbf16>
    %c3456 = arith.constant 3456 : index
    %c0_167 = arith.constant 0 : index
    %469 = vector.load %arg3[%c3456, %c0_167] : memref<4096x128xbf16, #tpu.memory_space<vmem>>, vector<128x128xbf16>
    %cst_168 = arith.constant dense<0.000000e+00> : vector<2x128xf32>
    %470 = tpu.matmul %468, %469, %cst_168 {dimension_numbers = #tpu.dot_dimension_numbers<[1], [0], [0], [1], [0, 0, 1, 1], [], []>} : vector<2x128xbf16>, vector<128x128xbf16>, vector<2x128xf32> -> vector<2x128xf32>
    %c18 = arith.constant 18 : index
    %c0_169 = arith.constant 0 : index
    %471 = vector.load %arg4[%c18, %c0_169] : memref<24x128xf32, #tpu.memory_space<vmem>>, vector<1x128xf32>
    %472 = vector.broadcast %471 : vector<1x128xf32> to vector<2x128xf32>
    %473 = arith.addf %470, %472 : vector<2x128xf32>
    %cst_170 = arith.constant 0.000000e+00 : f32
    %474 = vector.broadcast %cst_170 : f32 to vector<2x128xf32>
    %475 = arith.maximumf %473, %474 : vector<2x128xf32>
    %476 = arith.truncf %475 : vector<2x128xf32> to vector<2x128xbf16>
    %c3584 = arith.constant 3584 : index
    %c0_171 = arith.constant 0 : index
    %477 = vector.load %arg3[%c3584, %c0_171] : memref<4096x128xbf16, #tpu.memory_space<vmem>>, vector<128x128xbf16>
    %cst_172 = arith.constant dense<0.000000e+00> : vector<2x128xf32>
    %478 = tpu.matmul %476, %477, %cst_172 {dimension_numbers = #tpu.dot_dimension_numbers<[1], [0], [0], [1], [0, 0, 1, 1], [], []>} : vector<2x128xbf16>, vector<128x128xbf16>, vector<2x128xf32> -> vector<2x128xf32>
    %c19 = arith.constant 19 : index
    %c0_173 = arith.constant 0 : index
    %479 = vector.load %arg4[%c19, %c0_173] : memref<24x128xf32, #tpu.memory_space<vmem>>, vector<1x128xf32>
    %480 = vector.broadcast %479 : vector<1x128xf32> to vector<2x128xf32>
    %481 = arith.addf %478, %480 : vector<2x128xf32>
    %482 = arith.truncf %458 : vector<2x128xf32> to vector<2x128xbf16>
    %c3712 = arith.constant 3712 : index
    %c0_174 = arith.constant 0 : index
    %483 = vector.load %arg3[%c3712, %c0_174] : memref<4096x128xbf16, #tpu.memory_space<vmem>>, vector<128x128xbf16>
    %cst_175 = arith.constant dense<0.000000e+00> : vector<2x128xf32>
    %484 = tpu.matmul %482, %483, %cst_175 {dimension_numbers = #tpu.dot_dimension_numbers<[1], [0], [0], [1], [0, 0, 1, 1], [], []>} : vector<2x128xbf16>, vector<128x128xbf16>, vector<2x128xf32> -> vector<2x128xf32>
    %485 = arith.truncf %481 : vector<2x128xf32> to vector<2x128xbf16>
    %c3840 = arith.constant 3840 : index
    %c0_176 = arith.constant 0 : index
    %486 = vector.load %arg3[%c3840, %c0_176] : memref<4096x128xbf16, #tpu.memory_space<vmem>>, vector<128x128xbf16>
    %cst_177 = arith.constant dense<0.000000e+00> : vector<2x128xf32>
    %487 = tpu.matmul %485, %486, %cst_177 {dimension_numbers = #tpu.dot_dimension_numbers<[1], [0], [0], [1], [0, 0, 1, 1], [], []>} : vector<2x128xbf16>, vector<128x128xbf16>, vector<2x128xf32> -> vector<2x128xf32>
    %488 = arith.addf %484, %487 : vector<2x128xf32>
    %c20 = arith.constant 20 : index
    %c0_178 = arith.constant 0 : index
    %489 = vector.load %arg4[%c20, %c0_178] : memref<24x128xf32, #tpu.memory_space<vmem>>, vector<1x128xf32>
    %490 = vector.broadcast %489 : vector<1x128xf32> to vector<2x128xf32>
    %491 = arith.addf %488, %490 : vector<2x128xf32>
    %cst_179 = arith.constant 0.000000e+00 : f32
    %492 = vector.broadcast %cst_179 : f32 to vector<2x128xf32>
    %493 = arith.maximumf %491, %492 : vector<2x128xf32>
    %494 = arith.truncf %493 : vector<2x128xf32> to vector<2x128xbf16>
    %c3968 = arith.constant 3968 : index
    %c0_180 = arith.constant 0 : index
    %495 = vector.load %arg3[%c3968, %c0_180] : memref<4096x128xbf16, #tpu.memory_space<vmem>>, vector<128x128xbf16>
    %cst_181 = arith.constant dense<0.000000e+00> : vector<2x128xf32>
    %496 = tpu.matmul %494, %495, %cst_181 {dimension_numbers = #tpu.dot_dimension_numbers<[1], [0], [0], [1], [0, 0, 1, 1], [], []>} : vector<2x128xbf16>, vector<128x128xbf16>, vector<2x128xf32> -> vector<2x128xf32>
    %c21 = arith.constant 21 : index
    %c0_182 = arith.constant 0 : index
    %497 = vector.load %arg4[%c21, %c0_182] : memref<24x128xf32, #tpu.memory_space<vmem>>, vector<1x128xf32>
    %498 = vector.broadcast %497 : vector<1x128xf32> to vector<2x128xf32>
    %499 = arith.addf %496, %498 : vector<2x128xf32>
    %c0_183 = arith.constant 0 : index
    %c0_184 = arith.constant 0 : index
    %500 = vector.load %arg5[%c0_183, %c0_184] : memref<2x128xf32, #tpu.memory_space<vmem>>, vector<2x128xf32>
    tpu.vector_store %arg5[%c0_183, %c0_184], %499 {strides = array<i32>} : memref<2x128xf32, #tpu.memory_space<vmem>>, vector<2x128xf32>,
    return
  }
  func.func @transform_0(%arg0: i32) -> (i32, i32, i32) {
    %c0_i32 = arith.constant 0 : i32
    %c0_i32_0 = arith.constant 0 : i32
    %c0_i32_1 = arith.constant 0 : i32
    return %arg0, %c0_i32, %c0_i32_0 : i32, i32, i32
  }
  func.func @transform_1(%arg0: i32) -> (i32, i32) {
    %c0_i32 = arith.constant 0 : i32
    %c0_i32_0 = arith.constant 0 : i32
    return %arg0, %c0_i32 : i32, i32
  }
  func.func @transform_2(%arg0: i32) -> (i32, i32) {
    %c0_i32 = arith.constant 0 : i32
    %c0_i32_0 = arith.constant 0 : i32
    %c0_i32_1 = arith.constant 0 : i32
    return %c0_i32, %c0_i32_0 : i32, i32
  }
  func.func @transform_3(%arg0: i32) -> (i32, i32) {
    %c0_i32 = arith.constant 0 : i32
    %c0_i32_0 = arith.constant 0 : i32
    %c0_i32_1 = arith.constant 0 : i32
    return %c0_i32, %c0_i32_0 : i32, i32
  }
  func.func @transform_4(%arg0: i32) -> (i32, i32) {
    %c0_i32 = arith.constant 0 : i32
    %c0_i32_0 = arith.constant 0 : i32
    return %arg0, %c0_i32 : i32, i32
  }
}

</mosaic_0001>

<llo_original>
// kernel: gene_interaction_forward.1
$region0: #{gene_interaction_forward.1}
  #allocation0 [shape = 'u32[]', space=smem, size = 0x4, offset = 0x4, fixed_abs, tag = 'smem constant byte address 0x4 - core index']
  #allocation1 [shape = 'u32[144,128]{1,0:T(1,128)}', space=vmem, size = 0x12000, scoped, tag = 'internal scratch']
  %s0 = inlined_call_operand.vmem [shape: f32[1,32,128], index: 0, kind: input, shape index: {}]
  %s1 = inlined_call_operand.vmem [shape: f32[2,128], index: 1, kind: input, shape index: {}]
  %s2 = inlined_call_operand.hbm [shape: bf16[4096,128], index: 2, kind: input, shape index: {}]
  %s3 = inlined_call_operand.vmem [shape: f32[24,128], index: 3, kind: input, shape index: {}]
  %s4 = inlined_call_operand.hbm [shape: f32[2,128], index: 4, kind: output, shape index: {}]
  %s5 = sld [smem:[#allocation0]]
  $region30: #{gene_interaction_forward.1} parent=0
    _
  %s7 = ssub.s32 1, %s5
  %s8 = scalar_select 0, %s7, %s5
  $region1: #{gene_interaction_forward.1} parent=0
    #allocation2 [shape = 'u8[1048576]{0}', space=vmem, size = 0x100000, scoped, tag = 'input window, operand 2, single buffered']
    #allocation3 [shape = 's32[1]{0}', space=sflag, size = 0x4, scoped, tag = 'scoped memory for gene_interaction_forward.1']
    #allocation4 [shape = 's32[1]{0}', space=sflag, size = 0x4, scoped, tag = 'scoped memory for gene_interaction_forward.1']
    #allocation5 [shape = 'u8[1024]{0}', space=vmem, size = 0x400, scoped, tag = 'output window, operand 0, single buffered']
    %9 = vsyncpa [#allocation3], 0
    %10 = vsyncpa [#allocation4], 0
    // Predicated region
    $region2: #{gene_interaction_forward.1} parent=1 // pred_check
      _
    $region3: #{gene_interaction_forward.1} parent=1 // pred_check_branch
      %12 = sbr.rel (0) target = $region5
    $region4: #{gene_interaction_forward.1} parent=1 // pred_region
      _
    $region5: #{gene_interaction_forward.1} parent=1 // pred_fallthru
      _
    // Predicated region
    $region6: #{gene_interaction_forward.1} parent=1 // pred_check
      _
    $region7: #{gene_interaction_forward.1} parent=1 // pred_check_branch
      %14 = sbr.rel (0) target = $region9
    $region8: #{gene_interaction_forward.1} parent=1 // pred_region
      _
    $region9: #{gene_interaction_forward.1} parent=1 // pred_fallthru
      _
    // Predicated region
    $region10: #{gene_interaction_forward.1} parent=1 // pred_check
      _
    $region11: #{gene_interaction_forward.1} parent=1 // pred_check_branch
      %16 = sbr.rel (0) target = $region13
    $region12: #{gene_interaction_forward.1} parent=1 // pred_region
      %s18 = ssub.s32 32768, 32768
      %19 = vsyncadd [#allocation3], %s18
      %s20 = sshll.u32 [#allocation2], 4
      %s21 = int_to_ptr.vmem [resolvable:$true] %s20
      %26 = dma.hbm_to_vmem [thread:$0]  %s2, 32768, %s21, [#allocation3], 64, 64, 4
    $region13: #{gene_interaction_forward.1} parent=1 // pred_fallthru
      _
    // Predicated region
    $region14: #{gene_interaction_forward.1} parent=1 // pred_check
      _
    $region15: #{gene_interaction_forward.1} parent=1 // pred_check_branch
      %28 = sbr.rel (0) target = $region17
    $region16: #{gene_interaction_forward.1} parent=1 // pred_region
      _
    $region17: #{gene_interaction_forward.1} parent=1 // pred_fallthru
      _
    // Predicated region
    $region18: #{gene_interaction_forward.1} parent=1 // pred_check
      _
    $region19: #{gene_interaction_forward.1} parent=1 // pred_check_branch
      %30 = sbr.rel (0) target = $region21
    $region20: #{gene_interaction_forward.1} parent=1 // pred_region
      %31 = dma.done [#allocation3], 32768
    $region21: #{gene_interaction_forward.1} parent=1 // pred_fallthru
      _
    %v33 = vld [vmem:[%s0] sm:$0xff]
    %v34 = vld [vmem:[%s0 + $0x8] sm:$0xff]
    %v35 = vld [vmem:[%s0 + $0x10] sm:$0xff]
    %v36 = vld [vmem:[%s0 + $0x18] sm:$0xff]
    %v37 = vlaneseq
    %v38 = vshrl.u32 %v37, 7
    %v39 = vadd.s32 %v38, 8
    %v40 = vadd.s32 %v38, 16
    %v41 = vadd.s32 %v38, 24
    %vm42 = vcmp.lt.s32.totalorder %v38, 2
    %vm43 = vcmp.lt.s32.totalorder %v39, 2
    %vm44 = vcmp.lt.s32.totalorder %v40, 2
    %vm45 = vcmp.lt.s32.totalorder %v41, 2
    %v46 = vrot.slane %v33, 6
    %v47 = vrot.slane %v34, 6
    %v48 = vrot.slane %v35, 6
    %v49 = vrot.slane %v36, 6
    %v50 = vsel %vm42, %v48, %v49
    %v51 = vsel %vm42, %v47, %v48
    %v52 = vsel %vm42, %v46, %v47
    %v53 = vsel %vm42, %v49, %v46
    %v54 = vsel %vm42, 1, 0
    %v55 = vsel %vm43, 1, 0
    %v56 = vsel %vm44, 1, 0
    %v57 = vsel %vm45, 1, 0
    %vm58 = vcmp.eq.s32.totalorder %v54, 1
    %vm59 = vcmp.eq.s32.totalorder %v55, 1
    %vm60 = vcmp.eq.s32.totalorder %v56, 1
    %vm61 = vcmp.eq.s32.totalorder %v57, 1
    %v62 = vsel %vm58, 0.0, %v53
    %v63 = vsel %vm59, 0.0, %v52
    %v64 = vsel %vm60, 0.0, %v51
    %v65 = vsel %vm61, 0.0, %v50
    %vm66 = vcmp.ge.s32.totalorder %v38, 30
    %vm67 = vcmp.ge.s32.totalorder %v39, 30
    %vm68 = vcmp.ge.s32.totalorder %v40, 30
    %vm69 = vcmp.ge.s32.totalorder %v41, 30
    %v70 = vrot.slane %v33, 2
    %v71 = vrot.slane %v34, 2
    %v72 = vrot.slane %v35, 2
    %v73 = vrot.slane %v36, 2
    %vm74 = vcmp.lt.s32.totalorder %v38, 6
    %v75 = vsel %vm74, %v72, %v73
    %v76 = vsel %vm74, %v71, %v72
    %v77 = vsel %vm74, %v70, %v71
    %v78 = vsel %vm74, %v73, %v70
    %v79 = vsel %vm66, 1, 0
    %v80 = vsel %vm67, 1, 0
    %v81 = vsel %vm68, 1, 0
    %v82 = vsel %vm69, 1, 0
    %vm83 = vcmp.eq.s32.totalorder %v79, 1
    %vm84 = vcmp.eq.s32.totalorder %v80, 1
    %vm85 = vcmp.eq.s32.totalorder %v81, 1
    %vm86 = vcmp.eq.s32.totalorder %v82, 1
    %v87 = vsel %vm83, 0.0, %v77
    %v88 = vsel %vm84, 0.0, %v76
    %v89 = vsel %vm85, 0.0, %v75
    %v90 = vsel %vm86, 0.0, %v78
    %v91 = vpack.c.bf16 %v63, %v62
    %v92 = vpack.c.bf16 %v34, %v33
    %v93 = vpack.c.bf16 %v88, %v87
    %v94 = vpack.c.bf16 %v65, %v64
    %v95 = vpack.c.bf16 %v36, %v35
    %v96 = vpack.c.bf16 %v90, %v89
    %v97 = vld [vmem:[#allocation2] sm:$0xf]
    %v98 = vld [vmem:[#allocation2 + $0x4] sm:$0xf]
    %v99 = vld [vmem:[#allocation2 + $0x8] sm:$0xf]
    %v100 = vld [vmem:[#allocation2 + $0xc] sm:$0xf]
    %v101 = vld [vmem:[#allocation2 + $0x10] sm:$0xf]
    %v102 = vld [vmem:[#allocation2 + $0x14] sm:$0xf]
    %v103 = vld [vmem:[#allocation2 + $0x18] sm:$0xf]
    %v104 = vld [vmem:[#allocation2 + $0x1c] sm:$0xf]
    %v105 = vld [vmem:[#allocation2 + $0x20] sm:$0xf]
    %v106 = vld [vmem:[#allocation2 + $0x24] sm:$0xf]
    %v107 = vld [vmem:[#allocation2 + $0x28] sm:$0xf]
    %v108 = vld [vmem:[#allocation2 + $0x2c] sm:$0xf]
    %v109 = vld [vmem:[#allocation2 + $0x30] sm:$0xf]
    %v110 = vld [vmem:[#allocation2 + $0x34] sm:$0xf]
    %v111 = vld [vmem:[#allocation2 + $0x38] sm:$0xf]
    %v112 = vld [vmem:[#allocation2 + $0x3c] sm:$0xf]
    %v113 = vld [vmem:[#allocation2 + $0x40] sm:$0xf]
    %v114 = vld [vmem:[#allocation2 + $0x44] sm:$0xf]
    %v115 = vld [vmem:[#allocation2 + $0x48] sm:$0xf]
    %v116 = vld [vmem:[#allocation2 + $0x4c] sm:$0xf]
    %v117 = vld [vmem:[#allocation2 + $0x50] sm:$0xf]
    %v118 = vld [vmem:[#allocation2 + $0x54] sm:$0xf]
    %v119 = vld [vmem:[#allocation2 + $0x58] sm:$0xf]
    %v120 = vld [vmem:[#allocation2 + $0x5c] sm:$0xf]
    %v121 = vld [vmem:[#allocation2 + $0x60] sm:$0xf]
    %v122 = vld [vmem:[#allocation2 + $0x64] sm:$0xf]
    %v123 = vld [vmem:[#allocation2 + $0x68] sm:$0xf]
    %v124 = vld [vmem:[#allocation2 + $0x6c] sm:$0xf]
    %v125 = vld [vmem:[#allocation2 + $0x70] sm:$0xf]
    %v126 = vld [vmem:[#allocation2 + $0x74] sm:$0xf]
    %v127 = vld [vmem:[#allocation2 + $0x78] sm:$0xf]
    %v128 = vld [vmem:[#allocation2 + $0x7c] sm:$0xf]
    %v129 = vld [vmem:[#allocation2 + $0x80] sm:$0xf]
    %v130 = vld [vmem:[#allocation2 + $0x84] sm:$0xf]
    %v131 = vld [vmem:[#allocation2 + $0x88] sm:$0xf]
    %v132 = vld [vmem:[#allocation2 + $0x8c] sm:$0xf]
    %v133 = vld [vmem:[#allocation2 + $0x90] sm:$0xf]
    %v134 = vld [vmem:[#allocation2 + $0x94] sm:$0xf]
    %v135 = vld [vmem:[#allocation2 + $0x98] sm:$0xf]
    %v136 = vld [vmem:[#allocation2 + $0x9c] sm:$0xf]
    %v137 = vld [vmem:[#allocation2 + $0xa0] sm:$0xf]
    %v138 = vld [vmem:[#allocation2 + $0xa4] sm:$0xf]
    %v139 = vld [vmem:[#allocation2 + $0xa8] sm:$0xf]
    %v140 = vld [vmem:[#allocation2 + $0xac] sm:$0xf]
    %v141 = vld [vmem:[#allocation2 + $0xb0] sm:$0xf]
    %v142 = vld [vmem:[#allocation2 + $0xb4] sm:$0xf]
    %v143 = vld [vmem:[#allocation2 + $0xb8] sm:$0xf]
    %v144 = vld [vmem:[#allocation2 + $0xbc] sm:$0xf]
    %v145 = vld [vmem:[%s3] sm:$0x1]
    %v146 = vlaneseq
    %v147 = vshrl.u32 %v146, 7
    %v148 = vsub.s32 0, %v147
    %v149 = vrot.slane %v145, %v148
    %v198 = vunpack.c.l.b16 %v97
    %v199 = vunpack.c.l.b16 %v98
    %v200 = vunpack.c.l.b16 %v99
    %v201 = vunpack.c.l.b16 %v100
    %v202 = vunpack.c.l.b16 %v101
    %v203 = vunpack.c.l.b16 %v102
    %v204 = vunpack.c.l.b16 %v103
    %v205 = vunpack.c.l.b16 %v104
    %v206 = vunpack.c.l.b16 %v105
    %v207 = vunpack.c.l.b16 %v106
    %v208 = vunpack.c.l.b16 %v107
    %v209 = vunpack.c.l.b16 %v108
    %v210 = vunpack.c.l.b16 %v109
    %v211 = vunpack.c.l.b16 %v110
    %v212 = vunpack.c.l.b16 %v111
    %v213 = vunpack.c.l.b16 %v112
    %v214 = vunpack.c.l.b16 %v113
    %v215 = vunpack.c.l.b16 %v114
    %v216 = vunpack.c.l.b16 %v115
    %v217 = vunpack.c.l.b16 %v116
    %v218 = vunpack.c.l.b16 %v117
    %v219 = vunpack.c.l.b16 %v118
    %v220 = vunpack.c.l.b16 %v119
    %v221 = vunpack.c.l.b16 %v120
    %v222 = vunpack.c.l.b16 %v121
    %v223 = vunpack.c.l.b16 %v122
    %v224 = vunpack.c.l.b16 %v123
    %v225 = vunpack.c.l.b16 %v124
    %v226 = vunpack.c.l.b16 %v125
    %v227 = vunpack.c.l.b16 %v126
    %v228 = vunpack.c.l.b16 %v127
    %v229 = vunpack.c.l.b16 %v128
    %v230 = vunpack.c.l.b16 %v129
    %v231 = vunpack.c.l.b16 %v130
    %v232 = vunpack.c.l.b16 %v131
    %v233 = vunpack.c.l.b16 %v132
    %v234 = vunpack.c.l.b16 %v133
    %v235 = vunpack.c.l.b16 %v134
    %v236 = vunpack.c.l.b16 %v135
    %v237 = vunpack.c.l.b16 %v136
    %v238 = vunpack.c.l.b16 %v137
    %v239 = vunpack.c.l.b16 %v138
    %v240 = vunpack.c.l.b16 %v139
    %v241 = vunpack.c.l.b16 %v140
    %v242 = vunpack.c.l.b16 %v141
    %v243 = vunpack.c.l.b16 %v142
    %v244 = vunpack.c.l.b16 %v143
    %v245 = vunpack.c.l.b16 %v144
    %v246 = vpack.c.b16 %v199, %v198
    %v247 = vpack.c.b16 %v201, %v200
    %v248 = vpack.c.b16 %v203, %v202
    %v249 = vpack.c.b16 %v205, %v204
    %v250 = vpack.c.b16 %v207, %v206
    %v251 = vpack.c.b16 %v209, %v208
    %v252 = vpack.c.b16 %v211, %v210
    %v253 = vpack.c.b16 %v213, %v212
    %v254 = vpack.c.b16 %v215, %v214
    %v255 = vpack.c.b16 %v217, %v216
    %v256 = vpack.c.b16 %v219, %v218
    %v257 = vpack.c.b16 %v221, %v220
    %v258 = vpack.c.b16 %v223, %v222
    %v259 = vpack.c.b16 %v225, %v224
    %v260 = vpack.c.b16 %v227, %v226
    %v261 = vpack.c.b16 %v229, %v228
    %v262 = vpack.c.b16 %v231, %v230
    %v263 = vpack.c.b16 %v233, %v232
    %v264 = vpack.c.b16 %v235, %v234
    %v265 = vpack.c.b16 %v237, %v236
    %v266 = vpack.c.b16 %v239, %v238
    %v267 = vpack.c.b16 %v241, %v240
    %v268 = vpack.c.b16 %v243, %v242
    %v269 = vpack.c.b16 %v245, %v244
    %294 = vmatprep.subr.bf16.mxu0 0
    %295 = vmatpush1.bf16.msra.mxu0 %v246
    %296 = vmatprep.subr.bf16.mxu0 0
    %297 = vmatpush1.bf16.msra.mxu0 %v247
    %298 = vmatprep.subr.bf16.mxu0 0
    %299 = vmatpush1.bf16.msra.mxu0 %v248
    %300 = vmatprep.subr.bf16.mxu0 0
    %301 = vmatpush1.bf16.msra.mxu0 %v249
    %302 = vmatprep.subr.bf16.mxu0 0
    %303 = vmatpush1.bf16.msra.mxu0 %v250
    %304 = vmatprep.subr.bf16.mxu0 0
    %305 = vmatpush1.bf16.msra.mxu0 %v251
    %306 = vmatprep.subr.bf16.mxu0 0
    %307 = vmatpush1.bf16.msra.mxu0 %v252
    %308 = vmatprep.subr.bf16.mxu0 0
    %309 = vmatpush1.bf16.msra.mxu0 %v253
    %310 = vmatprep.subr.bf16.mxu0 0
    %311 = vmatpush1.bf16.msra.mxu0 %v254
    %312 = vmatprep.subr.bf16.mxu0 0
    %313 = vmatpush1.bf16.msra.mxu0 %v255
    %314 = vmatprep.subr.bf16.mxu0 0
    %315 = vmatpush1.bf16.msra.mxu0 %v256
    %316 = vmatprep.subr.bf16.mxu0 0
    %317 = vmatpush1.bf16.msra.mxu0 %v257
    %318 = vmatprep.subr.bf16.mxu0 0
    %319 = vmatpush1.bf16.msra.mxu0 %v258
    %320 = vmatprep.subr.bf16.mxu0 0
    %321 = vmatpush1.bf16.msra.mxu0 %v259
    %322 = vmatprep.subr.bf16.mxu0 0
    %323 = vmatpush1.bf16.msra.mxu0 %v260
    %324 = vmatprep.subr.bf16.mxu0 0
    %325 = vmatpush1.bf16.msra.mxu0 %v261
    %326 = vmatprep.mubr.bf16.mxu0 %v92
    %327 = vmatmul.mubr.bf16.gmra.mrb[0].mxu0 %v91
    %v328 = vpop.f32.mrb[0].mxu0
    %v329 = vadd.f32 %v149, %v328
    %v330 = vpop.f32.mrb[0].mxu0
    %v331 = vpop.f32.mrb[0].mxu0
    %v332 = vadd.f32 %v149, %v331
    %v333 = vpop.f32.mrb[0].mxu0
    %334 = vmatprep.mubr.bf16.mxu0 %v95
    %335 = vmatmul.mubr.bf16.gmra.mrb[0].mxu0 %v94
    %v336 = vpop.f32.mrb[0].mxu0
    %v337 = vadd.f32 %v149, %v336
    %v338 = vpop.f32.mrb[0].mxu0
    %v339 = vpop.f32.mrb[0].mxu0
    %v340 = vadd.f32 %v149, %v339
    %v341 = vpop.f32.mrb[0].mxu0
    %342 = vdwg.mxu0
    %343 = vmatprep.subr.bf16.mxu0 0
    %344 = vmatpush1.bf16.msra.mxu0 %v262
    %345 = vmatprep.subr.bf16.mxu0 0
    %346 = vmatpush1.bf16.msra.mxu0 %v263
    %347 = vmatprep.subr.bf16.mxu0 0
    %348 = vmatpush1.bf16.msra.mxu0 %v264
    %349 = vmatprep.subr.bf16.mxu0 0
    %350 = vmatpush1.bf16.msra.mxu0 %v265
    %351 = vmatprep.subr.bf16.mxu0 0
    %352 = vmatpush1.bf16.msra.mxu0 %v266
    %353 = vmatprep.subr.bf16.mxu0 0
    %354 = vmatpush1.bf16.msra.mxu0 %v267
    %355 = vmatprep.subr.bf16.mxu0 0
    %356 = vmatpush1.bf16.msra.mxu0 %v268
    %357 = vmatprep.subr.bf16.mxu0 0
    %358 = vmatpush1.bf16.msra.mxu0 %v269
    %359 = vmatprep.subr.bf16.mxu0 0
    %360 = vmatpush1.bf16.msra.mxu0 0
    %361 = vmatprep.subr.bf16.mxu0 0
    %362 = vmatpush1.bf16.msra.mxu0 0
    %363 = vmatprep.subr.bf16.mxu0 0
    %364 = vmatpush1.bf16.msra.mxu0 0
    %365 = vmatprep.subr.bf16.mxu0 0
    %366 = vmatpush1.bf16.msra.mxu0 0
    %367 = vmatprep.subr.bf16.mxu0 0
    %368 = vmatpush1.bf16.msra.mxu0 0
    %369 = vmatprep.subr.bf16.mxu0 0
    %370 = vmatpush1.bf16.msra.mxu0 0
    %371 = vmatprep.subr.bf16.mxu0 0
    %372 = vmatpush1.bf16.msra.mxu0 0
    %373 = vmatprep.subr.bf16.mxu0 0
    %374 = vmatpush1.bf16.msra.mxu0 0
    %375 = vmatprep.mubr.bf16.mxu0 0
    %376 = vmatmul.mubr.bf16.gmra.mrb[0].mxu0 %v93
    %v377 = vpop.f32.mrb[0].mxu0
    %v378 = vadd.f32 %v329, %v377
    %v379 = vpop.f32.mrb[0].mxu0
    %v380 = vpop.f32.mrb[0].mxu0
    %v381 = vadd.f32 %v332, %v380
    %v382 = vpop.f32.mrb[0].mxu0
    %383 = vmatprep.mubr.bf16.mxu0 0
    %384 = vmatmul.mubr.bf16.gmra.mrb[0].mxu0 %v96
    %v385 = vpop.f32.mrb[0].mxu0
    %v386 = vadd.f32 %v337, %v385
    %v387 = vpop.f32.mrb[0].mxu0
    %v388 = vpop.f32.mrb[0].mxu0
    %v389 = vadd.f32 %v340, %v388
    %v390 = vpop.f32.mrb[0].mxu0
    %391 = vdwg.mxu0
    %v392 = vmul.f32 %v378, 0.5
    %v393 = vmul.f32 %v381, 0.5
    %v394 = vmul.f32 %v386, 0.5
    %v395 = vmul.f32 %v389, 0.5
    %v396 = vmul.f32 %v378, 0.70710677
    %v397 = vmul.f32 %v381, 0.70710677
    %v398 = vmul.f32 %v386, 0.70710677
    %v399 = vmul.f32 %v389, 0.70710677
    %vm400 = vcmp.ge.f32.partialorder %v396, 0.0
    %vm401 = vcmp.ge.f32.partialorder %v397, 0.0
    %vm402 = vcmp.ge.f32.partialorder %v398, 0.0
    %vm403 = vcmp.ge.f32.partialorder %v399, 0.0
    %v404 = vsel %vm400, 1.0, -1.0
    %v405 = vsel %vm401, 1.0, -1.0
    %v406 = vsel %vm402, 1.0, -1.0
    %v407 = vsel %vm403, 1.0, -1.0
    %v408 = vand.u32 2147483647, %v396
    %v409 = vand.u32 2147483647, %v397
    %v410 = vand.u32 2147483647, %v398
    %v411 = vand.u32 2147483647, %v399
    %v412 = vmul.f32 %v408, 0.3275911
    %v413 = vmul.f32 %v409, 0.3275911
    %v414 = vmul.f32 %v410, 0.3275911
    %v415 = vmul.f32 %v411, 0.3275911
    %v416 = vadd.f32 %v412, 1.0
    %v417 = vadd.f32 %v413, 1.0
    %v418 = vadd.f32 %v414, 1.0
    %v419 = vadd.f32 %v415, 1.0
    %v420 = vrcp.pop %v416
    %v421 = vrcp.pop %v417
    %v422 = vrcp.pop %v418
    %v423 = vrcp.pop %v419
    %v424 = vmul.f32 %v420, 1.0614054
    %v425 = vmul.f32 %v421, 1.0614054
    %v426 = vmul.f32 %v422, 1.0614054
    %v427 = vmul.f32 %v423, 1.0614054
    %v428 = vadd.f32 %v424, -1.4531521
    %v429 = vadd.f32 %v425, -1.4531521
    %v430 = vadd.f32 %v426, -1.4531521
    %v431 = vadd.f32 %v427, -1.4531521
    %v432 = vmul.f32 %v428, %v420
    %v433 = vmul.f32 %v429, %v421
    %v434 = vmul.f32 %v430, %v422
    %v435 = vmul.f32 %v431, %v423
    %v436 = vadd.f32 %v432, 1.4214138
    %v437 = vadd.f32 %v433, 1.4214138
    %v438 = vadd.f32 %v434, 1.4214138
    %v439 = vadd.f32 %v435, 1.4214138
    %v440 = vmul.f32 %v436, %v420
    %v441 = vmul.f32 %v437, %v421
    %v442 = vmul.f32 %v438, %v422
    %v443 = vmul.f32 %v439, %v423
    %v444 = vadd.f32 %v440, -0.28449672
    %v445 = vadd.f32 %v441, -0.28449672
    %v446 = vadd.f32 %v442, -0.28449672
    %v447 = vadd.f32 %v443, -0.28449672
    %v448 = vmul.f32 %v444, %v420
    %v449 = vmul.f32 %v445, %v421
    %v450 = vmul.f32 %v446, %v422
    %v451 = vmul.f32 %v447, %v423
    %v452 = vadd.f32 %v448, 0.2548296
    %v453 = vadd.f32 %v449, 0.2548296
    %v454 = vadd.f32 %v450, 0.2548296
    %v455 = vadd.f32 %v451, 0.2548296
    %v456 = vmul.f32 %v452, %v420
    %v457 = vmul.f32 %v453, %v421
    %v458 = vmul.f32 %v454, %v422
    %v459 = vmul.f32 %v455, %v423
    %v460 = vsub.f32 0.0, %v408
    %v461 = vsub.f32 0.0, %v409
    %v462 = vsub.f32 0.0, %v410
    %v463 = vsub.f32 0.0, %v411
    %v464 = vmul.f32 %v460, %v408
    %v465 = vmul.f32 %v461, %v409
    %v466 = vmul.f32 %v462, %v410
    %v467 = vmul.f32 %v463, %v411
    %v468 = vmul.f32 %v464, 1.442695
    %v469 = vpow.pop %v468
    %v470 = vmul.f32 %v465, 1.442695
    %v471 = vpow.pop %v470
    %v472 = vmul.f32 %v466, 1.442695
    %v473 = vpow.pop %v472
    %v474 = vmul.f32 %v467, 1.442695
    %v475 = vpow.pop %v474
    %v476 = vmul.f32 %v456, %v469
    %v477 = vmul.f32 %v457, %v471
    %v478 = vmul.f32 %v458, %v473
    %v479 = vmul.f32 %v459, %v475
    %v480 = vsub.f32 1.0, %v476
    %v481 = vsub.f32 1.0, %v477
    %v482 = vsub.f32 1.0, %v478
    %v483 = vsub.f32 1.0, %v479
    %v484 = vmul.f32 %v404, %v480
    %v485 = vmul.f32 %v405, %v481
    %v486 = vmul.f32 %v406, %v482
    %v487 = vmul.f32 %v407, %v483
    %v488 = vadd.f32 %v484, 1.0
    %v489 = vadd.f32 %v485, 1.0
    %v490 = vadd.f32 %v486, 1.0
    %v491 = vadd.f32 %v487, 1.0
    %v492 = vmul.f32 %v392, %v488
    %v493 = vmul.f32 %v393, %v489
    %v494 = vmul.f32 %v394, %v490
    %v495 = vmul.f32 %v395, %v491
    %v496 = vrot.slane %v492, 6
    %v497 = vrot.slane %v493, 6
    %v498 = vrot.slane %v494, 6
    %v499 = vrot.slane %v495, 6
    %v500 = vsel %vm42, %v498, %v499
    %v501 = vsel %vm42, %v497, %v498
    %v502 = vsel %vm42, %v496, %v497
    %v503 = vsel %vm42, %v499, %v496
    %v504 = vsel %vm58, 0.0, %v503
    %v505 = vsel %vm59, 0.0, %v502
    %v506 = vsel %vm60, 0.0, %v501
    %v507 = vsel %vm61, 0.0, %v500
    %v508 = vrot.slane %v492, 2
    %v509 = vrot.slane %v493, 2
    %v510 = vrot.slane %v494, 2
    %v511 = vrot.slane %v495, 2
    %v512 = vsel %vm74, %v510, %v511
    %v513 = vsel %vm74, %v509, %v510
    %v514 = vsel %vm74, %v508, %v509
    %v515 = vsel %vm74, %v511, %v508
    %v516 = vsel %vm83, 0.0, %v514
    %v517 = vsel %vm84, 0.0, %v513
    %v518 = vsel %vm85, 0.0, %v512
    %v519 = vsel %vm86, 0.0, %v515
    %v520 = vpack.c.bf16 %v505, %v504
    %v521 = vpack.c.bf16 %v493, %v492
    %v522 = vpack.c.bf16 %v517, %v516
    %v523 = vpack.c.bf16 %v507, %v506
    %v524 = vpack.c.bf16 %v495, %v494
    %v525 = vpack.c.bf16 %v519, %v518
    %v526 = vld [vmem:[#allocation2 + $0xc0] sm:$0xf]
    %v527 = vld [vmem:[#allocation2 + $0xc4] sm:$0xf]
    %v528 = vld [vmem:[#allocation2 + $0xc8] sm:$0xf]
    %v529 = vld [vmem:[#allocation2 + $0xcc] sm:$0xf]
    %v530 = vld [vmem:[#allocation2 + $0xd0] sm:$0xf]
    %v531 = vld [vmem:[#allocation2 + $0xd4] sm:$0xf]
    %v532 = vld [vmem:[#allocation2 + $0xd8] sm:$0xf]
    %v533 = vld [vmem:[#allocation2 + $0xdc] sm:$0xf]
    %v534 = vld [vmem:[#allocation2 + $0xe0] sm:$0xf]
    %v535 = vld [vmem:[#allocation2 + $0xe4] sm:$0xf]
    %v536 = vld [vmem:[#allocation2 + $0xe8] sm:$0xf]
    %v537 = vld [vmem:[#allocation2 + $0xec] sm:$0xf]
    %v538 = vld [vmem:[#allocation2 + $0xf0] sm:$0xf]
    %v539 = vld [vmem:[#allocation2 + $0xf4] sm:$0xf]
    %v540 = vld [vmem:[#allocation2 + $0xf8] sm:$0xf]
    %v541 = vld [vmem:[#allocation2 + $0xfc] sm:$0xf]
    %v542 = vld [vmem:[#allocation2 + $0x100] sm:$0xf]
    %v543 = vld [vmem:[#allocation2 + $0x104] sm:$0xf]
    %v544 = vld [vmem:[#allocation2 + $0x108] sm:$0xf]
    %v545 = vld [vmem:[#allocation2 + $0x10c] sm:$0xf]
    %v546 = vld [vmem:[#allocation2 + $0x110] sm:$0xf]
    %v547 = vld [vmem:[#allocation2 + $0x114] sm:$0xf]
    %v548 = vld [vmem:[#allocation2 + $0x118] sm:$0xf]
    %v549 = vld [vmem:[#allocation2 + $0x11c] sm:$0xf]
    %v550 = vld [vmem:[#allocation2 + $0x120] sm:$0xf]
    %v551 = vld [vmem:[#allocation2 + $0x124] sm:$0xf]
    %v552 = vld [vmem:[#allocation2 + $0x128] sm:$0xf]
    %v553 = vld [vmem:[#allocation2 + $0x12c] sm:$0xf]
    %v554 = vld [vmem:[#allocation2 + $0x130] sm:$0xf]
    %v555 = vld [vmem:[#allocation2 + $0x134] sm:$0xf]
    %v556 = vld [vmem:[#allocation2 + $0x138] sm:$0xf]
    %v557 = vld [vmem:[#allocation2 + $0x13c] sm:$0xf]
    %v558 = vld [vmem:[#allocation2 + $0x140] sm:$0xf]
    %v559 = vld [vmem:[#allocation2 + $0x144] sm:$0xf]
    %v560 = vld [vmem:[#allocation2 + $0x148] sm:$0xf]
    %v561 = vld [vmem:[#allocation2 + $0x14c] sm:$0xf]
    %v562 = vld [vmem:[#allocation2 + $0x150] sm:$0xf]
    %v563 = vld [vmem:[#allocation2 + $0x154] sm:$0xf]
    %v564 = vld [vmem:[#allocation2 + $0x158] sm:$0xf]
    %v565 = vld [vmem:[#allocation2 + $0x15c] sm:$0xf]
    %v566 = vld [vmem:[#allocation2 + $0x160] sm:$0xf]
    %v567 = vld [vmem:[#allocation2 + $0x164] sm:$0xf]
    %v568 = vld [vmem:[#allocation2 + $0x168] sm:$0xf]
    %v569 = vld [vmem:[#allocation2 + $0x16c] sm:$0xf]
    %v570 = vld [vmem:[#allocation2 + $0x170] sm:$0xf]
    %v571 = vld [vmem:[#allocation2 + $0x174] sm:$0xf]
    %v572 = vld [vmem:[#allocation2 + $0x178] sm:$0xf]
    %v573 = vld [vmem:[#allocation2 + $0x17c] sm:$0xf]
    %v574 = vld [vmem:[%s3 + $0x1] sm:$0x1]
    %v575 = vlaneseq
    %v576 = vshrl.u32 %v575, 7
    %v577 = vsub.s32 0, %v576
    %v578 = vrot.slane %v574, %v577
    %v627 = vunpack.c.l.b16 %v526
    %v628 = vunpack.c.l.b16 %v527
    %v629 = vunpack.c.l.b16 %v528
    %v630 = vunpack.c.l.b16 %v529
    %v631 = vunpack.c.l.b16 %v530
    %v632 = vunpack.c.l.b16 %v531
    %v633 = vunpack.c.l.b16 %v532
    %v634 = vunpack.c.l.b16 %v533
    %v635 = vunpack.c.l.b16 %v534
    %v636 = vunpack.c.l.b16 %v535
    %v637 = vunpack.c.l.b16 %v536
    %v638 = vunpack.c.l.b16 %v537
    %v639 = vunpack.c.l.b16 %v538
    %v640 = vunpack.c.l.b16 %v539
    %v641 = vunpack.c.l.b16 %v540
    %v642 = vunpack.c.l.b16 %v541
    %v643 = vunpack.c.l.b16 %v542
    %v644 = vunpack.c.l.b16 %v543
    %v645 = vunpack.c.l.b16 %v544
    %v646 = vunpack.c.l.b16 %v545
    %v647 = vunpack.c.l.b16 %v546
    %v648 = vunpack.c.l.b16 %v547
    %v649 = vunpack.c.l.b16 %v548
    %v650 = vunpack.c.l.b16 %v549
    %v651 = vunpack.c.l.b16 %v550
    %v652 = vunpack.c.l.b16 %v551
    %v653 = vunpack.c.l.b16 %v552
    %v654 = vunpack.c.l.b16 %v553
    %v655 = vunpack.c.l.b16 %v554
    %v656 = vunpack.c.l.b16 %v555
    %v657 = vunpack.c.l.b16 %v556
    %v658 = vunpack.c.l.b16 %v557
    %v659 = vunpack.c.l.b16 %v558
    %v660 = vunpack.c.l.b16 %v559
    %v661 = vunpack.c.l.b16 %v560
    %v662 = vunpack.c.l.b16 %v561
    %v663 = vunpack.c.l.b16 %v562
    %v664 = vunpack.c.l.b16 %v563
    %v665 = vunpack.c.l.b16 %v564
    %v666 = vunpack.c.l.b16 %v565
    %v667 = vunpack.c.l.b16 %v566
    %v668 = vunpack.c.l.b16 %v567
    %v669 = vunpack.c.l.b16 %v568
    %v670 = vunpack.c.l.b16 %v569
    %v671 = vunpack.c.l.b16 %v570
    %v672 = vunpack.c.l.b16 %v571
    %v673 = vunpack.c.l.b16 %v572
    %v674 = vunpack.c.l.b16 %v573
    %v675 = vpack.c.b16 %v628, %v627
    %v676 = vpack.c.b16 %v630, %v629
    %v677 = vpack.c.b16 %v632, %v631
    %v678 = vpack.c.b16 %v634, %v633
    %v679 = vpack.c.b16 %v636, %v635
    %v680 = vpack.c.b16 %v638, %v637
    %v681 = vpack.c.b16 %v640, %v639
    %v682 = vpack.c.b16 %v642, %v641
    %v683 = vpack.c.b16 %v644, %v643
    %v684 = vpack.c.b16 %v646, %v645
    %v685 = vpack.c.b16 %v648, %v647
    %v686 = vpack.c.b16 %v650, %v649
    %v687 = vpack.c.b16 %v652, %v651
    %v688 = vpack.c.b16 %v654, %v653
    %v689 = vpack.c.b16 %v656, %v655
    %v690 = vpack.c.b16 %v658, %v657
    %v691 = vpack.c.b16 %v660, %v659
    %v692 = vpack.c.b16 %v662, %v661
    %v693 = vpack.c.b16 %v664, %v663
    %v694 = vpack.c.b16 %v666, %v665
    %v695 = vpack.c.b16 %v668, %v667
    %v696 = vpack.c.b16 %v670, %v669
    %v697 = vpack.c.b16 %v672, %v671
    %v698 = vpack.c.b16 %v674, %v673
    %723 = vmatprep.subr.bf16.mxu0 0
    %724 = vmatpush1.bf16.msra.mxu0 %v675
    %725 = vmatprep.subr.bf16.mxu0 0
    %726 = vmatpush1.bf16.msra.mxu0 %v676
    %727 = vmatprep.subr.bf16.mxu0 0
    %728 = vmatpush1.bf16.msra.mxu0 %v677
    %729 = vmatprep.subr.bf16.mxu0 0
    %730 = vmatpush1.bf16.msra.mxu0 %v678
    %731 = vmatprep.subr.bf16.mxu0 0
    %732 = vmatpush1.bf16.msra.mxu0 %v679
    %733 = vmatprep.subr.bf16.mxu0 0
    %734 = vmatpush1.bf16.msra.mxu0 %v680
    %735 = vmatprep.subr.bf16.mxu0 0
    %736 = vmatpush1.bf16.msra.mxu0 %v681
    %737 = vmatprep.subr.bf16.mxu0 0
    %738 = vmatpush1.bf16.msra.mxu0 %v682
    %739 = vmatprep.subr.bf16.mxu0 0
    %740 = vmatpush1.bf16.msra.mxu0 %v683
    %741 = vmatprep.subr.bf16.mxu0 0
    %742 = vmatpush1.bf16.msra.mxu0 %v684
    %743 = vmatprep.subr.bf16.mxu0 0
    %744 = vmatpush1.bf16.msra.mxu0 %v685
    %745 = vmatprep.subr.bf16.mxu0 0
    %746 = vmatpush1.bf16.msra.mxu0 %v686
    %747 = vmatprep.subr.bf16.mxu0 0
    %748 = vmatpush1.bf16.msra.mxu0 %v687
    %749 = vmatprep.subr.bf16.mxu0 0
    %750 = vmatpush1.bf16.msra.mxu0 %v688
    %751 = vmatprep.subr.bf16.mxu0 0
    %752 = vmatpush1.bf16.msra.mxu0 %v689
    %753 = vmatprep.subr.bf16.mxu0 0
    %754 = vmatpush1.bf16.msra.mxu0 %v690
    %755 = vmatprep.mubr.bf16.mxu0 %v521
    %756 = vmatmul.mubr.bf16.gmra.mrb[0].mxu0 %v520
    %v757 = vpop.f32.mrb[0].mxu0
    %v758 = vadd.f32 %v578, %v757
    %v759 = vpop.f32.mrb[0].mxu0
    %v760 = vpop.f32.mrb[0].mxu0
    %v761 = vadd.f32 %v578, %v760
    %v762 = vpop.f32.mrb[0].mxu0
    %763 = vmatprep.mubr.bf16.mxu0 %v524
    %764 = vmatmul.mubr.bf16.gmra.mrb[0].mxu0 %v523
    %v765 = vpop.f32.mrb[0].mxu0
    %v766 = vadd.f32 %v578, %v765
    %v767 = vpop.f32.mrb[0].mxu0
    %v768 = vpop.f32.mrb[0].mxu0
    %v769 = vadd.f32 %v578, %v768
    %v770 = vpop.f32.mrb[0].mxu0
    %771 = vdwg.mxu0
    %772 = vmatprep.subr.bf16.mxu0 0
    %773 = vmatpush1.bf16.msra.mxu0 %v691
    %774 = vmatprep.subr.bf16.mxu0 0
    %775 = vmatpush1.bf16.msra.mxu0 %v692
    %776 = vmatprep.subr.bf16.mxu0 0
    %777 = vmatpush1.bf16.msra.mxu0 %v693
    %778 = vmatprep.subr.bf16.mxu0 0
    %779 = vmatpush1.bf16.msra.mxu0 %v694
    %780 = vmatprep.subr.bf16.mxu0 0
    %781 = vmatpush1.bf16.msra.mxu0 %v695
    %782 = vmatprep.subr.bf16.mxu0 0
    %783 = vmatpush1.bf16.msra.mxu0 %v696
    %784 = vmatprep.subr.bf16.mxu0 0
    %785 = vmatpush1.bf16.msra.mxu0 %v697
    %786 = vmatprep.subr.bf16.mxu0 0
    %787 = vmatpush1.bf16.msra.mxu0 %v698
    %788 = vmatprep.subr.bf16.mxu0 0
    %789 = vmatpush1.bf16.msra.mxu0 0
    %790 = vmatprep.subr.bf16.mxu0 0
    %791 = vmatpush1.bf16.msra.mxu0 0
    %792 = vmatprep.subr.bf16.mxu0 0
    %793 = vmatpush1.bf16.msra.mxu0 0
    %794 = vmatprep.subr.bf16.mxu0 0
    %795 = vmatpush1.bf16.msra.mxu0 0
    %796 = vmatprep.subr.bf16.mxu0 0
    %797 = vmatpush1.bf16.msra.mxu0 0
    %798 = vmatprep.subr.bf16.mxu0 0
    %799 = vmatpush1.bf16.msra.mxu0 0
    %800 = vmatprep.subr.bf16.mxu0 0
    %801 = vmatpush1.bf16.msra.mxu0 0
    %802 = vmatprep.subr.bf16.mxu0 0
    %803 = vmatpush1.bf16.msra.mxu0 0
    %804 = vmatprep.mubr.bf16.mxu0 0
    %805 = vmatmul.mubr.bf16.gmra.mrb[0].mxu0 %v522
    %v806 = vpop.f32.mrb[0].mxu0
    %v807 = vadd.f32 %v758, %v806
    %v808 = vpop.f32.mrb[0].mxu0
    %v809 = vpop.f32.mrb[0].mxu0
    %v810 = vadd.f32 %v761, %v809
    %v811 = vpop.f32.mrb[0].mxu0
    %812 = vmatprep.mubr.bf16.mxu0 0
    %813 = vmatmul.mubr.bf16.gmra.mrb[0].mxu0 %v525
    %v814 = vpop.f32.mrb[0].mxu0
    %v815 = vadd.f32 %v766, %v814
    %v816 = vpop.f32.mrb[0].mxu0
    %v817 = vpop.f32.mrb[0].mxu0
    %v818 = vadd.f32 %v769, %v817
    %v819 = vpop.f32.mrb[0].mxu0
    %820 = vdwg.mxu0
    %v821 = vmul.f32 %v807, 0.5
    %v822 = vmul.f32 %v810, 0.5
    %v823 = vmul.f32 %v815, 0.5
    %v824 = vmul.f32 %v818, 0.5
    %v825 = vmul.f32 %v807, 0.70710677
    %v826 = vmul.f32 %v810, 0.70710677
    %v827 = vmul.f32 %v815, 0.70710677
    %v828 = vmul.f32 %v818, 0.70710677
    %vm829 = vcmp.ge.f32.partialorder %v825, 0.0
    %vm830 = vcmp.ge.f32.partialorder %v826, 0.0
    %vm831 = vcmp.ge.f32.partialorder %v827, 0.0
    %vm832 = vcmp.ge.f32.partialorder %v828, 0.0
    %v833 = vsel %vm829, 1.0, -1.0
    %v834 = vsel %vm830, 1.0, -1.0
    %v835 = vsel %vm831, 1.0, -1.0
    %v836 = vsel %vm832, 1.0, -1.0
    %v837 = vand.u32 2147483647, %v825
    %v838 = vand.u32 2147483647, %v826
    %v839 = vand.u32 2147483647, %v827
    %v840 = vand.u32 2147483647, %v828
    %v841 = vmul.f32 %v837, 0.3275911
    %v842 = vmul.f32 %v838, 0.3275911
    %v843 = vmul.f32 %v839, 0.3275911
    %v844 = vmul.f32 %v840, 0.3275911
    %v845 = vadd.f32 %v841, 1.0
    %v846 = vadd.f32 %v842, 1.0
    %v847 = vadd.f32 %v843, 1.0
    %v848 = vadd.f32 %v844, 1.0
    %v849 = vrcp.pop %v845
    %v850 = vrcp.pop %v846
    %v851 = vrcp.pop %v847
    %v852 = vrcp.pop %v848
    %v853 = vmul.f32 %v849, 1.0614054
    %v854 = vmul.f32 %v850, 1.0614054
    %v855 = vmul.f32 %v851, 1.0614054
    %v856 = vmul.f32 %v852, 1.0614054
    %v857 = vadd.f32 %v853, -1.4531521
    %v858 = vadd.f32 %v854, -1.4531521
    %v859 = vadd.f32 %v855, -1.4531521
    %v860 = vadd.f32 %v856, -1.4531521
    %v861 = vmul.f32 %v857, %v849
    %v862 = vmul.f32 %v858, %v850
    %v863 = vmul.f32 %v859, %v851
    %v864 = vmul.f32 %v860, %v852
    %v865 = vadd.f32 %v861, 1.4214138
    %v866 = vadd.f32 %v862, 1.4214138
    %v867 = vadd.f32 %v863, 1.4214138
    %v868 = vadd.f32 %v864, 1.4214138
    %v869 = vmul.f32 %v865, %v849
    %v870 = vmul.f32 %v866, %v850
    %v871 = vmul.f32 %v867, %v851
    %v872 = vmul.f32 %v868, %v852
    %v873 = vadd.f32 %v869, -0.28449672
    %v874 = vadd.f32 %v870, -0.28449672
    %v875 = vadd.f32 %v871, -0.28449672
    %v876 = vadd.f32 %v872, -0.28449672
    %v877 = vmul.f32 %v873, %v849
    %v878 = vmul.f32 %v874, %v850
    %v879 = vmul.f32 %v875, %v851
    %v880 = vmul.f32 %v876, %v852
    %v881 = vadd.f32 %v877, 0.2548296
    %v882 = vadd.f32 %v878, 0.2548296
    %v883 = vadd.f32 %v879, 0.2548296
    %v884 = vadd.f32 %v880, 0.2548296
    %v885 = vmul.f32 %v881, %v849
    %v886 = vmul.f32 %v882, %v850
    %v887 = vmul.f32 %v883, %v851
    %v888 = vmul.f32 %v884, %v852
    %v889 = vsub.f32 0.0, %v837
    %v890 = vsub.f32 0.0, %v838
    %v891 = vsub.f32 0.0, %v839
    %v892 = vsub.f32 0.0, %v840
    %v893 = vmul.f32 %v889, %v837
    %v894 = vmul.f32 %v890, %v838
    %v895 = vmul.f32 %v891, %v839
    %v896 = vmul.f32 %v892, %v840
    %v897 = vmul.f32 %v893, 1.442695
    %v898 = vpow.pop %v897
    %v899 = vmul.f32 %v894, 1.442695
    %v900 = vpow.pop %v899
    %v901 = vmul.f32 %v895, 1.442695
    %v902 = vpow.pop %v901
    %v903 = vmul.f32 %v896, 1.442695
    %v904 = vpow.pop %v903
    %v905 = vmul.f32 %v885, %v898
    %v906 = vmul.f32 %v886, %v900
    %v907 = vmul.f32 %v887, %v902
    %v908 = vmul.f32 %v888, %v904
    %v909 = vsub.f32 1.0, %v905
    %v910 = vsub.f32 1.0, %v906
    %v911 = vsub.f32 1.0, %v907
    %v912 = vsub.f32 1.0, %v908
    %v913 = vmul.f32 %v833, %v909
    %v914 = vmul.f32 %v834, %v910
    %v915 = vmul.f32 %v835, %v911
    %v916 = vmul.f32 %v836, %v912
    %v917 = vadd.f32 %v913, 1.0
    %v918 = vadd.f32 %v914, 1.0
    %v919 = vadd.f32 %v915, 1.0
    %v920 = vadd.f32 %v916, 1.0
    %v921 = vmul.f32 %v821, %v917
    %v922 = vmul.f32 %v822, %v918
    %v923 = vmul.f32 %v823, %v919
    %v924 = vmul.f32 %v824, %v920
    %v929 = vcombine.high %v921, %v921
    %v930 = vcombine.high %v922, %v922
    %v931 = vcombine.high %v923, %v923
    %v932 = vcombine.high %v924, %v924
    %v937 = vrot.slane %v921, 6
    %v938 = vrot.slane %v937, 4
    %v939 = vrot.slane %v929, 6
    %v940 = vrot.slane %v939, 4
    %v941 = vrot.slane %v922, 6
    %v942 = vrot.slane %v941, 4
    %v943 = vrot.slane %v930, 6
    %v944 = vrot.slane %v943, 4
    %v945 = vrot.slane %v923, 6
    %v946 = vrot.slane %v945, 4
    %v947 = vrot.slane %v931, 6
    %v948 = vrot.slane %v947, 4
    %v949 = vrot.slane %v924, 6
    %v950 = vrot.slane %v949, 4
    %v951 = vrot.slane %v932, 6
    %v952 = vrot.slane %v951, 4
    %v961 = vadd.f32 %v921, %v938
    %v962 = vadd.f32 %v929, %v940
    %v963 = vadd.f32 %v922, %v942
    %v964 = vadd.f32 %v930, %v944
    %v965 = vadd.f32 %v923, %v946
    %v966 = vadd.f32 %v931, %v948
    %v967 = vadd.f32 %v924, %v950
    %v968 = vadd.f32 %v932, %v952
    %v969 = vmul.f32 %v961, 0.5
    %v970 = vmul.f32 %v962, 0.5
    %v971 = vmul.f32 %v963, 0.5
    %v972 = vmul.f32 %v964, 0.5
    %v973 = vmul.f32 %v965, 0.5
    %v974 = vmul.f32 %v966, 0.5
    %v975 = vmul.f32 %v967, 0.5
    %v976 = vmul.f32 %v968, 0.5
    %v985 = vcombine.low %v969, %v970
    %v986 = vcombine.low %v971, %v972
    %v988 = vunpack.c.l.s4 1983009808
    %v989 = vunpack.c.0.s8 %v988
    %v990 = vlaneseq
    %v991 = vshrl.u32 %v990, 7
    %v992 = vsub.s32 %v989, %v991
    %v993 = vrot.slane %v985, %v992
    %v995 = vunpack.c.l.s4 1983009808
    %v996 = vunpack.c.0.s8 %v995
    %v997 = vlaneseq
    %v998 = vshrl.u32 %v997, 7
    %v999 = vsub.s32 %v996, %v998
    %v1000 = vrot.slane %v986, %v999
    %v1001 = vcombine.low %v993, %v1000
    %v1002 = vcombine.low %v973, %v974
    %v1003 = vcombine.low %v975, %v976
    %v1005 = vunpack.c.l.s4 1983009808
    %v1006 = vunpack.c.0.s8 %v1005
    %v1007 = vlaneseq
    %v1008 = vshrl.u32 %v1007, 7
    %v1009 = vsub.s32 %v1006, %v1008
    %v1010 = vrot.slane %v1002, %v1009
    %v1012 = vunpack.c.l.s4 1983009808
    %v1013 = vunpack.c.0.s8 %v1012
    %v1014 = vlaneseq
    %v1015 = vshrl.u32 %v1014, 7
    %v1016 = vsub.s32 %v1013, %v1015
    %v1017 = vrot.slane %v1003, %v1016
    %v1018 = vcombine.low %v1010, %v1017
    %v1021 = vrot.slane %v1001, 6
    %v1022 = vrot.slane %v1018, 6
    %v1023 = vsel %vm42, %v1021, %v1022
    %v1024 = vsel %vm42, %v1022, %v1021
    %v1025 = vsel %vm58, 0.0, %v1024
    %v1026 = vsel %vm59, 0.0, %v1023
    %vm1027 = vcmp.ge.s32.totalorder %v38, 14
    %vm1028 = vcmp.ge.s32.totalorder %v39, 14
    %v1029 = vrot.slane %v1001, 2
    %v1030 = vrot.slane %v1018, 2
    %v1031 = vsel %vm74, %v1029, %v1030
    %v1032 = vsel %vm74, %v1030, %v1029
    %v1033 = vsel %vm1027, 1, 0
    %v1034 = vsel %vm1028, 1, 0
    %vm1035 = vcmp.eq.s32.totalorder %v1033, 1
    %vm1036 = vcmp.eq.s32.totalorder %v1034, 1
    %v1037 = vsel %vm1035, 0.0, %v1031
    %v1038 = vsel %vm1036, 0.0, %v1032
    %v1039 = vpack.c.bf16 %v1026, %v1025
    %v1040 = vpack.c.bf16 %v1018, %v1001
    %v1041 = vpack.c.bf16 %v1038, %v1037
    %v1042 = vld [vmem:[#allocation2 + $0x180] sm:$0xf]
    %v1043 = vld [vmem:[#allocation2 + $0x184] sm:$0xf]
    %v1044 = vld [vmem:[#allocation2 + $0x188] sm:$0xf]
    %v1045 = vld [vmem:[#allocation2 + $0x18c] sm:$0xf]
    %v1046 = vld [vmem:[#allocation2 + $0x190] sm:$0xf]
    %v1047 = vld [vmem:[#allocation2 + $0x194] sm:$0xf]
    %v1048 = vld [vmem:[#allocation2 + $0x198] sm:$0xf]
    %v1049 = vld [vmem:[#allocation2 + $0x19c] sm:$0xf]
    %v1050 = vld [vmem:[#allocation2 + $0x1a0] sm:$0xf]
    %v1051 = vld [vmem:[#allocation2 + $0x1a4] sm:$0xf]
    %v1052 = vld [vmem:[#allocation2 + $0x1a8] sm:$0xf]
    %v1053 = vld [vmem:[#allocation2 + $0x1ac] sm:$0xf]
    %v1054 = vld [vmem:[#allocation2 + $0x1b0] sm:$0xf]
    %v1055 = vld [vmem:[#allocation2 + $0x1b4] sm:$0xf]
    %v1056 = vld [vmem:[#allocation2 + $0x1b8] sm:$0xf]
    %v1057 = vld [vmem:[#allocation2 + $0x1bc] sm:$0xf]
    %v1058 = vld [vmem:[#allocation2 + $0x1c0] sm:$0xf]
    %v1059 = vld [vmem:[#allocation2 + $0x1c4] sm:$0xf]
    %v1060 = vld [vmem:[#allocation2 + $0x1c8] sm:$0xf]
    %v1061 = vld [vmem:[#allocation2 + $0x1cc] sm:$0xf]
    %v1062 = vld [vmem:[#allocation2 + $0x1d0] sm:$0xf]
    %v1063 = vld [vmem:[#allocation2 + $0x1d4] sm:$0xf]
    %v1064 = vld [vmem:[#allocation2 + $0x1d8] sm:$0xf]
    %v1065 = vld [vmem:[#allocation2 + $0x1dc] sm:$0xf]
    %v1066 = vld [vmem:[#allocation2 + $0x1e0] sm:$0xf]
    %v1067 = vld [vmem:[#allocation2 + $0x1e4] sm:$0xf]
    %v1068 = vld [vmem:[#allocation2 + $0x1e8] sm:$0xf]
    %v1069 = vld [vmem:[#allocation2 + $0x1ec] sm:$0xf]
    %v1070 = vld [vmem:[#allocation2 + $0x1f0] sm:$0xf]
    %v1071 = vld [vmem:[#allocation2 + $0x1f4] sm:$0xf]
    %v1072 = vld [vmem:[#allocation2 + $0x1f8] sm:$0xf]
    %v1073 = vld [vmem:[#allocation2 + $0x1fc] sm:$0xf]
    %v1074 = vld [vmem:[#allocation2 + $0x200] sm:$0xf]
    %v1075 = vld [vmem:[#allocation2 + $0x204] sm:$0xf]
    %v1076 = vld [vmem:[#allocation2 + $0x208] sm:$0xf]
    %v1077 = vld [vmem:[#allocation2 + $0x20c] sm:$0xf]
    %v1078 = vld [vmem:[#allocation2 + $0x210] sm:$0xf]
    %v1079 = vld [vmem:[#allocation2 + $0x214] sm:$0xf]
    %v1080 = vld [vmem:[#allocation2 + $0x218] sm:$0xf]
    %v1081 = vld [vmem:[#allocation2 + $0x21c] sm:$0xf]
    %v1082 = vld [vmem:[#allocation2 + $0x220] sm:$0xf]
    %v1083 = vld [vmem:[#allocation2 + $0x224] sm:$0xf]
    %v1084 = vld [vmem:[#allocation2 + $0x228] sm:$0xf]
    %v1085 = vld [vmem:[#allocation2 + $0x22c] sm:$0xf]
    %v1086 = vld [vmem:[#allocation2 + $0x230] sm:$0xf]
    %v1087 = vld [vmem:[#allocation2 + $0x234] sm:$0xf]
    %v1088 = vld [vmem:[#allocation2 + $0x238] sm:$0xf]
    %v1089 = vld [vmem:[#allocation2 + $0x23c] sm:$0xf]
    %v1090 = vld [vmem:[%s3 + $0x2] sm:$0x1]
    %v1091 = vlaneseq
    %v1092 = vshrl.u32 %v1091, 7
    %v1093 = vsub.s32 0, %v1092
    %v1094 = vrot.slane %v1090, %v1093
    %v1143 = vunpack.c.l.b16 %v1042
    %v1144 = vunpack.c.l.b16 %v1043
    %v1145 = vunpack.c.l.b16 %v1044
    %v1146 = vunpack.c.l.b16 %v1045
    %v1147 = vunpack.c.l.b16 %v1046
    %v1148 = vunpack.c.l.b16 %v1047
    %v1149 = vunpack.c.l.b16 %v1048
    %v1150 = vunpack.c.l.b16 %v1049
    %v1151 = vunpack.c.l.b16 %v1050
    %v1152 = vunpack.c.l.b16 %v1051
    %v1153 = vunpack.c.l.b16 %v1052
    %v1154 = vunpack.c.l.b16 %v1053
    %v1155 = vunpack.c.l.b16 %v1054
    %v1156 = vunpack.c.l.b16 %v1055
    %v1157 = vunpack.c.l.b16 %v1056
    %v1158 = vunpack.c.l.b16 %v1057
    %v1159 = vunpack.c.l.b16 %v1058
    %v1160 = vunpack.c.l.b16 %v1059
    %v1161 = vunpack.c.l.b16 %v1060
    %v1162 = vunpack.c.l.b16 %v1061
    %v1163 = vunpack.c.l.b16 %v1062
    %v1164 = vunpack.c.l.b16 %v1063
    %v1165 = vunpack.c.l.b16 %v1064
    %v1166 = vunpack.c.l.b16 %v1065
    %v1167 = vunpack.c.l.b16 %v1066
    %v1168 = vunpack.c.l.b16 %v1067
    %v1169 = vunpack.c.l.b16 %v1068
    %v1170 = vunpack.c.l.b16 %v1069
    %v1171 = vunpack.c.l.b16 %v1070
    %v1172 = vunpack.c.l.b16 %v1071
    %v1173 = vunpack.c.l.b16 %v1072
    %v1174 = vunpack.c.l.b16 %v1073
    %v1175 = vunpack.c.l.b16 %v1074
    %v1176 = vunpack.c.l.b16 %v1075
    %v1177 = vunpack.c.l.b16 %v1076
    %v1178 = vunpack.c.l.b16 %v1077
    %v1179 = vunpack.c.l.b16 %v1078
    %v1180 = vunpack.c.l.b16 %v1079
    %v1181 = vunpack.c.l.b16 %v1080
    %v1182 = vunpack.c.l.b16 %v1081
    %v1183 = vunpack.c.l.b16 %v1082
    %v1184 = vunpack.c.l.b16 %v1083
    %v1185 = vunpack.c.l.b16 %v1084
    %v1186 = vunpack.c.l.b16 %v1085
    %v1187 = vunpack.c.l.b16 %v1086
    %v1188 = vunpack.c.l.b16 %v1087
    %v1189 = vunpack.c.l.b16 %v1088
    %v1190 = vunpack.c.l.b16 %v1089
    %v1191 = vpack.c.b16 %v1144, %v1143
    %v1192 = vpack.c.b16 %v1146, %v1145
    %v1193 = vpack.c.b16 %v1148, %v1147
    %v1194 = vpack.c.b16 %v1150, %v1149
    %v1195 = vpack.c.b16 %v1152, %v1151
    %v1196 = vpack.c.b16 %v1154, %v1153
    %v1197 = vpack.c.b16 %v1156, %v1155
    %v1198 = vpack.c.b16 %v1158, %v1157
    %v1199 = vpack.c.b16 %v1160, %v1159
    %v1200 = vpack.c.b16 %v1162, %v1161
    %v1201 = vpack.c.b16 %v1164, %v1163
    %v1202 = vpack.c.b16 %v1166, %v1165
    %v1203 = vpack.c.b16 %v1168, %v1167
    %v1204 = vpack.c.b16 %v1170, %v1169
    %v1205 = vpack.c.b16 %v1172, %v1171
    %v1206 = vpack.c.b16 %v1174, %v1173
    %v1207 = vpack.c.b16 %v1176, %v1175
    %v1208 = vpack.c.b16 %v1178, %v1177
    %v1209 = vpack.c.b16 %v1180, %v1179
    %v1210 = vpack.c.b16 %v1182, %v1181
    %v1211 = vpack.c.b16 %v1184, %v1183
    %v1212 = vpack.c.b16 %v1186, %v1185
    %v1213 = vpack.c.b16 %v1188, %v1187
    %v1214 = vpack.c.b16 %v1190, %v1189
    %1239 = vmatprep.subr.bf16.mxu0 0
    %1240 = vmatpush1.bf16.msra.mxu0 %v1191
    %1241 = vmatprep.subr.bf16.mxu0 0
    %1242 = vmatpush1.bf16.msra.mxu0 %v1192
    %1243 = vmatprep.subr.bf16.mxu0 0
    %1244 = vmatpush1.bf16.msra.mxu0 %v1193
    %1245 = vmatprep.subr.bf16.mxu0 0
    %1246 = vmatpush1.bf16.msra.mxu0 %v1194
    %1247 = vmatprep.subr.bf16.mxu0 0
    %1248 = vmatpush1.bf16.msra.mxu0 %v1195
    %1249 = vmatprep.subr.bf16.mxu0 0
    %1250 = vmatpush1.bf16.msra.mxu0 %v1196
    %1251 = vmatprep.subr.bf16.mxu0 0
    %1252 = vmatpush1.bf16.msra.mxu0 %v1197
    %1253 = vmatprep.subr.bf16.mxu0 0
    %1254 = vmatpush1.bf16.msra.mxu0 %v1198
    %1255 = vmatprep.subr.bf16.mxu0 0
    %1256 = vmatpush1.bf16.msra.mxu0 %v1199
    %1257 = vmatprep.subr.bf16.mxu0 0
    %1258 = vmatpush1.bf16.msra.mxu0 %v1200
    %1259 = vmatprep.subr.bf16.mxu0 0
    %1260 = vmatpush1.bf16.msra.mxu0 %v1201
    %1261 = vmatprep.subr.bf16.mxu0 0
    %1262 = vmatpush1.bf16.msra.mxu0 %v1202
    %1263 = vmatprep.subr.bf16.mxu0 0
    %1264 = vmatpush1.bf16.msra.mxu0 %v1203
    %1265 = vmatprep.subr.bf16.mxu0 0
    %1266 = vmatpush1.bf16.msra.mxu0 %v1204
    %1267 = vmatprep.subr.bf16.mxu0 0
    %1268 = vmatpush1.bf16.msra.mxu0 %v1205
    %1269 = vmatprep.subr.bf16.mxu0 0
    %1270 = vmatpush1.bf16.msra.mxu0 %v1206
    %1271 = vmatprep.mubr.bf16.mxu0 %v1040
    %1272 = vmatmul.mubr.bf16.gmra.mrb[0].mxu0 %v1039
    %v1273 = vpop.f32.mrb[0].mxu0
    %v1274 = vadd.f32 %v1094, %v1273
    %v1275 = vpop.f32.mrb[0].mxu0
    %v1276 = vpop.f32.mrb[0].mxu0
    %v1277 = vadd.f32 %v1094, %v1276
    %v1278 = vpop.f32.mrb[0].mxu0
    %1279 = vdwg.mxu0
    %1280 = vmatprep.subr.bf16.mxu0 0
    %1281 = vmatpush1.bf16.msra.mxu0 %v1207
    %1282 = vmatprep.subr.bf16.mxu0 0
    %1283 = vmatpush1.bf16.msra.mxu0 %v1208
    %1284 = vmatprep.subr.bf16.mxu0 0
    %1285 = vmatpush1.bf16.msra.mxu0 %v1209
    %1286 = vmatprep.subr.bf16.mxu0 0
    %1287 = vmatpush1.bf16.msra.mxu0 %v1210
    %1288 = vmatprep.subr.bf16.mxu0 0
    %1289 = vmatpush1.bf16.msra.mxu0 %v1211
    %1290 = vmatprep.subr.bf16.mxu0 0
    %1291 = vmatpush1.bf16.msra.mxu0 %v1212
    %1292 = vmatprep.subr.bf16.mxu0 0
    %1293 = vmatpush1.bf16.msra.mxu0 %v1213
    %1294 = vmatprep.subr.bf16.mxu0 0
    %1295 = vmatpush1.bf16.msra.mxu0 %v1214
    %1296 = vmatprep.subr.bf16.mxu0 0
    %1297 = vmatpush1.bf16.msra.mxu0 0
    %1298 = vmatprep.subr.bf16.mxu0 0
    %1299 = vmatpush1.bf16.msra.mxu0 0
    %1300 = vmatprep.subr.bf16.mxu0 0
    %1301 = vmatpush1.bf16.msra.mxu0 0
    %1302 = vmatprep.subr.bf16.mxu0 0
    %1303 = vmatpush1.bf16.msra.mxu0 0
    %1304 = vmatprep.subr.bf16.mxu0 0
    %1305 = vmatpush1.bf16.msra.mxu0 0
    %1306 = vmatprep.subr.bf16.mxu0 0
    %1307 = vmatpush1.bf16.msra.mxu0 0
    %1308 = vmatprep.subr.bf16.mxu0 0
    %1309 = vmatpush1.bf16.msra.mxu0 0
    %1310 = vmatprep.subr.bf16.mxu0 0
    %1311 = vmatpush1.bf16.msra.mxu0 0
    %1312 = vmatprep.mubr.bf16.mxu0 0
    %1313 = vmatmul.mubr.bf16.gmra.mrb[0].mxu0 %v1041
    %v1314 = vpop.f32.mrb[0].mxu0
    %v1315 = vadd.f32 %v1274, %v1314
    %v1316 = vpop.f32.mrb[0].mxu0
    %v1317 = vpop.f32.mrb[0].mxu0
    %v1318 = vadd.f32 %v1277, %v1317
    %v1319 = vpop.f32.mrb[0].mxu0
    %1320 = vdwg.mxu0
    %v1321 = vmul.f32 %v1315, 0.5
    %v1322 = vmul.f32 %v1318, 0.5
    %v1323 = vmul.f32 %v1315, 0.70710677
    %v1324 = vmul.f32 %v1318, 0.70710677
    %vm1325 = vcmp.ge.f32.partialorder %v1323, 0.0
    %vm1326 = vcmp.ge.f32.partialorder %v1324, 0.0
    %v1327 = vsel %vm1325, 1.0, -1.0
    %v1328 = vsel %vm1326, 1.0, -1.0
    %v1329 = vand.u32 2147483647, %v1323
    %v1330 = vand.u32 2147483647, %v1324
    %v1331 = vmul.f32 %v1329, 0.3275911
    %v1332 = vmul.f32 %v1330, 0.3275911
    %v1333 = vadd.f32 %v1331, 1.0
    %v1334 = vadd.f32 %v1332, 1.0
    %v1335 = vrcp.pop %v1333
    %v1336 = vrcp.pop %v1334
    %v1337 = vmul.f32 %v1335, 1.0614054
    %v1338 = vmul.f32 %v1336, 1.0614054
    %v1339 = vadd.f32 %v1337, -1.4531521
    %v1340 = vadd.f32 %v1338, -1.4531521
    %v1341 = vmul.f32 %v1339, %v1335
    %v1342 = vmul.f32 %v1340, %v1336
    %v1343 = vadd.f32 %v1341, 1.4214138
    %v1344 = vadd.f32 %v1342, 1.4214138
    %v1345 = vmul.f32 %v1343, %v1335
    %v1346 = vmul.f32 %v1344, %v1336
    %v1347 = vadd.f32 %v1345, -0.28449672
    %v1348 = vadd.f32 %v1346, -0.28449672
    %v1349 = vmul.f32 %v1347, %v1335
    %v1350 = vmul.f32 %v1348, %v1336
    %v1351 = vadd.f32 %v1349, 0.2548296
    %v1352 = vadd.f32 %v1350, 0.2548296
    %v1353 = vmul.f32 %v1351, %v1335
    %v1354 = vmul.f32 %v1352, %v1336
    %v1355 = vsub.f32 0.0, %v1329
    %v1356 = vsub.f32 0.0, %v1330
    %v1357 = vmul.f32 %v1355, %v1329
    %v1358 = vmul.f32 %v1356, %v1330
    %v1359 = vmul.f32 %v1357, 1.442695
    %v1360 = vpow.pop %v1359
    %v1361 = vmul.f32 %v1358, 1.442695
    %v1362 = vpow.pop %v1361
    %v1363 = vmul.f32 %v1353, %v1360
    %v1364 = vmul.f32 %v1354, %v1362
    %v1365 = vsub.f32 1.0, %v1363
    %v1366 = vsub.f32 1.0, %v1364
    %v1367 = vmul.f32 %v1327, %v1365
    %v1368 = vmul.f32 %v1328, %v1366
    %v1369 = vadd.f32 %v1367, 1.0
    %v1370 = vadd.f32 %v1368, 1.0
    %v1371 = vmul.f32 %v1321, %v1369
    %v1372 = vmul.f32 %v1322, %v1370
    %v1375 = vcombine.high %v1371, %v1371
    %v1376 = vcombine.high %v1372, %v1372
    %v1379 = vrot.slane %v1371, 6
    %v1380 = vrot.slane %v1379, 4
    %v1381 = vrot.slane %v1375, 6
    %v1382 = vrot.slane %v1381, 4
    %v1383 = vrot.slane %v1372, 6
    %v1384 = vrot.slane %v1383, 4
    %v1385 = vrot.slane %v1376, 6
    %v1386 = vrot.slane %v1385, 4
    %v1391 = vadd.f32 %v1371, %v1380
    %v1392 = vadd.f32 %v1375, %v1382
    %v1393 = vadd.f32 %v1372, %v1384
    %v1394 = vadd.f32 %v1376, %v1386
    %v1395 = vmul.f32 %v1391, 0.5
    %v1396 = vmul.f32 %v1392, 0.5
    %v1397 = vmul.f32 %v1393, 0.5
    %v1398 = vmul.f32 %v1394, 0.5
    %v1403 = vcombine.low %v1395, %v1396
    %v1404 = vcombine.low %v1397, %v1398
    %v1406 = vunpack.c.l.s4 1983009808
    %v1407 = vunpack.c.0.s8 %v1406
    %v1408 = vlaneseq
    %v1409 = vshrl.u32 %v1408, 7
    %v1410 = vsub.s32 %v1407, %v1409
    %v1411 = vrot.slane %v1403, %v1410
    %v1413 = vunpack.c.l.s4 1983009808
    %v1414 = vunpack.c.0.s8 %v1413
    %v1415 = vlaneseq
    %v1416 = vshrl.u32 %v1415, 7
    %v1417 = vsub.s32 %v1414, %v1416
    %v1418 = vrot.slane %v1404, %v1417
    %v1419 = vcombine.low %v1411, %v1418
    %v1421 = vrot.slane %v1419, 6
    %v1422 = vsel %vm58, 0.0, %v1421
    %vm1423 = vcmp.ge.s32.totalorder %v38, 6
    %v1424 = vrot.slane %v1419, 2
    %v1425 = vsel %vm1423, 1, 0
    %vm1426 = vcmp.eq.s32.totalorder %v1425, 1
    %v1427 = vsel %vm1426, 0.0, %v1424
    %v1428 = vpack.c.bf16 %v1422, %v1422
    %v1429 = vpack.c.bf16 %v1419, %v1419
    %v1430 = vpack.c.bf16 %v1427, %v1427
    %v1431 = vld [vmem:[#allocation2 + $0x240] sm:$0xf]
    %v1432 = vld [vmem:[#allocation2 + $0x244] sm:$0xf]
    %v1433 = vld [vmem:[#allocation2 + $0x248] sm:$0xf]
    %v1434 = vld [vmem:[#allocation2 + $0x24c] sm:$0xf]
    %v1435 = vld [vmem:[#allocation2 + $0x250] sm:$0xf]
    %v1436 = vld [vmem:[#allocation2 + $0x254] sm:$0xf]
    %v1437 = vld [vmem:[#allocation2 + $0x258] sm:$0xf]
    %v1438 = vld [vmem:[#allocation2 + $0x25c] sm:$0xf]
    %v1439 = vld [vmem:[#allocation2 + $0x260] sm:$0xf]
    %v1440 = vld [vmem:[#allocation2 + $0x264] sm:$0xf]
    %v1441 = vld [vmem:[#allocation2 + $0x268] sm:$0xf]
    %v1442 = vld [vmem:[#allocation2 + $0x26c] sm:$0xf]
    %v1443 = vld [vmem:[#allocation2 + $0x270] sm:$0xf]
    %v1444 = vld [vmem:[#allocation2 + $0x274] sm:$0xf]
    %v1445 = vld [vmem:[#allocation2 + $0x278] sm:$0xf]
    %v1446 = vld [vmem:[#allocation2 + $0x27c] sm:$0xf]
    %v1447 = vld [vmem:[#allocation2 + $0x280] sm:$0xf]
    %v1448 = vld [vmem:[#allocation2 + $0x284] sm:$0xf]
    %v1449 = vld [vmem:[#allocation2 + $0x288] sm:$0xf]
    %v1450 = vld [vmem:[#allocation2 + $0x28c] sm:$0xf]
    %v1451 = vld [vmem:[#allocation2 + $0x290] sm:$0xf]
    %v1452 = vld [vmem:[#allocation2 + $0x294] sm:$0xf]
    %v1453 = vld [vmem:[#allocation2 + $0x298] sm:$0xf]
    %v1454 = vld [vmem:[#allocation2 + $0x29c] sm:$0xf]
    %v1455 = vld [vmem:[#allocation2 + $0x2a0] sm:$0xf]
    %v1456 = vld [vmem:[#allocation2 + $0x2a4] sm:$0xf]
    %v1457 = vld [vmem:[#allocation2 + $0x2a8] sm:$0xf]
    %v1458 = vld [vmem:[#allocation2 + $0x2ac] sm:$0xf]
    %v1459 = vld [vmem:[#allocation2 + $0x2b0] sm:$0xf]
    %v1460 = vld [vmem:[#allocation2 + $0x2b4] sm:$0xf]
    %v1461 = vld [vmem:[#allocation2 + $0x2b8] sm:$0xf]
    %v1462 = vld [vmem:[#allocation2 + $0x2bc] sm:$0xf]
    %v1463 = vld [vmem:[#allocation2 + $0x2c0] sm:$0xf]
    %v1464 = vld [vmem:[#allocation2 + $0x2c4] sm:$0xf]
    %v1465 = vld [vmem:[#allocation2 + $0x2c8] sm:$0xf]
    %v1466 = vld [vmem:[#allocation2 + $0x2cc] sm:$0xf]
    %v1467 = vld [vmem:[#allocation2 + $0x2d0] sm:$0xf]
    %v1468 = vld [vmem:[#allocation2 + $0x2d4] sm:$0xf]
    %v1469 = vld [vmem:[#allocation2 + $0x2d8] sm:$0xf]
    %v1470 = vld [vmem:[#allocation2 + $0x2dc] sm:$0xf]
    %v1471 = vld [vmem:[#allocation2 + $0x2e0] sm:$0xf]
    %v1472 = vld [vmem:[#allocation2 + $0x2e4] sm:$0xf]
    %v1473 = vld [vmem:[#allocation2 + $0x2e8] sm:$0xf]
    %v1474 = vld [vmem:[#allocation2 + $0x2ec] sm:$0xf]
    %v1475 = vld [vmem:[#allocation2 + $0x2f0] sm:$0xf]
    %v1476 = vld [vmem:[#allocation2 + $0x2f4] sm:$0xf]
    %v1477 = vld [vmem:[#allocation2 + $0x2f8] sm:$0xf]
    %v1478 = vld [vmem:[#allocation2 + $0x2fc] sm:$0xf]
    %v1479 = vld [vmem:[%s3 + $0x3] sm:$0x1]
    %v1480 = vlaneseq
    %v1481 = vshrl.u32 %v1480, 7
    %v1482 = vsub.s32 0, %v1481
    %v1483 = vrot.slane %v1479, %v1482
    %v1532 = vunpack.c.l.b16 %v1431
    %v1533 = vunpack.c.l.b16 %v1432
    %v1534 = vunpack.c.l.b16 %v1433
    %v1535 = vunpack.c.l.b16 %v1434
    %v1536 = vunpack.c.l.b16 %v1435
    %v1537 = vunpack.c.l.b16 %v1436
    %v1538 = vunpack.c.l.b16 %v1437
    %v1539 = vunpack.c.l.b16 %v1438
    %v1540 = vunpack.c.l.b16 %v1439
    %v1541 = vunpack.c.l.b16 %v1440
    %v1542 = vunpack.c.l.b16 %v1441
    %v1543 = vunpack.c.l.b16 %v1442
    %v1544 = vunpack.c.l.b16 %v1443
    %v1545 = vunpack.c.l.b16 %v1444
    %v1546 = vunpack.c.l.b16 %v1445
    %v1547 = vunpack.c.l.b16 %v1446
    %v1548 = vunpack.c.l.b16 %v1447
    %v1549 = vunpack.c.l.b16 %v1448
    %v1550 = vunpack.c.l.b16 %v1449
    %v1551 = vunpack.c.l.b16 %v1450
    %v1552 = vunpack.c.l.b16 %v1451
    %v1553 = vunpack.c.l.b16 %v1452
    %v1554 = vunpack.c.l.b16 %v1453
    %v1555 = vunpack.c.l.b16 %v1454
    %v1556 = vunpack.c.l.b16 %v1455
    %v1557 = vunpack.c.l.b16 %v1456
    %v1558 = vunpack.c.l.b16 %v1457
    %v1559 = vunpack.c.l.b16 %v1458
    %v1560 = vunpack.c.l.b16 %v1459
    %v1561 = vunpack.c.l.b16 %v1460
    %v1562 = vunpack.c.l.b16 %v1461
    %v1563 = vunpack.c.l.b16 %v1462
    %v1564 = vunpack.c.l.b16 %v1463
    %v1565 = vunpack.c.l.b16 %v1464
    %v1566 = vunpack.c.l.b16 %v1465
    %v1567 = vunpack.c.l.b16 %v1466
    %v1568 = vunpack.c.l.b16 %v1467
    %v1569 = vunpack.c.l.b16 %v1468
    %v1570 = vunpack.c.l.b16 %v1469
    %v1571 = vunpack.c.l.b16 %v1470
    %v1572 = vunpack.c.l.b16 %v1471
    %v1573 = vunpack.c.l.b16 %v1472
    %v1574 = vunpack.c.l.b16 %v1473
    %v1575 = vunpack.c.l.b16 %v1474
    %v1576 = vunpack.c.l.b16 %v1475
    %v1577 = vunpack.c.l.b16 %v1476
    %v1578 = vunpack.c.l.b16 %v1477
    %v1579 = vunpack.c.l.b16 %v1478
    %v1580 = vpack.c.b16 %v1533, %v1532
    %v1581 = vpack.c.b16 %v1535, %v1534
    %v1582 = vpack.c.b16 %v1537, %v1536
    %v1583 = vpack.c.b16 %v1539, %v1538
    %v1584 = vpack.c.b16 %v1541, %v1540
    %v1585 = vpack.c.b16 %v1543, %v1542
    %v1586 = vpack.c.b16 %v1545, %v1544
    %v1587 = vpack.c.b16 %v1547, %v1546
    %v1588 = vpack.c.b16 %v1549, %v1548
    %v1589 = vpack.c.b16 %v1551, %v1550
    %v1590 = vpack.c.b16 %v1553, %v1552
    %v1591 = vpack.c.b16 %v1555, %v1554
    %v1592 = vpack.c.b16 %v1557, %v1556
    %v1593 = vpack.c.b16 %v1559, %v1558
    %v1594 = vpack.c.b16 %v1561, %v1560
    %v1595 = vpack.c.b16 %v1563, %v1562
    %v1596 = vpack.c.b16 %v1565, %v1564
    %v1597 = vpack.c.b16 %v1567, %v1566
    %v1598 = vpack.c.b16 %v1569, %v1568
    %v1599 = vpack.c.b16 %v1571, %v1570
    %v1600 = vpack.c.b16 %v1573, %v1572
    %v1601 = vpack.c.b16 %v1575, %v1574
    %v1602 = vpack.c.b16 %v1577, %v1576
    %v1603 = vpack.c.b16 %v1579, %v1578
    %1628 = vmatprep.subr.bf16.mxu0 0
    %1629 = vmatpush1.bf16.msra.mxu0 %v1580
    %1630 = vmatprep.subr.bf16.mxu0 0
    %1631 = vmatpush1.bf16.msra.mxu0 %v1581
    %1632 = vmatprep.subr.bf16.mxu0 0
    %1633 = vmatpush1.bf16.msra.mxu0 %v1582
    %1634 = vmatprep.subr.bf16.mxu0 0
    %1635 = vmatpush1.bf16.msra.mxu0 %v1583
    %1636 = vmatprep.subr.bf16.mxu0 0
    %1637 = vmatpush1.bf16.msra.mxu0 %v1584
    %1638 = vmatprep.subr.bf16.mxu0 0
    %1639 = vmatpush1.bf16.msra.mxu0 %v1585
    %1640 = vmatprep.subr.bf16.mxu0 0
    %1641 = vmatpush1.bf16.msra.mxu0 %v1586
    %1642 = vmatprep.subr.bf16.mxu0 0
    %1643 = vmatpush1.bf16.msra.mxu0 %v1587
    %1644 = vmatprep.subr.bf16.mxu0 0
    %1645 = vmatpush1.bf16.msra.mxu0 %v1588
    %1646 = vmatprep.subr.bf16.mxu0 0
    %1647 = vmatpush1.bf16.msra.mxu0 %v1589
    %1648 = vmatprep.subr.bf16.mxu0 0
    %1649 = vmatpush1.bf16.msra.mxu0 %v1590
    %1650 = vmatprep.subr.bf16.mxu0 0
    %1651 = vmatpush1.bf16.msra.mxu0 %v1591
    %1652 = vmatprep.subr.bf16.mxu0 0
    %1653 = vmatpush1.bf16.msra.mxu0 %v1592
    %1654 = vmatprep.subr.bf16.mxu0 0
    %1655 = vmatpush1.bf16.msra.mxu0 %v1593
    %1656 = vmatprep.subr.bf16.mxu0 0
    %1657 = vmatpush1.bf16.msra.mxu0 %v1594
    %1658 = vmatprep.subr.bf16.mxu0 0
    %1659 = vmatpush1.bf16.msra.mxu0 %v1595
    %1660 = vmatprep.mubr.bf16.mxu0 %v1429
    %1661 = vmatmul.mubr.bf16.gmra.mrb[0].mxu0 %v1428
    %v1662 = vpop.f32.mrb[0].mxu0
    %v1663 = vadd.f32 %v1483, %v1662
    %v1664 = vpop.f32.mrb[0].mxu0
    %v1665 = vpop.f32.mrb[0].mxu0
    %v1666 = vpop.f32.mrb[0].mxu0
    %1667 = vdwg.mxu0
    %1668 = vmatprep.subr.bf16.mxu0 0
    %1669 = vmatpush1.bf16.msra.mxu0 %v1596
    %1670 = vmatprep.subr.bf16.mxu0 0
    %1671 = vmatpush1.bf16.msra.mxu0 %v1597
    %1672 = vmatprep.subr.bf16.mxu0 0
    %1673 = vmatpush1.bf16.msra.mxu0 %v1598
    %1674 = vmatprep.subr.bf16.mxu0 0
    %1675 = vmatpush1.bf16.msra.mxu0 %v1599
    %1676 = vmatprep.subr.bf16.mxu0 0
    %1677 = vmatpush1.bf16.msra.mxu0 %v1600
    %1678 = vmatprep.subr.bf16.mxu0 0
    %1679 = vmatpush1.bf16.msra.mxu0 %v1601
    %1680 = vmatprep.subr.bf16.mxu0 0
    %1681 = vmatpush1.bf16.msra.mxu0 %v1602
    %1682 = vmatprep.subr.bf16.mxu0 0
    %1683 = vmatpush1.bf16.msra.mxu0 %v1603
    %1684 = vmatprep.subr.bf16.mxu0 0
    %1685 = vmatpush1.bf16.msra.mxu0 0
    %1686 = vmatprep.subr.bf16.mxu0 0
    %1687 = vmatpush1.bf16.msra.mxu0 0
    %1688 = vmatprep.subr.bf16.mxu0 0
    %1689 = vmatpush1.bf16.msra.mxu0 0
    %1690 = vmatprep.subr.bf16.mxu0 0
    %1691 = vmatpush1.bf16.msra.mxu0 0
    %1692 = vmatprep.subr.bf16.mxu0 0
    %1693 = vmatpush1.bf16.msra.mxu0 0
    %1694 = vmatprep.subr.bf16.mxu0 0
    %1695 = vmatpush1.bf16.msra.mxu0 0
    %1696 = vmatprep.subr.bf16.mxu0 0
    %1697 = vmatpush1.bf16.msra.mxu0 0
    %1698 = vmatprep.subr.bf16.mxu0 0
    %1699 = vmatpush1.bf16.msra.mxu0 0
    %1700 = vmatprep.mubr.bf16.mxu0 0
    %1701 = vmatmul.mubr.bf16.gmra.mrb[0].mxu0 %v1430
    %v1702 = vpop.f32.mrb[0].mxu0
    %v1703 = vadd.f32 %v1663, %v1702
    %v1704 = vpop.f32.mrb[0].mxu0
    %v1705 = vpop.f32.mrb[0].mxu0
    %v1706 = vpop.f32.mrb[0].mxu0
    %1707 = vdwg.mxu0
    %v1708 = vmul.f32 %v1703, 0.5
    %v1709 = vmul.f32 %v1703, 0.70710677
    %vm1710 = vcmp.ge.f32.partialorder %v1709, 0.0
    %v1711 = vsel %vm1710, 1.0, -1.0
    %v1712 = vand.u32 2147483647, %v1709
    %v1713 = vmul.f32 %v1712, 0.3275911
    %v1714 = vadd.f32 %v1713, 1.0
    %v1715 = vrcp.pop %v1714
    %v1716 = vmul.f32 %v1715, 1.0614054
    %v1717 = vadd.f32 %v1716, -1.4531521
    %v1718 = vmul.f32 %v1717, %v1715
    %v1719 = vadd.f32 %v1718, 1.4214138
    %v1720 = vmul.f32 %v1719, %v1715
    %v1721 = vadd.f32 %v1720, -0.28449672
    %v1722 = vmul.f32 %v1721, %v1715
    %v1723 = vadd.f32 %v1722, 0.2548296
    %v1724 = vmul.f32 %v1723, %v1715
    %v1725 = vsub.f32 0.0, %v1712
    %v1726 = vmul.f32 %v1725, %v1712
    %v1727 = vmul.f32 %v1726, 1.442695
    %v1728 = vpow.pop %v1727
    %v1729 = vmul.f32 %v1724, %v1728
    %v1730 = vsub.f32 1.0, %v1729
    %v1731 = vmul.f32 %v1711, %v1730
    %v1732 = vadd.f32 %v1731, 1.0
    %v1733 = vmul.f32 %v1708, %v1732
    %v1735 = vcombine.high %v1733, %v1733
    %v1737 = vrot.slane %v1733, 6
    %v1738 = vrot.slane %v1737, 4
    %v1739 = vrot.slane %v1735, 6
    %v1740 = vrot.slane %v1739, 4
    %v1743 = vadd.f32 %v1733, %v1738
    %v1744 = vadd.f32 %v1735, %v1740
    %v1745 = vmul.f32 %v1743, 0.5
    %v1746 = vmul.f32 %v1744, 0.5
    %v1749 = vcombine.low %v1745, %v1746
    %v1751 = vunpack.c.l.s4 1983009808
    %v1752 = vunpack.c.0.s8 %v1751
    %v1753 = vlaneseq
    %v1754 = vshrl.u32 %v1753, 7
    %v1755 = vsub.s32 %v1752, %v1754
    %v1756 = vrot.slane %v1749, %v1755
    %v1758 = vpack.c.bf16 %v1756, %v1756
    %v1759 = vld [vmem:[#allocation2 + $0x300] sm:$0xf]
    %v1760 = vld [vmem:[#allocation2 + $0x304] sm:$0xf]
    %v1761 = vld [vmem:[#allocation2 + $0x308] sm:$0xf]
    %v1762 = vld [vmem:[#allocation2 + $0x30c] sm:$0xf]
    %v1763 = vld [vmem:[#allocation2 + $0x310] sm:$0xf]
    %v1764 = vld [vmem:[#allocation2 + $0x314] sm:$0xf]
    %v1765 = vld [vmem:[#allocation2 + $0x318] sm:$0xf]
    %v1766 = vld [vmem:[#allocation2 + $0x31c] sm:$0xf]
    %v1767 = vld [vmem:[#allocation2 + $0x320] sm:$0xf]
    %v1768 = vld [vmem:[#allocation2 + $0x324] sm:$0xf]
    %v1769 = vld [vmem:[#allocation2 + $0x328] sm:$0xf]
    %v1770 = vld [vmem:[#allocation2 + $0x32c] sm:$0xf]
    %v1771 = vld [vmem:[#allocation2 + $0x330] sm:$0xf]
    %v1772 = vld [vmem:[#allocation2 + $0x334] sm:$0xf]
    %v1773 = vld [vmem:[#allocation2 + $0x338] sm:$0xf]
    %v1774 = vld [vmem:[#allocation2 + $0x33c] sm:$0xf]
    %v1775 = vld [vmem:[%s3 + $0x4] sm:$0x1]
    %v1776 = vlaneseq
    %v1777 = vshrl.u32 %v1776, 7
    %v1778 = vsub.s32 0, %v1777
    %v1779 = vrot.slane %v1775, %v1778
    %v1796 = vunpack.c.l.b16 %v1759
    %v1797 = vunpack.c.l.b16 %v1760
    %v1798 = vunpack.c.l.b16 %v1761
    %v1799 = vunpack.c.l.b16 %v1762
    %v1800 = vunpack.c.l.b16 %v1763
    %v1801 = vunpack.c.l.b16 %v1764
    %v1802 = vunpack.c.l.b16 %v1765
    %v1803 = vunpack.c.l.b16 %v1766
    %v1804 = vunpack.c.l.b16 %v1767
    %v1805 = vunpack.c.l.b16 %v1768
    %v1806 = vunpack.c.l.b16 %v1769
    %v1807 = vunpack.c.l.b16 %v1770
    %v1808 = vunpack.c.l.b16 %v1771
    %v1809 = vunpack.c.l.b16 %v1772
    %v1810 = vunpack.c.l.b16 %v1773
    %v1811 = vunpack.c.l.b16 %v1774
    %v1812 = vpack.c.b16 %v1797, %v1796
    %v1813 = vpack.c.b16 %v1799, %v1798
    %v1814 = vpack.c.b16 %v1801, %v1800
    %v1815 = vpack.c.b16 %v1803, %v1802
    %v1816 = vpack.c.b16 %v1805, %v1804
    %v1817 = vpack.c.b16 %v1807, %v1806
    %v1818 = vpack.c.b16 %v1809, %v1808
    %v1819 = vpack.c.b16 %v1811, %v1810
    %1828 = vmatprep.subr.bf16.mxu0 0
    %1829 = vmatpush1.bf16.msra.mxu0 %v1812
    %1830 = vmatprep.subr.bf16.mxu0 0
    %1831 = vmatpush1.bf16.msra.mxu0 %v1813
    %1832 = vmatprep.subr.bf16.mxu0 0
    %1833 = vmatpush1.bf16.msra.mxu0 %v1814
    %1834 = vmatprep.subr.bf16.mxu0 0
    %1835 = vmatpush1.bf16.msra.mxu0 %v1815
    %1836 = vmatprep.subr.bf16.mxu0 0
    %1837 = vmatpush1.bf16.msra.mxu0 %v1816
    %1838 = vmatprep.subr.bf16.mxu0 0
    %1839 = vmatpush1.bf16.msra.mxu0 %v1817
    %1840 = vmatprep.subr.bf16.mxu0 0
    %1841 = vmatpush1.bf16.msra.mxu0 %v1818
    %1842 = vmatprep.subr.bf16.mxu0 0
    %1843 = vmatpush1.bf16.msra.mxu0 %v1819
    %1844 = vmatprep.subr.bf16.mxu0 0
    %1845 = vmatpush1.bf16.msra.mxu0 0
    %1846 = vmatprep.subr.bf16.mxu0 0
    %1847 = vmatpush1.bf16.msra.mxu0 0
    %1848 = vmatprep.subr.bf16.mxu0 0
    %1849 = vmatpush1.bf16.msra.mxu0 0
    %1850 = vmatprep.subr.bf16.mxu0 0
    %1851 = vmatpush1.bf16.msra.mxu0 0
    %1852 = vmatprep.subr.bf16.mxu0 0
    %1853 = vmatpush1.bf16.msra.mxu0 0
    %1854 = vmatprep.subr.bf16.mxu0 0
    %1855 = vmatpush1.bf16.msra.mxu0 0
    %1856 = vmatprep.subr.bf16.mxu0 0
    %1857 = vmatpush1.bf16.msra.mxu0 0
    %1858 = vmatprep.subr.bf16.mxu0 0
    %1859 = vmatpush1.bf16.msra.mxu0 0
    %1860 = vmatprep.mubr.bf16.mxu0 0
    %1861 = vmatmul.mubr.bf16.gmra.mrb[0].mxu0 %v1758
    %v1862 = vpop.f32.mrb[0].mxu0
    %v1863 = vadd.f32 %v1779, %v1862
    %v1864 = vpop.f32.mrb[0].mxu0
    %v1865 = vpop.f32.mrb[0].mxu0
    %v1866 = vpop.f32.mrb[0].mxu0
    %1867 = vdwg.mxu0
    %v1868 = vld [vmem:[#allocation2 + $0x340] sm:$0xf]
    %v1869 = vld [vmem:[#allocation2 + $0x344] sm:$0xf]
    %v1870 = vld [vmem:[#allocation2 + $0x348] sm:$0xf]
    %v1871 = vld [vmem:[#allocation2 + $0x34c] sm:$0xf]
    %v1872 = vld [vmem:[#allocation2 + $0x350] sm:$0xf]
    %v1873 = vld [vmem:[#allocation2 + $0x354] sm:$0xf]
    %v1874 = vld [vmem:[#allocation2 + $0x358] sm:$0xf]
    %v1875 = vld [vmem:[#allocation2 + $0x35c] sm:$0xf]
    %v1876 = vld [vmem:[#allocation2 + $0x360] sm:$0xf]
    %v1877 = vld [vmem:[#allocation2 + $0x364] sm:$0xf]
    %v1878 = vld [vmem:[#allocation2 + $0x368] sm:$0xf]
    %v1879 = vld [vmem:[#allocation2 + $0x36c] sm:$0xf]
    %v1880 = vld [vmem:[#allocation2 + $0x370] sm:$0xf]
    %v1881 = vld [vmem:[#allocation2 + $0x374] sm:$0xf]
    %v1882 = vld [vmem:[#allocation2 + $0x378] sm:$0xf]
    %v1883 = vld [vmem:[#allocation2 + $0x37c] sm:$0xf]
    %v1884 = vld [vmem:[%s3 + $0x5] sm:$0x1]
    %v1885 = vlaneseq
    %v1886 = vshrl.u32 %v1885, 7
    %v1887 = vsub.s32 0, %v1886
    %v1888 = vrot.slane %v1884, %v1887
    %v1905 = vunpack.c.l.b16 %v1868
    %v1906 = vunpack.c.l.b16 %v1869
    %v1907 = vunpack.c.l.b16 %v1870
    %v1908 = vunpack.c.l.b16 %v1871
    %v1909 = vunpack.c.l.b16 %v1872
    %v1910 = vunpack.c.l.b16 %v1873
    %v1911 = vunpack.c.l.b16 %v1874
    %v1912 = vunpack.c.l.b16 %v1875
    %v1913 = vunpack.c.l.b16 %v1876
    %v1914 = vunpack.c.l.b16 %v1877
    %v1915 = vunpack.c.l.b16 %v1878
    %v1916 = vunpack.c.l.b16 %v1879
    %v1917 = vunpack.c.l.b16 %v1880
    %v1918 = vunpack.c.l.b16 %v1881
    %v1919 = vunpack.c.l.b16 %v1882
    %v1920 = vunpack.c.l.b16 %v1883
    %v1921 = vpack.c.b16 %v1906, %v1905
    %v1922 = vpack.c.b16 %v1908, %v1907
    %v1923 = vpack.c.b16 %v1910, %v1909
    %v1924 = vpack.c.b16 %v1912, %v1911
    %v1925 = vpack.c.b16 %v1914, %v1913
    %v1926 = vpack.c.b16 %v1916, %v1915
    %v1927 = vpack.c.b16 %v1918, %v1917
    %v1928 = vpack.c.b16 %v1920, %v1919
    %1937 = vmatprep.subr.bf16.mxu0 0
    %1938 = vmatpush1.bf16.msra.mxu0 %v1921
    %1939 = vmatprep.subr.bf16.mxu0 0
    %1940 = vmatpush1.bf16.msra.mxu0 %v1922
    %1941 = vmatprep.subr.bf16.mxu0 0
    %1942 = vmatpush1.bf16.msra.mxu0 %v1923
    %1943 = vmatprep.subr.bf16.mxu0 0
    %1944 = vmatpush1.bf16.msra.mxu0 %v1924
    %1945 = vmatprep.subr.bf16.mxu0 0
    %1946 = vmatpush1.bf16.msra.mxu0 %v1925
    %1947 = vmatprep.subr.bf16.mxu0 0
    %1948 = vmatpush1.bf16.msra.mxu0 %v1926
    %1949 = vmatprep.subr.bf16.mxu0 0
    %1950 = vmatpush1.bf16.msra.mxu0 %v1927
    %1951 = vmatprep.subr.bf16.mxu0 0
    %1952 = vmatpush1.bf16.msra.mxu0 %v1928
    %1953 = vmatprep.subr.bf16.mxu0 0
    %1954 = vmatpush1.bf16.msra.mxu0 0
    %1955 = vmatprep.subr.bf16.mxu0 0
    %1956 = vmatpush1.bf16.msra.mxu0 0
    %1957 = vmatprep.subr.bf16.mxu0 0
    %1958 = vmatpush1.bf16.msra.mxu0 0
    %1959 = vmatprep.subr.bf16.mxu0 0
    %1960 = vmatpush1.bf16.msra.mxu0 0
    %1961 = vmatprep.subr.bf16.mxu0 0
    %1962 = vmatpush1.bf16.msra.mxu0 0
    %1963 = vmatprep.subr.bf16.mxu0 0
    %1964 = vmatpush1.bf16.msra.mxu0 0
    %1965 = vmatprep.subr.bf16.mxu0 0
    %1966 = vmatpush1.bf16.msra.mxu0 0
    %1967 = vmatprep.subr.bf16.mxu0 0
    %1968 = vmatpush1.bf16.msra.mxu0 0
    %1969 = vmatprep.mubr.bf16.mxu0 0
    %1970 = vmatmul.mubr.bf16.gmra.mrb[0].mxu0 %v1758
    %v1971 = vpop.f32.mrb[0].mxu0
    %v1972 = vadd.f32 %v1888, %v1971
    %v1973 = vpop.f32.mrb[0].mxu0
    %v1974 = vpop.f32.mrb[0].mxu0
    %v1975 = vpop.f32.mrb[0].mxu0
    %1976 = vdwg.mxu0
    %v1977 = vld [vmem:[#allocation2 + $0x380] sm:$0xf]
    %v1978 = vld [vmem:[#allocation2 + $0x384] sm:$0xf]
    %v1979 = vld [vmem:[#allocation2 + $0x388] sm:$0xf]
    %v1980 = vld [vmem:[#allocation2 + $0x38c] sm:$0xf]
    %v1981 = vld [vmem:[#allocation2 + $0x390] sm:$0xf]
    %v1982 = vld [vmem:[#allocation2 + $0x394] sm:$0xf]
    %v1983 = vld [vmem:[#allocation2 + $0x398] sm:$0xf]
    %v1984 = vld [vmem:[#allocation2 + $0x39c] sm:$0xf]
    %v1985 = vld [vmem:[#allocation2 + $0x3a0] sm:$0xf]
    %v1986 = vld [vmem:[#allocation2 + $0x3a4] sm:$0xf]
    %v1987 = vld [vmem:[#allocation2 + $0x3a8] sm:$0xf]
    %v1988 = vld [vmem:[#allocation2 + $0x3ac] sm:$0xf]
    %v1989 = vld [vmem:[#allocation2 + $0x3b0] sm:$0xf]
    %v1990 = vld [vmem:[#allocation2 + $0x3b4] sm:$0xf]
    %v1991 = vld [vmem:[#allocation2 + $0x3b8] sm:$0xf]
    %v1992 = vld [vmem:[#allocation2 + $0x3bc] sm:$0xf]
    %v1993 = vld [vmem:[%s3 + $0x6] sm:$0x1]
    %v1994 = vlaneseq
    %v1995 = vshrl.u32 %v1994, 7
    %v1996 = vsub.s32 0, %v1995
    %v1997 = vrot.slane %v1993, %v1996
    %v2014 = vunpack.c.l.b16 %v1977
    %v2015 = vunpack.c.l.b16 %v1978
    %v2016 = vunpack.c.l.b16 %v1979
    %v2017 = vunpack.c.l.b16 %v1980
    %v2018 = vunpack.c.l.b16 %v1981
    %v2019 = vunpack.c.l.b16 %v1982
    %v2020 = vunpack.c.l.b16 %v1983
    %v2021 = vunpack.c.l.b16 %v1984
    %v2022 = vunpack.c.l.b16 %v1985
    %v2023 = vunpack.c.l.b16 %v1986
    %v2024 = vunpack.c.l.b16 %v1987
    %v2025 = vunpack.c.l.b16 %v1988
    %v2026 = vunpack.c.l.b16 %v1989
    %v2027 = vunpack.c.l.b16 %v1990
    %v2028 = vunpack.c.l.b16 %v1991
    %v2029 = vunpack.c.l.b16 %v1992
    %v2030 = vpack.c.b16 %v2015, %v2014
    %v2031 = vpack.c.b16 %v2017, %v2016
    %v2032 = vpack.c.b16 %v2019, %v2018
    %v2033 = vpack.c.b16 %v2021, %v2020
    %v2034 = vpack.c.b16 %v2023, %v2022
    %v2035 = vpack.c.b16 %v2025, %v2024
    %v2036 = vpack.c.b16 %v2027, %v2026
    %v2037 = vpack.c.b16 %v2029, %v2028
    %2046 = vmatprep.subr.bf16.mxu0 0
    %2047 = vmatpush1.bf16.msra.mxu0 %v2030
    %2048 = vmatprep.subr.bf16.mxu0 0
    %2049 = vmatpush1.bf16.msra.mxu0 %v2031
    %2050 = vmatprep.subr.bf16.mxu0 0
    %2051 = vmatpush1.bf16.msra.mxu0 %v2032
    %2052 = vmatprep.subr.bf16.mxu0 0
    %2053 = vmatpush1.bf16.msra.mxu0 %v2033
    %2054 = vmatprep.subr.bf16.mxu0 0
    %2055 = vmatpush1.bf16.msra.mxu0 %v2034
    %2056 = vmatprep.subr.bf16.mxu0 0
    %2057 = vmatpush1.bf16.msra.mxu0 %v2035
    %2058 = vmatprep.subr.bf16.mxu0 0
    %2059 = vmatpush1.bf16.msra.mxu0 %v2036
    %2060 = vmatprep.subr.bf16.mxu0 0
    %2061 = vmatpush1.bf16.msra.mxu0 %v2037
    %2062 = vmatprep.subr.bf16.mxu0 0
    %2063 = vmatpush1.bf16.msra.mxu0 0
    %2064 = vmatprep.subr.bf16.mxu0 0
    %2065 = vmatpush1.bf16.msra.mxu0 0
    %2066 = vmatprep.subr.bf16.mxu0 0
    %2067 = vmatpush1.bf16.msra.mxu0 0
    %2068 = vmatprep.subr.bf16.mxu0 0
    %2069 = vmatpush1.bf16.msra.mxu0 0
    %2070 = vmatprep.subr.bf16.mxu0 0
    %2071 = vmatpush1.bf16.msra.mxu0 0
    %2072 = vmatprep.subr.bf16.mxu0 0
    %2073 = vmatpush1.bf16.msra.mxu0 0
    %2074 = vmatprep.subr.bf16.mxu0 0
    %2075 = vmatpush1.bf16.msra.mxu0 0
    %2076 = vmatprep.subr.bf16.mxu0 0
    %2077 = vmatpush1.bf16.msra.mxu0 0
    %2078 = vmatprep.mubr.bf16.mxu0 0
    %2079 = vmatmul.mubr.bf16.gmra.mrb[0].mxu0 %v1758
    %v2080 = vpop.f32.mrb[0].mxu0
    %v2081 = vadd.f32 %v1997, %v2080
    %v2082 = vpop.f32.mrb[0].mxu0
    %v2083 = vpop.f32.mrb[0].mxu0
    %v2084 = vpop.f32.mrb[0].mxu0
    %2085 = vdwg.mxu0
    %v2086 = vld [vmem:[#allocation2 + $0x3c0] sm:$0xf]
    %v2087 = vld [vmem:[#allocation2 + $0x3c4] sm:$0xf]
    %v2088 = vld [vmem:[#allocation2 + $0x3c8] sm:$0xf]
    %v2089 = vld [vmem:[#allocation2 + $0x3cc] sm:$0xf]
    %v2090 = vld [vmem:[#allocation2 + $0x3d0] sm:$0xf]
    %v2091 = vld [vmem:[#allocation2 + $0x3d4] sm:$0xf]
    %v2092 = vld [vmem:[#allocation2 + $0x3d8] sm:$0xf]
    %v2093 = vld [vmem:[#allocation2 + $0x3dc] sm:$0xf]
    %v2094 = vld [vmem:[#allocation2 + $0x3e0] sm:$0xf]
    %v2095 = vld [vmem:[#allocation2 + $0x3e4] sm:$0xf]
    %v2096 = vld [vmem:[#allocation2 + $0x3e8] sm:$0xf]
    %v2097 = vld [vmem:[#allocation2 + $0x3ec] sm:$0xf]
    %v2098 = vld [vmem:[#allocation2 + $0x3f0] sm:$0xf]
    %v2099 = vld [vmem:[#allocation2 + $0x3f4] sm:$0xf]
    %v2100 = vld [vmem:[#allocation2 + $0x3f8] sm:$0xf]
    %v2101 = vld [vmem:[#allocation2 + $0x3fc] sm:$0xf]
    %v2102 = vld [vmem:[%s3 + $0x7] sm:$0x1]
    %v2103 = vlaneseq
    %v2104 = vshrl.u32 %v2103, 7
    %v2105 = vsub.s32 0, %v2104
    %v2106 = vrot.slane %v2102, %v2105
    %v2123 = vunpack.c.l.b16 %v2086
    %v2124 = vunpack.c.l.b16 %v2087
    %v2125 = vunpack.c.l.b16 %v2088
    %v2126 = vunpack.c.l.b16 %v2089
    %v2127 = vunpack.c.l.b16 %v2090
    %v2128 = vunpack.c.l.b16 %v2091
    %v2129 = vunpack.c.l.b16 %v2092
    %v2130 = vunpack.c.l.b16 %v2093
    %v2131 = vunpack.c.l.b16 %v2094
    %v2132 = vunpack.c.l.b16 %v2095
    %v2133 = vunpack.c.l.b16 %v2096
    %v2134 = vunpack.c.l.b16 %v2097
    %v2135 = vunpack.c.l.b16 %v2098
    %v2136 = vunpack.c.l.b16 %v2099
    %v2137 = vunpack.c.l.b16 %v2100
    %v2138 = vunpack.c.l.b16 %v2101
    %v2139 = vpack.c.b16 %v2124, %v2123
    %v2140 = vpack.c.b16 %v2126, %v2125
    %v2141 = vpack.c.b16 %v2128, %v2127
    %v2142 = vpack.c.b16 %v2130, %v2129
    %v2143 = vpack.c.b16 %v2132, %v2131
    %v2144 = vpack.c.b16 %v2134, %v2133
    %v2145 = vpack.c.b16 %v2136, %v2135
    %v2146 = vpack.c.b16 %v2138, %v2137
    %2155 = vmatprep.subr.bf16.mxu0 0
    %2156 = vmatpush1.bf16.msra.mxu0 %v2139
    %2157 = vmatprep.subr.bf16.mxu0 0
    %2158 = vmatpush1.bf16.msra.mxu0 %v2140
    %2159 = vmatprep.subr.bf16.mxu0 0
    %2160 = vmatpush1.bf16.msra.mxu0 %v2141
    %2161 = vmatprep.subr.bf16.mxu0 0
    %2162 = vmatpush1.bf16.msra.mxu0 %v2142
    %2163 = vmatprep.subr.bf16.mxu0 0
    %2164 = vmatpush1.bf16.msra.mxu0 %v2143
    %2165 = vmatprep.subr.bf16.mxu0 0
    %2166 = vmatpush1.bf16.msra.mxu0 %v2144
    %2167 = vmatprep.subr.bf16.mxu0 0
    %2168 = vmatpush1.bf16.msra.mxu0 %v2145
    %2169 = vmatprep.subr.bf16.mxu0 0
    %2170 = vmatpush1.bf16.msra.mxu0 %v2146
    %2171 = vmatprep.subr.bf16.mxu0 0
    %2172 = vmatpush1.bf16.msra.mxu0 0
    %2173 = vmatprep.subr.bf16.mxu0 0
    %2174 = vmatpush1.bf16.msra.mxu0 0
    %2175 = vmatprep.subr.bf16.mxu0 0
    %2176 = vmatpush1.bf16.msra.mxu0 0
    %2177 = vmatprep.subr.bf16.mxu0 0
    %2178 = vmatpush1.bf16.msra.mxu0 0
    %2179 = vmatprep.subr.bf16.mxu0 0
    %2180 = vmatpush1.bf16.msra.mxu0 0
    %2181 = vmatprep.subr.bf16.mxu0 0
    %2182 = vmatpush1.bf16.msra.mxu0 0
    %2183 = vmatprep.subr.bf16.mxu0 0
    %2184 = vmatpush1.bf16.msra.mxu0 0
    %2185 = vmatprep.subr.bf16.mxu0 0
    %2186 = vmatpush1.bf16.msra.mxu0 0
    %2187 = vmatprep.mubr.bf16.mxu0 0
    %2188 = vmatmul.mubr.bf16.gmra.mrb[0].mxu0 %v1758
    %v2189 = vpop.f32.mrb[0].mxu0
    %v2190 = vadd.f32 %v2106, %v2189
    %v2191 = vpop.f32.mrb[0].mxu0
    %v2192 = vpop.f32.mrb[0].mxu0
    %v2193 = vpop.f32.mrb[0].mxu0
    %2194 = vdwg.mxu0
    %v2195 = vld [vmem:[#allocation2 + $0x400] sm:$0xf]
    %v2196 = vld [vmem:[#allocation2 + $0x404] sm:$0xf]
    %v2197 = vld [vmem:[#allocation2 + $0x408] sm:$0xf]
    %v2198 = vld [vmem:[#allocation2 + $0x40c] sm:$0xf]
    %v2199 = vld [vmem:[#allocation2 + $0x410] sm:$0xf]
    %v2200 = vld [vmem:[#allocation2 + $0x414] sm:$0xf]
    %v2201 = vld [vmem:[#allocation2 + $0x418] sm:$0xf]
    %v2202 = vld [vmem:[#allocation2 + $0x41c] sm:$0xf]
    %v2203 = vld [vmem:[#allocation2 + $0x420] sm:$0xf]
    %v2204 = vld [vmem:[#allocation2 + $0x424] sm:$0xf]
    %v2205 = vld [vmem:[#allocation2 + $0x428] sm:$0xf]
    %v2206 = vld [vmem:[#allocation2 + $0x42c] sm:$0xf]
    %v2207 = vld [vmem:[#allocation2 + $0x430] sm:$0xf]
    %v2208 = vld [vmem:[#allocation2 + $0x434] sm:$0xf]
    %v2209 = vld [vmem:[#allocation2 + $0x438] sm:$0xf]
    %v2210 = vld [vmem:[#allocation2 + $0x43c] sm:$0xf]
    %v2211 = vld [vmem:[%s3 + $0x8] sm:$0x1]
    %v2212 = vlaneseq
    %v2213 = vshrl.u32 %v2212, 7
    %v2214 = vsub.s32 0, %v2213
    %v2215 = vrot.slane %v2211, %v2214
    %v2232 = vunpack.c.l.b16 %v2195
    %v2233 = vunpack.c.l.b16 %v2196
    %v2234 = vunpack.c.l.b16 %v2197
    %v2235 = vunpack.c.l.b16 %v2198
    %v2236 = vunpack.c.l.b16 %v2199
    %v2237 = vunpack.c.l.b16 %v2200
    %v2238 = vunpack.c.l.b16 %v2201
    %v2239 = vunpack.c.l.b16 %v2202
    %v2240 = vunpack.c.l.b16 %v2203
    %v2241 = vunpack.c.l.b16 %v2204
    %v2242 = vunpack.c.l.b16 %v2205
    %v2243 = vunpack.c.l.b16 %v2206
    %v2244 = vunpack.c.l.b16 %v2207
    %v2245 = vunpack.c.l.b16 %v2208
    %v2246 = vunpack.c.l.b16 %v2209
    %v2247 = vunpack.c.l.b16 %v2210
    %v2248 = vpack.c.b16 %v2233, %v2232
    %v2249 = vpack.c.b16 %v2235, %v2234
    %v2250 = vpack.c.b16 %v2237, %v2236
    %v2251 = vpack.c.b16 %v2239, %v2238
    %v2252 = vpack.c.b16 %v2241, %v2240
    %v2253 = vpack.c.b16 %v2243, %v2242
    %v2254 = vpack.c.b16 %v2245, %v2244
    %v2255 = vpack.c.b16 %v2247, %v2246
    %2264 = vmatprep.subr.bf16.mxu0 0
    %2265 = vmatpush1.bf16.msra.mxu0 %v2248
    %2266 = vmatprep.subr.bf16.mxu0 0
    %2267 = vmatpush1.bf16.msra.mxu0 %v2249
    %2268 = vmatprep.subr.bf16.mxu0 0
    %2269 = vmatpush1.bf16.msra.mxu0 %v2250
    %2270 = vmatprep.subr.bf16.mxu0 0
    %2271 = vmatpush1.bf16.msra.mxu0 %v2251
    %2272 = vmatprep.subr.bf16.mxu0 0
    %2273 = vmatpush1.bf16.msra.mxu0 %v2252
    %2274 = vmatprep.subr.bf16.mxu0 0
    %2275 = vmatpush1.bf16.msra.mxu0 %v2253
    %2276 = vmatprep.subr.bf16.mxu0 0
    %2277 = vmatpush1.bf16.msra.mxu0 %v2254
    %2278 = vmatprep.subr.bf16.mxu0 0
    %2279 = vmatpush1.bf16.msra.mxu0 %v2255
    %2280 = vmatprep.subr.bf16.mxu0 0
    %2281 = vmatpush1.bf16.msra.mxu0 0
    %2282 = vmatprep.subr.bf16.mxu0 0
    %2283 = vmatpush1.bf16.msra.mxu0 0
    %2284 = vmatprep.subr.bf16.mxu0 0
    %2285 = vmatpush1.bf16.msra.mxu0 0
    %2286 = vmatprep.subr.bf16.mxu0 0
    %2287 = vmatpush1.bf16.msra.mxu0 0
    %2288 = vmatprep.subr.bf16.mxu0 0
    %2289 = vmatpush1.bf16.msra.mxu0 0
    %2290 = vmatprep.subr.bf16.mxu0 0
    %2291 = vmatpush1.bf16.msra.mxu0 0
    %2292 = vmatprep.subr.bf16.mxu0 0
    %2293 = vmatpush1.bf16.msra.mxu0 0
    %2294 = vmatprep.subr.bf16.mxu0 0
    %2295 = vmatpush1.bf16.msra.mxu0 0
    %2296 = vmatprep.mubr.bf16.mxu0 0
    %2297 = vmatmul.mubr.bf16.gmra.mrb[0].mxu0 %v1758
    %v2298 = vpop.f32.mrb[0].mxu0
    %v2299 = vadd.f32 %v2215, %v2298
    %v2300 = vpop.f32.mrb[0].mxu0
    %v2301 = vpop.f32.mrb[0].mxu0
    %v2302 = vpop.f32.mrb[0].mxu0
    %2303 = vdwg.mxu0
    %v2304 = vld [vmem:[#allocation2 + $0x440] sm:$0xf]
    %v2305 = vld [vmem:[#allocation2 + $0x444] sm:$0xf]
    %v2306 = vld [vmem:[#allocation2 + $0x448] sm:$0xf]
    %v2307 = vld [vmem:[#allocation2 + $0x44c] sm:$0xf]
    %v2308 = vld [vmem:[#allocation2 + $0x450] sm:$0xf]
    %v2309 = vld [vmem:[#allocation2 + $0x454] sm:$0xf]
    %v2310 = vld [vmem:[#allocation2 + $0x458] sm:$0xf]
    %v2311 = vld [vmem:[#allocation2 + $0x45c] sm:$0xf]
    %v2312 = vld [vmem:[#allocation2 + $0x460] sm:$0xf]
    %v2313 = vld [vmem:[#allocation2 + $0x464] sm:$0xf]
    %v2314 = vld [vmem:[#allocation2 + $0x468] sm:$0xf]
    %v2315 = vld [vmem:[#allocation2 + $0x46c] sm:$0xf]
    %v2316 = vld [vmem:[#allocation2 + $0x470] sm:$0xf]
    %v2317 = vld [vmem:[#allocation2 + $0x474] sm:$0xf]
    %v2318 = vld [vmem:[#allocation2 + $0x478] sm:$0xf]
    %v2319 = vld [vmem:[#allocation2 + $0x47c] sm:$0xf]
    %v2320 = vld [vmem:[%s3 + $0x9] sm:$0x1]
    %v2321 = vlaneseq
    %v2322 = vshrl.u32 %v2321, 7
    %v2323 = vsub.s32 0, %v2322
    %v2324 = vrot.slane %v2320, %v2323
    %v2341 = vunpack.c.l.b16 %v2304
    %v2342 = vunpack.c.l.b16 %v2305
    %v2343 = vunpack.c.l.b16 %v2306
    %v2344 = vunpack.c.l.b16 %v2307
    %v2345 = vunpack.c.l.b16 %v2308
    %v2346 = vunpack.c.l.b16 %v2309
    %v2347 = vunpack.c.l.b16 %v2310
    %v2348 = vunpack.c.l.b16 %v2311
    %v2349 = vunpack.c.l.b16 %v2312
    %v2350 = vunpack.c.l.b16 %v2313
    %v2351 = vunpack.c.l.b16 %v2314
    %v2352 = vunpack.c.l.b16 %v2315
    %v2353 = vunpack.c.l.b16 %v2316
    %v2354 = vunpack.c.l.b16 %v2317
    %v2355 = vunpack.c.l.b16 %v2318
    %v2356 = vunpack.c.l.b16 %v2319
    %v2357 = vpack.c.b16 %v2342, %v2341
    %v2358 = vpack.c.b16 %v2344, %v2343
    %v2359 = vpack.c.b16 %v2346, %v2345
    %v2360 = vpack.c.b16 %v2348, %v2347
    %v2361 = vpack.c.b16 %v2350, %v2349
    %v2362 = vpack.c.b16 %v2352, %v2351
    %v2363 = vpack.c.b16 %v2354, %v2353
    %v2364 = vpack.c.b16 %v2356, %v2355
    %2373 = vmatprep.subr.bf16.mxu0 0
    %2374 = vmatpush1.bf16.msra.mxu0 %v2357
    %2375 = vmatprep.subr.bf16.mxu0 0
    %2376 = vmatpush1.bf16.msra.mxu0 %v2358
    %2377 = vmatprep.subr.bf16.mxu0 0
    %2378 = vmatpush1.bf16.msra.mxu0 %v2359
    %2379 = vmatprep.subr.bf16.mxu0 0
    %2380 = vmatpush1.bf16.msra.mxu0 %v2360
    %2381 = vmatprep.subr.bf16.mxu0 0
    %2382 = vmatpush1.bf16.msra.mxu0 %v2361
    %2383 = vmatprep.subr.bf16.mxu0 0
    %2384 = vmatpush1.bf16.msra.mxu0 %v2362
    %2385 = vmatprep.subr.bf16.mxu0 0
    %2386 = vmatpush1.bf16.msra.mxu0 %v2363
    %2387 = vmatprep.subr.bf16.mxu0 0
    %2388 = vmatpush1.bf16.msra.mxu0 %v2364
    %2389 = vmatprep.subr.bf16.mxu0 0
    %2390 = vmatpush1.bf16.msra.mxu0 0
    %2391 = vmatprep.subr.bf16.mxu0 0
    %2392 = vmatpush1.bf16.msra.mxu0 0
    %2393 = vmatprep.subr.bf16.mxu0 0
    %2394 = vmatpush1.bf16.msra.mxu0 0
    %2395 = vmatprep.subr.bf16.mxu0 0
    %2396 = vmatpush1.bf16.msra.mxu0 0
    %2397 = vmatprep.subr.bf16.mxu0 0
    %2398 = vmatpush1.bf16.msra.mxu0 0
    %2399 = vmatprep.subr.bf16.mxu0 0
    %2400 = vmatpush1.bf16.msra.mxu0 0
    %2401 = vmatprep.subr.bf16.mxu0 0
    %2402 = vmatpush1.bf16.msra.mxu0 0
    %2403 = vmatprep.subr.bf16.mxu0 0
    %2404 = vmatpush1.bf16.msra.mxu0 0
    %2405 = vmatprep.mubr.bf16.mxu0 0
    %2406 = vmatmul.mubr.bf16.gmra.mrb[0].mxu0 %v1758
    %v2407 = vpop.f32.mrb[0].mxu0
    %v2408 = vadd.f32 %v2324, %v2407
    %v2409 = vpop.f32.mrb[0].mxu0
    %v2410 = vpop.f32.mrb[0].mxu0
    %v2411 = vpop.f32.mrb[0].mxu0
    %2412 = vdwg.mxu0
    %v2413 = vld [vmem:[#allocation2 + $0x480] sm:$0xf]
    %v2414 = vld [vmem:[#allocation2 + $0x484] sm:$0xf]
    %v2415 = vld [vmem:[#allocation2 + $0x488] sm:$0xf]
    %v2416 = vld [vmem:[#allocation2 + $0x48c] sm:$0xf]
    %v2417 = vld [vmem:[#allocation2 + $0x490] sm:$0xf]
    %v2418 = vld [vmem:[#allocation2 + $0x494] sm:$0xf]
    %v2419 = vld [vmem:[#allocation2 + $0x498] sm:$0xf]
    %v2420 = vld [vmem:[#allocation2 + $0x49c] sm:$0xf]
    %v2421 = vld [vmem:[#allocation2 + $0x4a0] sm:$0xf]
    %v2422 = vld [vmem:[#allocation2 + $0x4a4] sm:$0xf]
    %v2423 = vld [vmem:[#allocation2 + $0x4a8] sm:$0xf]
    %v2424 = vld [vmem:[#allocation2 + $0x4ac] sm:$0xf]
    %v2425 = vld [vmem:[#allocation2 + $0x4b0] sm:$0xf]
    %v2426 = vld [vmem:[#allocation2 + $0x4b4] sm:$0xf]
    %v2427 = vld [vmem:[#allocation2 + $0x4b8] sm:$0xf]
    %v2428 = vld [vmem:[#allocation2 + $0x4bc] sm:$0xf]
    %v2429 = vld [vmem:[#allocation2 + $0x4c0] sm:$0xf]
    %v2430 = vld [vmem:[#allocation2 + $0x4c4] sm:$0xf]
    %v2431 = vld [vmem:[#allocation2 + $0x4c8] sm:$0xf]
    %v2432 = vld [vmem:[#allocation2 + $0x4cc] sm:$0xf]
    %v2433 = vld [vmem:[#allocation2 + $0x4d0] sm:$0xf]
    %v2434 = vld [vmem:[#allocation2 + $0x4d4] sm:$0xf]
    %v2435 = vld [vmem:[#allocation2 + $0x4d8] sm:$0xf]
    %v2436 = vld [vmem:[#allocation2 + $0x4dc] sm:$0xf]
    %v2437 = vld [vmem:[#allocation2 + $0x4e0] sm:$0xf]
    %v2438 = vld [vmem:[#allocation2 + $0x4e4] sm:$0xf]
    %v2439 = vld [vmem:[#allocation2 + $0x4e8] sm:$0xf]
    %v2440 = vld [vmem:[#allocation2 + $0x4ec] sm:$0xf]
    %v2441 = vld [vmem:[#allocation2 + $0x4f0] sm:$0xf]
    %v2442 = vld [vmem:[#allocation2 + $0x4f4] sm:$0xf]
    %v2443 = vld [vmem:[#allocation2 + $0x4f8] sm:$0xf]
    %v2444 = vld [vmem:[#allocation2 + $0x4fc] sm:$0xf]
    %v2445 = vld [vmem:[#allocation2 + $0x500] sm:$0xf]
    %v2446 = vld [vmem:[#allocation2 + $0x504] sm:$0xf]
    %v2447 = vld [vmem:[#allocation2 + $0x508] sm:$0xf]
    %v2448 = vld [vmem:[#allocation2 + $0x50c] sm:$0xf]
    %v2449 = vld [vmem:[#allocation2 + $0x510] sm:$0xf]
    %v2450 = vld [vmem:[#allocation2 + $0x514] sm:$0xf]
    %v2451 = vld [vmem:[#allocation2 + $0x518] sm:$0xf]
    %v2452 = vld [vmem:[#allocation2 + $0x51c] sm:$0xf]
    %v2453 = vld [vmem:[#allocation2 + $0x520] sm:$0xf]
    %v2454 = vld [vmem:[#allocation2 + $0x524] sm:$0xf]
    %v2455 = vld [vmem:[#allocation2 + $0x528] sm:$0xf]
    %v2456 = vld [vmem:[#allocation2 + $0x52c] sm:$0xf]
    %v2457 = vld [vmem:[#allocation2 + $0x530] sm:$0xf]
    %v2458 = vld [vmem:[#allocation2 + $0x534] sm:$0xf]
    %v2459 = vld [vmem:[#allocation2 + $0x538] sm:$0xf]
    %v2460 = vld [vmem:[#allocation2 + $0x53c] sm:$0xf]
    %v2461 = vld [vmem:[#allocation2 + $0x540] sm:$0xf]
    %v2462 = vld [vmem:[#allocation2 + $0x544] sm:$0xf]
    %v2463 = vld [vmem:[#allocation2 + $0x548] sm:$0xf]
    %v2464 = vld [vmem:[#allocation2 + $0x54c] sm:$0xf]
    %v2465 = vld [vmem:[#allocation2 + $0x550] sm:$0xf]
    %v2466 = vld [vmem:[#allocation2 + $0x554] sm:$0xf]
    %v2467 = vld [vmem:[#allocation2 + $0x558] sm:$0xf]
    %v2468 = vld [vmem:[#allocation2 + $0x55c] sm:$0xf]
    %v2469 = vld [vmem:[#allocation2 + $0x560] sm:$0xf]
    %v2470 = vld [vmem:[#allocation2 + $0x564] sm:$0xf]
    %v2471 = vld [vmem:[#allocation2 + $0x568] sm:$0xf]
    %v2472 = vld [vmem:[#allocation2 + $0x56c] sm:$0xf]
    %v2473 = vld [vmem:[#allocation2 + $0x570] sm:$0xf]
    %v2474 = vld [vmem:[#allocation2 + $0x574] sm:$0xf]
    %v2475 = vld [vmem:[#allocation2 + $0x578] sm:$0xf]
    %v2476 = vld [vmem:[#allocation2 + $0x57c] sm:$0xf]
    %v2477 = vld [vmem:[#allocation2 + $0x580] sm:$0xf]
    %v2478 = vld [vmem:[#allocation2 + $0x584] sm:$0xf]
    %v2479 = vld [vmem:[#allocation2 + $0x588] sm:$0xf]
    %v2480 = vld [vmem:[#allocation2 + $0x58c] sm:$0xf]
    %v2481 = vld [vmem:[#allocation2 + $0x590] sm:$0xf]
    %v2482 = vld [vmem:[#allocation2 + $0x594] sm:$0xf]
    %v2483 = vld [vmem:[#allocation2 + $0x598] sm:$0xf]
    %v2484 = vld [vmem:[#allocation2 + $0x59c] sm:$0xf]
    %v2485 = vld [vmem:[#allocation2 + $0x5a0] sm:$0xf]
    %v2486 = vld [vmem:[#allocation2 + $0x5a4] sm:$0xf]
    %v2487 = vld [vmem:[#allocation2 + $0x5a8] sm:$0xf]
    %v2488 = vld [vmem:[#allocation2 + $0x5ac] sm:$0xf]
    %v2489 = vld [vmem:[#allocation2 + $0x5b0] sm:$0xf]
    %v2490 = vld [vmem:[#allocation2 + $0x5b4] sm:$0xf]
    %v2491 = vld [vmem:[#allocation2 + $0x5b8] sm:$0xf]
    %v2492 = vld [vmem:[#allocation2 + $0x5bc] sm:$0xf]
    %v2493 = vld [vmem:[#allocation2 + $0x5c0] sm:$0xf]
    %v2494 = vld [vmem:[#allocation2 + $0x5c4] sm:$0xf]
    %v2495 = vld [vmem:[#allocation2 + $0x5c8] sm:$0xf]
    %v2496 = vld [vmem:[#allocation2 + $0x5cc] sm:$0xf]
    %v2497 = vld [vmem:[#allocation2 + $0x5d0] sm:$0xf]
    %v2498 = vld [vmem:[#allocation2 + $0x5d4] sm:$0xf]
    %v2499 = vld [vmem:[#allocation2 + $0x5d8] sm:$0xf]
    %v2500 = vld [vmem:[#allocation2 + $0x5dc] sm:$0xf]
    %v2501 = vld [vmem:[#allocation2 + $0x5e0] sm:$0xf]
    %v2502 = vld [vmem:[#allocation2 + $0x5e4] sm:$0xf]
    %v2503 = vld [vmem:[#allocation2 + $0x5e8] sm:$0xf]
    %v2504 = vld [vmem:[#allocation2 + $0x5ec] sm:$0xf]
    %v2505 = vld [vmem:[#allocation2 + $0x5f0] sm:$0xf]
    %v2506 = vld [vmem:[#allocation2 + $0x5f4] sm:$0xf]
    %v2507 = vld [vmem:[#allocation2 + $0x5f8] sm:$0xf]
    %v2508 = vld [vmem:[#allocation2 + $0x5fc] sm:$0xf]
    %v2509 = vld [vmem:[%s3 + $0xa] sm:$0x1]
    %v2510 = vld [vmem:[%s3 + $0xb] sm:$0x1]
    %v2511 = vld [vmem:[%s3 + $0xc] sm:$0x1]
    %v2512 = vld [vmem:[%s3 + $0xd] sm:$0x1]
    %v2513 = vld [vmem:[%s3 + $0xe] sm:$0x1]
    %v2514 = vld [vmem:[%s3 + $0xf] sm:$0x1]
    %v2515 = vlaneseq
    %v2516 = vshrl.u32 %v2515, 7
    %v2517 = vsub.s32 0, %v2516
    %v2518 = vrot.slane %v2509, %v2517
    %v2535 = vunpack.c.l.b16 %v2413
    %v2536 = vunpack.c.l.b16 %v2414
    %v2537 = vunpack.c.l.b16 %v2415
    %v2538 = vunpack.c.l.b16 %v2416
    %v2539 = vunpack.c.l.b16 %v2417
    %v2540 = vunpack.c.l.b16 %v2418
    %v2541 = vunpack.c.l.b16 %v2419
    %v2542 = vunpack.c.l.b16 %v2420
    %v2543 = vunpack.c.l.b16 %v2421
    %v2544 = vunpack.c.l.b16 %v2422
    %v2545 = vunpack.c.l.b16 %v2423
    %v2546 = vunpack.c.l.b16 %v2424
    %v2547 = vunpack.c.l.b16 %v2425
    %v2548 = vunpack.c.l.b16 %v2426
    %v2549 = vunpack.c.l.b16 %v2427
    %v2550 = vunpack.c.l.b16 %v2428
    %v2551 = vpack.c.b16 %v2536, %v2535
    %v2552 = vpack.c.b16 %v2538, %v2537
    %v2553 = vpack.c.b16 %v2540, %v2539
    %v2554 = vpack.c.b16 %v2542, %v2541
    %v2555 = vpack.c.b16 %v2544, %v2543
    %v2556 = vpack.c.b16 %v2546, %v2545
    %v2557 = vpack.c.b16 %v2548, %v2547
    %v2558 = vpack.c.b16 %v2550, %v2549
    %2567 = vmatprep.subr.bf16.mxu0 0
    %2568 = vmatpush1.bf16.msra.mxu0 %v2551
    %2569 = vmatprep.subr.bf16.mxu0 0
    %2570 = vmatpush1.bf16.msra.mxu0 %v2552
    %2571 = vmatprep.subr.bf16.mxu0 0
    %2572 = vmatpush1.bf16.msra.mxu0 %v2553
    %2573 = vmatprep.subr.bf16.mxu0 0
    %2574 = vmatpush1.bf16.msra.mxu0 %v2554
    %2575 = vmatprep.subr.bf16.mxu0 0
    %2576 = vmatpush1.bf16.msra.mxu0 %v2555
    %2577 = vmatprep.subr.bf16.mxu0 0
    %2578 = vmatpush1.bf16.msra.mxu0 %v2556
    %2579 = vmatprep.subr.bf16.mxu0 0
    %2580 = vmatpush1.bf16.msra.mxu0 %v2557
    %2581 = vmatprep.subr.bf16.mxu0 0
    %2582 = vmatpush1.bf16.msra.mxu0 %v2558
    %2583 = vmatprep.subr.bf16.mxu0 0
    %2584 = vmatpush1.bf16.msra.mxu0 0
    %2585 = vmatprep.subr.bf16.mxu0 0
    %2586 = vmatpush1.bf16.msra.mxu0 0
    %2587 = vmatprep.subr.bf16.mxu0 0
    %2588 = vmatpush1.bf16.msra.mxu0 0
    %2589 = vmatprep.subr.bf16.mxu0 0
    %2590 = vmatpush1.bf16.msra.mxu0 0
    %2591 = vmatprep.subr.bf16.mxu0 0
    %2592 = vmatpush1.bf16.msra.mxu0 0
    %2593 = vmatprep.subr.bf16.mxu0 0
    %2594 = vmatpush1.bf16.msra.mxu0 0
    %2595 = vmatprep.subr.bf16.mxu0 0
    %2596 = vmatpush1.bf16.msra.mxu0 0
    %2597 = vmatprep.subr.bf16.mxu0 0
    %2598 = vmatpush1.bf16.msra.mxu0 0
    %2599 = vmatprep.mubr.bf16.mxu0 0
    %2600 = vmatmul.mubr.bf16.gmra.mrb[0].mxu0 0
    %v2601 = vpop.f32.mrb[0].mxu0
    %v2602 = vadd.f32 %v2518, %v2601
    %v2603 = vpop.f32.mrb[0].mxu0
    %v2604 = vpop.f32.mrb[0].mxu0
    %v2605 = vpop.f32.mrb[0].mxu0
    %2606 = vdwg.mxu0
    %v2607 = vlaneseq
    %v2608 = vshrl.u32 %v2607, 7
    %v2609 = vsub.s32 0, %v2608
    %v2610 = vrot.slane %v2510, %v2609
    %v2627 = vunpack.c.l.b16 %v2429
    %v2628 = vunpack.c.l.b16 %v2430
    %v2629 = vunpack.c.l.b16 %v2431
    %v2630 = vunpack.c.l.b16 %v2432
    %v2631 = vunpack.c.l.b16 %v2433
    %v2632 = vunpack.c.l.b16 %v2434
    %v2633 = vunpack.c.l.b16 %v2435
    %v2634 = vunpack.c.l.b16 %v2436
    %v2635 = vunpack.c.l.b16 %v2437
    %v2636 = vunpack.c.l.b16 %v2438
    %v2637 = vunpack.c.l.b16 %v2439
    %v2638 = vunpack.c.l.b16 %v2440
    %v2639 = vunpack.c.l.b16 %v2441
    %v2640 = vunpack.c.l.b16 %v2442
    %v2641 = vunpack.c.l.b16 %v2443
    %v2642 = vunpack.c.l.b16 %v2444
    %v2643 = vpack.c.b16 %v2628, %v2627
    %v2644 = vpack.c.b16 %v2630, %v2629
    %v2645 = vpack.c.b16 %v2632, %v2631
    %v2646 = vpack.c.b16 %v2634, %v2633
    %v2647 = vpack.c.b16 %v2636, %v2635
    %v2648 = vpack.c.b16 %v2638, %v2637
    %v2649 = vpack.c.b16 %v2640, %v2639
    %v2650 = vpack.c.b16 %v2642, %v2641
    %2659 = vmatprep.subr.bf16.mxu0 0
    %2660 = vmatpush1.bf16.msra.mxu0 %v2643
    %2661 = vmatprep.subr.bf16.mxu0 0
    %2662 = vmatpush1.bf16.msra.mxu0 %v2644
    %2663 = vmatprep.subr.bf16.mxu0 0
    %2664 = vmatpush1.bf16.msra.mxu0 %v2645
    %2665 = vmatprep.subr.bf16.mxu0 0
    %2666 = vmatpush1.bf16.msra.mxu0 %v2646
    %2667 = vmatprep.subr.bf16.mxu0 0
    %2668 = vmatpush1.bf16.msra.mxu0 %v2647
    %2669 = vmatprep.subr.bf16.mxu0 0
    %2670 = vmatpush1.bf16.msra.mxu0 %v2648
    %2671 = vmatprep.subr.bf16.mxu0 0
    %2672 = vmatpush1.bf16.msra.mxu0 %v2649
    %2673 = vmatprep.subr.bf16.mxu0 0
    %2674 = vmatpush1.bf16.msra.mxu0 %v2650
    %2675 = vmatprep.subr.bf16.mxu0 0
    %2676 = vmatpush1.bf16.msra.mxu0 0
    %2677 = vmatprep.subr.bf16.mxu0 0
    %2678 = vmatpush1.bf16.msra.mxu0 0
    %2679 = vmatprep.subr.bf16.mxu0 0
    %2680 = vmatpush1.bf16.msra.mxu0 0
    %2681 = vmatprep.subr.bf16.mxu0 0
    %2682 = vmatpush1.bf16.msra.mxu0 0
    %2683 = vmatprep.subr.bf16.mxu0 0
    %2684 = vmatpush1.bf16.msra.mxu0 0
    %2685 = vmatprep.subr.bf16.mxu0 0
    %2686 = vmatpush1.bf16.msra.mxu0 0
    %2687 = vmatprep.subr.bf16.mxu0 0
    %2688 = vmatpush1.bf16.msra.mxu0 0
    %2689 = vmatprep.subr.bf16.mxu0 0
    %2690 = vmatpush1.bf16.msra.mxu0 0
    %2691 = vmatprep.mubr.bf16.mxu0 0
    %2692 = vmatmul.mubr.bf16.gmra.mrb[0].mxu0 0
    %v2693 = vpop.f32.mrb[0].mxu0
    %v2694 = vadd.f32 %v2610, %v2693
    %v2695 = vpop.f32.mrb[0].mxu0
    %v2696 = vpop.f32.mrb[0].mxu0
    %v2697 = vpop.f32.mrb[0].mxu0
    %2698 = vdwg.mxu0
    %v2699 = vlaneseq
    %v2700 = vshrl.u32 %v2699, 7
    %v2701 = vsub.s32 0, %v2700
    %v2702 = vrot.slane %v2511, %v2701
    %v2719 = vunpack.c.l.b16 %v2445
    %v2720 = vunpack.c.l.b16 %v2446
    %v2721 = vunpack.c.l.b16 %v2447
    %v2722 = vunpack.c.l.b16 %v2448
    %v2723 = vunpack.c.l.b16 %v2449
    %v2724 = vunpack.c.l.b16 %v2450
    %v2725 = vunpack.c.l.b16 %v2451
    %v2726 = vunpack.c.l.b16 %v2452
    %v2727 = vunpack.c.l.b16 %v2453
    %v2728 = vunpack.c.l.b16 %v2454
    %v2729 = vunpack.c.l.b16 %v2455
    %v2730 = vunpack.c.l.b16 %v2456
    %v2731 = vunpack.c.l.b16 %v2457
    %v2732 = vunpack.c.l.b16 %v2458
    %v2733 = vunpack.c.l.b16 %v2459
    %v2734 = vunpack.c.l.b16 %v2460
    %v2735 = vpack.c.b16 %v2720, %v2719
    %v2736 = vpack.c.b16 %v2722, %v2721
    %v2737 = vpack.c.b16 %v2724, %v2723
    %v2738 = vpack.c.b16 %v2726, %v2725
    %v2739 = vpack.c.b16 %v2728, %v2727
    %v2740 = vpack.c.b16 %v2730, %v2729
    %v2741 = vpack.c.b16 %v2732, %v2731
    %v2742 = vpack.c.b16 %v2734, %v2733
    %2751 = vmatprep.subr.bf16.mxu0 0
    %2752 = vmatpush1.bf16.msra.mxu0 %v2735
    %2753 = vmatprep.subr.bf16.mxu0 0
    %2754 = vmatpush1.bf16.msra.mxu0 %v2736
    %2755 = vmatprep.subr.bf16.mxu0 0
    %2756 = vmatpush1.bf16.msra.mxu0 %v2737
    %2757 = vmatprep.subr.bf16.mxu0 0
    %2758 = vmatpush1.bf16.msra.mxu0 %v2738
    %2759 = vmatprep.subr.bf16.mxu0 0
    %2760 = vmatpush1.bf16.msra.mxu0 %v2739
    %2761 = vmatprep.subr.bf16.mxu0 0
    %2762 = vmatpush1.bf16.msra.mxu0 %v2740
    %2763 = vmatprep.subr.bf16.mxu0 0
    %2764 = vmatpush1.bf16.msra.mxu0 %v2741
    %2765 = vmatprep.subr.bf16.mxu0 0
    %2766 = vmatpush1.bf16.msra.mxu0 %v2742
    %2767 = vmatprep.subr.bf16.mxu0 0
    %2768 = vmatpush1.bf16.msra.mxu0 0
    %2769 = vmatprep.subr.bf16.mxu0 0
    %2770 = vmatpush1.bf16.msra.mxu0 0
    %2771 = vmatprep.subr.bf16.mxu0 0
    %2772 = vmatpush1.bf16.msra.mxu0 0
    %2773 = vmatprep.subr.bf16.mxu0 0
    %2774 = vmatpush1.bf16.msra.mxu0 0
    %2775 = vmatprep.subr.bf16.mxu0 0
    %2776 = vmatpush1.bf16.msra.mxu0 0
    %2777 = vmatprep.subr.bf16.mxu0 0
    %2778 = vmatpush1.bf16.msra.mxu0 0
    %2779 = vmatprep.subr.bf16.mxu0 0
    %2780 = vmatpush1.bf16.msra.mxu0 0
    %2781 = vmatprep.subr.bf16.mxu0 0
    %2782 = vmatpush1.bf16.msra.mxu0 0
    %2783 = vmatprep.mubr.bf16.mxu0 0
    %2784 = vmatmul.mubr.bf16.gmra.mrb[0].mxu0 0
    %v2785 = vpop.f32.mrb[0].mxu0
    %v2786 = vadd.f32 %v2702, %v2785
    %v2787 = vpop.f32.mrb[0].mxu0
    %v2788 = vpop.f32.mrb[0].mxu0
    %v2789 = vpop.f32.mrb[0].mxu0
    %2790 = vdwg.mxu0
    %v2791 = vadd.f32 %v1863, %v2602
    %v2792 = vsub.f32 0.0, %v2791
    %v2793 = vmul.f32 %v2792, 1.442695
    %v2794 = vpow.pop %v2793
    %v2795 = vadd.f32 %v2794, 1.0
    %v2796 = vrcp.pop %v2795
    %v2797 = vadd.f32 %v1972, %v2694
    %v2798 = vsub.f32 0.0, %v2797
    %v2799 = vmul.f32 %v2798, 1.442695
    %v2800 = vpow.pop %v2799
    %v2801 = vadd.f32 %v2800, 1.0
    %v2802 = vrcp.pop %v2801
    %v2803 = vmul.f32 %v2796, %v2786
    %v2804 = vadd.f32 %v2081, %v2803
    %v2805 = vtanh.pop %v2804
    %v2806 = vsub.f32 1.0, %v2802
    %v2807 = vmul.f32 %v2806, %v2805
    %v2808 = vmul.f32 %v2802, 0.0
    %v2809 = vadd.f32 %v2807, %v2808
    %v2810 = vlaneseq
    %v2811 = vshrl.u32 %v2810, 7
    %v2812 = vsub.s32 0, %v2811
    %v2813 = vrot.slane %v2512, %v2812
    %v2830 = vunpack.c.l.b16 %v2461
    %v2831 = vunpack.c.l.b16 %v2462
    %v2832 = vunpack.c.l.b16 %v2463
    %v2833 = vunpack.c.l.b16 %v2464
    %v2834 = vunpack.c.l.b16 %v2465
    %v2835 = vunpack.c.l.b16 %v2466
    %v2836 = vunpack.c.l.b16 %v2467
    %v2837 = vunpack.c.l.b16 %v2468
    %v2838 = vunpack.c.l.b16 %v2469
    %v2839 = vunpack.c.l.b16 %v2470
    %v2840 = vunpack.c.l.b16 %v2471
    %v2841 = vunpack.c.l.b16 %v2472
    %v2842 = vunpack.c.l.b16 %v2473
    %v2843 = vunpack.c.l.b16 %v2474
    %v2844 = vunpack.c.l.b16 %v2475
    %v2845 = vunpack.c.l.b16 %v2476
    %v2846 = vpack.c.b16 %v2831, %v2830
    %v2847 = vpack.c.b16 %v2833, %v2832
    %v2848 = vpack.c.b16 %v2835, %v2834
    %v2849 = vpack.c.b16 %v2837, %v2836
    %v2850 = vpack.c.b16 %v2839, %v2838
    %v2851 = vpack.c.b16 %v2841, %v2840
    %v2852 = vpack.c.b16 %v2843, %v2842
    %v2853 = vpack.c.b16 %v2845, %v2844
    %2862 = vmatprep.subr.bf16.mxu0 0
    %2863 = vmatpush1.bf16.msra.mxu0 %v2846
    %2864 = vmatprep.subr.bf16.mxu0 0
    %2865 = vmatpush1.bf16.msra.mxu0 %v2847
    %2866 = vmatprep.subr.bf16.mxu0 0
    %2867 = vmatpush1.bf16.msra.mxu0 %v2848
    %2868 = vmatprep.subr.bf16.mxu0 0
    %2869 = vmatpush1.bf16.msra.mxu0 %v2849
    %2870 = vmatprep.subr.bf16.mxu0 0
    %2871 = vmatpush1.bf16.msra.mxu0 %v2850
    %2872 = vmatprep.subr.bf16.mxu0 0
    %2873 = vmatpush1.bf16.msra.mxu0 %v2851
    %2874 = vmatprep.subr.bf16.mxu0 0
    %2875 = vmatpush1.bf16.msra.mxu0 %v2852
    %2876 = vmatprep.subr.bf16.mxu0 0
    %2877 = vmatpush1.bf16.msra.mxu0 %v2853
    %2878 = vmatprep.subr.bf16.mxu0 0
    %2879 = vmatpush1.bf16.msra.mxu0 0
    %2880 = vmatprep.subr.bf16.mxu0 0
    %2881 = vmatpush1.bf16.msra.mxu0 0
    %2882 = vmatprep.subr.bf16.mxu0 0
    %2883 = vmatpush1.bf16.msra.mxu0 0
    %2884 = vmatprep.subr.bf16.mxu0 0
    %2885 = vmatpush1.bf16.msra.mxu0 0
    %2886 = vmatprep.subr.bf16.mxu0 0
    %2887 = vmatpush1.bf16.msra.mxu0 0
    %2888 = vmatprep.subr.bf16.mxu0 0
    %2889 = vmatpush1.bf16.msra.mxu0 0
    %2890 = vmatprep.subr.bf16.mxu0 0
    %2891 = vmatpush1.bf16.msra.mxu0 0
    %2892 = vmatprep.subr.bf16.mxu0 0
    %2893 = vmatpush1.bf16.msra.mxu0 0
    %2894 = vmatprep.mubr.bf16.mxu0 0
    %2895 = vmatmul.mubr.bf16.gmra.mrb[0].mxu0 0
    %v2896 = vpop.f32.mrb[0].mxu0
    %v2897 = vadd.f32 %v2813, %v2896
    %v2898 = vpop.f32.mrb[0].mxu0
    %v2899 = vpop.f32.mrb[0].mxu0
    %v2900 = vpop.f32.mrb[0].mxu0
    %2901 = vdwg.mxu0
    %v2902 = vlaneseq
    %v2903 = vshrl.u32 %v2902, 7
    %v2904 = vsub.s32 0, %v2903
    %v2905 = vrot.slane %v2513, %v2904
    %v2922 = vunpack.c.l.b16 %v2477
    %v2923 = vunpack.c.l.b16 %v2478
    %v2924 = vunpack.c.l.b16 %v2479
    %v2925 = vunpack.c.l.b16 %v2480
    %v2926 = vunpack.c.l.b16 %v2481
    %v2927 = vunpack.c.l.b16 %v2482
    %v2928 = vunpack.c.l.b16 %v2483
    %v2929 = vunpack.c.l.b16 %v2484
    %v2930 = vunpack.c.l.b16 %v2485
    %v2931 = vunpack.c.l.b16 %v2486
    %v2932 = vunpack.c.l.b16 %v2487
    %v2933 = vunpack.c.l.b16 %v2488
    %v2934 = vunpack.c.l.b16 %v2489
    %v2935 = vunpack.c.l.b16 %v2490
    %v2936 = vunpack.c.l.b16 %v2491
    %v2937 = vunpack.c.l.b16 %v2492
    %v2938 = vpack.c.b16 %v2923, %v2922
    %v2939 = vpack.c.b16 %v2925, %v2924
    %v2940 = vpack.c.b16 %v2927, %v2926
    %v2941 = vpack.c.b16 %v2929, %v2928
    %v2942 = vpack.c.b16 %v2931, %v2930
    %v2943 = vpack.c.b16 %v2933, %v2932
    %v2944 = vpack.c.b16 %v2935, %v2934
    %v2945 = vpack.c.b16 %v2937, %v2936
    %2954 = vmatprep.subr.bf16.mxu0 0
    %2955 = vmatpush1.bf16.msra.mxu0 %v2938
    %2956 = vmatprep.subr.bf16.mxu0 0
    %2957 = vmatpush1.bf16.msra.mxu0 %v2939
    %2958 = vmatprep.subr.bf16.mxu0 0
    %2959 = vmatpush1.bf16.msra.mxu0 %v2940
    %2960 = vmatprep.subr.bf16.mxu0 0
    %2961 = vmatpush1.bf16.msra.mxu0 %v2941
    %2962 = vmatprep.subr.bf16.mxu0 0
    %2963 = vmatpush1.bf16.msra.mxu0 %v2942
    %2964 = vmatprep.subr.bf16.mxu0 0
    %2965 = vmatpush1.bf16.msra.mxu0 %v2943
    %2966 = vmatprep.subr.bf16.mxu0 0
    %2967 = vmatpush1.bf16.msra.mxu0 %v2944
    %2968 = vmatprep.subr.bf16.mxu0 0
    %2969 = vmatpush1.bf16.msra.mxu0 %v2945
    %2970 = vmatprep.subr.bf16.mxu0 0
    %2971 = vmatpush1.bf16.msra.mxu0 0
    %2972 = vmatprep.subr.bf16.mxu0 0
    %2973 = vmatpush1.bf16.msra.mxu0 0
    %2974 = vmatprep.subr.bf16.mxu0 0
    %2975 = vmatpush1.bf16.msra.mxu0 0
    %2976 = vmatprep.subr.bf16.mxu0 0
    %2977 = vmatpush1.bf16.msra.mxu0 0
    %2978 = vmatprep.subr.bf16.mxu0 0
    %2979 = vmatpush1.bf16.msra.mxu0 0
    %2980 = vmatprep.subr.bf16.mxu0 0
    %2981 = vmatpush1.bf16.msra.mxu0 0
    %2982 = vmatprep.subr.bf16.mxu0 0
    %2983 = vmatpush1.bf16.msra.mxu0 0
    %2984 = vmatprep.subr.bf16.mxu0 0
    %2985 = vmatpush1.bf16.msra.mxu0 0
    %2986 = vmatprep.mubr.bf16.mxu0 0
    %2987 = vmatmul.mubr.bf16.gmra.mrb[0].mxu0 0
    %v2988 = vpop.f32.mrb[0].mxu0
    %v2989 = vadd.f32 %v2905, %v2988
    %v2990 = vpop.f32.mrb[0].mxu0
    %v2991 = vpop.f32.mrb[0].mxu0
    %v2992 = vpop.f32.mrb[0].mxu0
    %2993 = vdwg.mxu0
    %v2994 = vlaneseq
    %v2995 = vshrl.u32 %v2994, 7
    %v2996 = vsub.s32 0, %v2995
    %v2997 = vrot.slane %v2514, %v2996
    %v3014 = vunpack.c.l.b16 %v2493
    %v3015 = vunpack.c.l.b16 %v2494
    %v3016 = vunpack.c.l.b16 %v2495
    %v3017 = vunpack.c.l.b16 %v2496
    %v3018 = vunpack.c.l.b16 %v2497
    %v3019 = vunpack.c.l.b16 %v2498
    %v3020 = vunpack.c.l.b16 %v2499
    %v3021 = vunpack.c.l.b16 %v2500
    %v3022 = vunpack.c.l.b16 %v2501
    %v3023 = vunpack.c.l.b16 %v2502
    %v3024 = vunpack.c.l.b16 %v2503
    %v3025 = vunpack.c.l.b16 %v2504
    %v3026 = vunpack.c.l.b16 %v2505
    %v3027 = vunpack.c.l.b16 %v2506
    %v3028 = vunpack.c.l.b16 %v2507
    %v3029 = vunpack.c.l.b16 %v2508
    %v3030 = vpack.c.b16 %v3015, %v3014
    %v3031 = vpack.c.b16 %v3017, %v3016
    %v3032 = vpack.c.b16 %v3019, %v3018
    %v3033 = vpack.c.b16 %v3021, %v3020
    %v3034 = vpack.c.b16 %v3023, %v3022
    %v3035 = vpack.c.b16 %v3025, %v3024
    %v3036 = vpack.c.b16 %v3027, %v3026
    %v3037 = vpack.c.b16 %v3029, %v3028
    %3046 = vmatprep.subr.bf16.mxu0 0
    %3047 = vmatpush1.bf16.msra.mxu0 %v3030
    %3048 = vmatprep.subr.bf16.mxu0 0
    %3049 = vmatpush1.bf16.msra.mxu0 %v3031
    %3050 = vmatprep.subr.bf16.mxu0 0
    %3051 = vmatpush1.bf16.msra.mxu0 %v3032
    %3052 = vmatprep.subr.bf16.mxu0 0
    %3053 = vmatpush1.bf16.msra.mxu0 %v3033
    %3054 = vmatprep.subr.bf16.mxu0 0
    %3055 = vmatpush1.bf16.msra.mxu0 %v3034
    %3056 = vmatprep.subr.bf16.mxu0 0
    %3057 = vmatpush1.bf16.msra.mxu0 %v3035
    %3058 = vmatprep.subr.bf16.mxu0 0
    %3059 = vmatpush1.bf16.msra.mxu0 %v3036
    %3060 = vmatprep.subr.bf16.mxu0 0
    %3061 = vmatpush1.bf16.msra.mxu0 %v3037
    %3062 = vmatprep.subr.bf16.mxu0 0
    %3063 = vmatpush1.bf16.msra.mxu0 0
    %3064 = vmatprep.subr.bf16.mxu0 0
    %3065 = vmatpush1.bf16.msra.mxu0 0
    %3066 = vmatprep.subr.bf16.mxu0 0
    %3067 = vmatpush1.bf16.msra.mxu0 0
    %3068 = vmatprep.subr.bf16.mxu0 0
    %3069 = vmatpush1.bf16.msra.mxu0 0
    %3070 = vmatprep.subr.bf16.mxu0 0
    %3071 = vmatpush1.bf16.msra.mxu0 0
    %3072 = vmatprep.subr.bf16.mxu0 0
    %3073 = vmatpush1.bf16.msra.mxu0 0
    %3074 = vmatprep.subr.bf16.mxu0 0
    %3075 = vmatpush1.bf16.msra.mxu0 0
    %3076 = vmatprep.subr.bf16.mxu0 0
    %3077 = vmatpush1.bf16.msra.mxu0 0
    %3078 = vmatprep.mubr.bf16.mxu0 0
    %3079 = vmatmul.mubr.bf16.gmra.mrb[0].mxu0 0
    %v3080 = vpop.f32.mrb[0].mxu0
    %v3081 = vadd.f32 %v2997, %v3080
    %v3082 = vpop.f32.mrb[0].mxu0
    %v3083 = vpop.f32.mrb[0].mxu0
    %v3084 = vpop.f32.mrb[0].mxu0
    %3085 = vdwg.mxu0
    %v3087 = vrot.slane %v2897, 6
    %v3089 = vadd.f32 %v2190, %v3087
    %v3090 = vsub.f32 0.0, %v3089
    %v3091 = vmul.f32 %v3090, 1.442695
    %v3092 = vpow.pop %v3091
    %v3093 = vadd.f32 %v3092, 1.0
    %v3094 = vrcp.pop %v3093
    %v3096 = vrot.slane %v2989, 6
    %v3098 = vadd.f32 %v2299, %v3096
    %v3099 = vsub.f32 0.0, %v3098
    %v3100 = vmul.f32 %v3099, 1.442695
    %v3101 = vpow.pop %v3100
    %v3102 = vadd.f32 %v3101, 1.0
    %v3103 = vrcp.pop %v3102
    %v3105 = vrot.slane %v3081, 6
    %v3107 = vmul.f32 %v3094, %v3105
    %v3108 = vadd.f32 %v2408, %v3107
    %v3109 = vtanh.pop %v3108
    %v3110 = vsub.f32 1.0, %v3103
    %v3111 = vmul.f32 %v3110, %v3109
    %v3112 = vmul.f32 %v3103, 0.0
    %v3113 = vadd.f32 %v3111, %v3112
    %v3114 = vpack.c.bf16 %v2809, %v2809
    %3115 = vmatprep.subr.bf16.mxu0 0
    %3116 = vmatpush1.bf16.msra.mxu0 %v2551
    %3117 = vmatprep.subr.bf16.mxu0 0
    %3118 = vmatpush1.bf16.msra.mxu0 %v2552
    %3119 = vmatprep.subr.bf16.mxu0 0
    %3120 = vmatpush1.bf16.msra.mxu0 %v2553
    %3121 = vmatprep.subr.bf16.mxu0 0
    %3122 = vmatpush1.bf16.msra.mxu0 %v2554
    %3123 = vmatprep.subr.bf16.mxu0 0
    %3124 = vmatpush1.bf16.msra.mxu0 %v2555
    %3125 = vmatprep.subr.bf16.mxu0 0
    %3126 = vmatpush1.bf16.msra.mxu0 %v2556
    %3127 = vmatprep.subr.bf16.mxu0 0
    %3128 = vmatpush1.bf16.msra.mxu0 %v2557
    %3129 = vmatprep.subr.bf16.mxu0 0
    %3130 = vmatpush1.bf16.msra.mxu0 %v2558
    %3131 = vmatprep.subr.bf16.mxu0 0
    %3132 = vmatpush1.bf16.msra.mxu0 0
    %3133 = vmatprep.subr.bf16.mxu0 0
    %3134 = vmatpush1.bf16.msra.mxu0 0
    %3135 = vmatprep.subr.bf16.mxu0 0
    %3136 = vmatpush1.bf16.msra.mxu0 0
    %3137 = vmatprep.subr.bf16.mxu0 0
    %3138 = vmatpush1.bf16.msra.mxu0 0
    %3139 = vmatprep.subr.bf16.mxu0 0
    %3140 = vmatpush1.bf16.msra.mxu0 0
    %3141 = vmatprep.subr.bf16.mxu0 0
    %3142 = vmatpush1.bf16.msra.mxu0 0
    %3143 = vmatprep.subr.bf16.mxu0 0
    %3144 = vmatpush1.bf16.msra.mxu0 0
    %3145 = vmatprep.subr.bf16.mxu0 0
    %3146 = vmatpush1.bf16.msra.mxu0 0
    %3147 = vmatprep.mubr.bf16.mxu0 0
    %3148 = vmatmul.mubr.bf16.gmra.mrb[0].mxu0 %v3114
    %v3149 = vpop.f32.mrb[0].mxu0
    %v3150 = vadd.f32 %v2518, %v3149
    %v3151 = vpop.f32.mrb[0].mxu0
    %v3152 = vpop.f32.mrb[0].mxu0
    %v3153 = vpop.f32.mrb[0].mxu0
    %3154 = vdwg.mxu0
    %3155 = vmatprep.subr.bf16.mxu0 0
    %3156 = vmatpush1.bf16.msra.mxu0 %v2643
    %3157 = vmatprep.subr.bf16.mxu0 0
    %3158 = vmatpush1.bf16.msra.mxu0 %v2644
    %3159 = vmatprep.subr.bf16.mxu0 0
    %3160 = vmatpush1.bf16.msra.mxu0 %v2645
    %3161 = vmatprep.subr.bf16.mxu0 0
    %3162 = vmatpush1.bf16.msra.mxu0 %v2646
    %3163 = vmatprep.subr.bf16.mxu0 0
    %3164 = vmatpush1.bf16.msra.mxu0 %v2647
    %3165 = vmatprep.subr.bf16.mxu0 0
    %3166 = vmatpush1.bf16.msra.mxu0 %v2648
    %3167 = vmatprep.subr.bf16.mxu0 0
    %3168 = vmatpush1.bf16.msra.mxu0 %v2649
    %3169 = vmatprep.subr.bf16.mxu0 0
    %3170 = vmatpush1.bf16.msra.mxu0 %v2650
    %3171 = vmatprep.subr.bf16.mxu0 0
    %3172 = vmatpush1.bf16.msra.mxu0 0
    %3173 = vmatprep.subr.bf16.mxu0 0
    %3174 = vmatpush1.bf16.msra.mxu0 0
    %3175 = vmatprep.subr.bf16.mxu0 0
    %3176 = vmatpush1.bf16.msra.mxu0 0
    %3177 = vmatprep.subr.bf16.mxu0 0
    %3178 = vmatpush1.bf16.msra.mxu0 0
    %3179 = vmatprep.subr.bf16.mxu0 0
    %3180 = vmatpush1.bf16.msra.mxu0 0
    %3181 = vmatprep.subr.bf16.mxu0 0
    %3182 = vmatpush1.bf16.msra.mxu0 0
    %3183 = vmatprep.subr.bf16.mxu0 0
    %3184 = vmatpush1.bf16.msra.mxu0 0
    %3185 = vmatprep.subr.bf16.mxu0 0
    %3186 = vmatpush1.bf16.msra.mxu0 0
    %3187 = vmatprep.mubr.bf16.mxu0 0
    %3188 = vmatmul.mubr.bf16.gmra.mrb[0].mxu0 %v3114
    %v3189 = vpop.f32.mrb[0].mxu0
    %v3190 = vadd.f32 %v2610, %v3189
    %v3191 = vpop.f32.mrb[0].mxu0
    %v3192 = vpop.f32.mrb[0].mxu0
    %v3193 = vpop.f32.mrb[0].mxu0
    %3194 = vdwg.mxu0
    %3195 = vmatprep.subr.bf16.mxu0 0
    %3196 = vmatpush1.bf16.msra.mxu0 %v2735
    %3197 = vmatprep.subr.bf16.mxu0 0
    %3198 = vmatpush1.bf16.msra.mxu0 %v2736
    %3199 = vmatprep.subr.bf16.mxu0 0
    %3200 = vmatpush1.bf16.msra.mxu0 %v2737
    %3201 = vmatprep.subr.bf16.mxu0 0
    %3202 = vmatpush1.bf16.msra.mxu0 %v2738
    %3203 = vmatprep.subr.bf16.mxu0 0
    %3204 = vmatpush1.bf16.msra.mxu0 %v2739
    %3205 = vmatprep.subr.bf16.mxu0 0
    %3206 = vmatpush1.bf16.msra.mxu0 %v2740
    %3207 = vmatprep.subr.bf16.mxu0 0
    %3208 = vmatpush1.bf16.msra.mxu0 %v2741
    %3209 = vmatprep.subr.bf16.mxu0 0
    %3210 = vmatpush1.bf16.msra.mxu0 %v2742
    %3211 = vmatprep.subr.bf16.mxu0 0
    %3212 = vmatpush1.bf16.msra.mxu0 0
    %3213 = vmatprep.subr.bf16.mxu0 0
    %3214 = vmatpush1.bf16.msra.mxu0 0
    %3215 = vmatprep.subr.bf16.mxu0 0
    %3216 = vmatpush1.bf16.msra.mxu0 0
    %3217 = vmatprep.subr.bf16.mxu0 0
    %3218 = vmatpush1.bf16.msra.mxu0 0
    %3219 = vmatprep.subr.bf16.mxu0 0
    %3220 = vmatpush1.bf16.msra.mxu0 0
    %3221 = vmatprep.subr.bf16.mxu0 0
    %3222 = vmatpush1.bf16.msra.mxu0 0
    %3223 = vmatprep.subr.bf16.mxu0 0
    %3224 = vmatpush1.bf16.msra.mxu0 0
    %3225 = vmatprep.subr.bf16.mxu0 0
    %3226 = vmatpush1.bf16.msra.mxu0 0
    %3227 = vmatprep.mubr.bf16.mxu0 0
    %3228 = vmatmul.mubr.bf16.gmra.mrb[0].mxu0 %v3114
    %v3229 = vpop.f32.mrb[0].mxu0
    %v3230 = vadd.f32 %v2702, %v3229
    %v3231 = vpop.f32.mrb[0].mxu0
    %v3232 = vpop.f32.mrb[0].mxu0
    %v3233 = vpop.f32.mrb[0].mxu0
    %3234 = vdwg.mxu0
    %v3236 = vrot.slane %v3150, 6
    %v3238 = vadd.f32 %v1863, %v3236
    %v3239 = vsub.f32 0.0, %v3238
    %v3240 = vmul.f32 %v3239, 1.442695
    %v3241 = vpow.pop %v3240
    %v3242 = vadd.f32 %v3241, 1.0
    %v3243 = vrcp.pop %v3242
    %v3245 = vrot.slane %v3190, 6
    %v3247 = vadd.f32 %v1972, %v3245
    %v3248 = vsub.f32 0.0, %v3247
    %v3249 = vmul.f32 %v3248, 1.442695
    %v3250 = vpow.pop %v3249
    %v3251 = vadd.f32 %v3250, 1.0
    %v3252 = vrcp.pop %v3251
    %v3254 = vrot.slane %v3230, 6
    %v3256 = vmul.f32 %v3243, %v3254
    %v3257 = vadd.f32 %v2081, %v3256
    %v3258 = vtanh.pop %v3257
    %v3259 = vsub.f32 1.0, %v3252
    %v3260 = vmul.f32 %v3259, %v3258
    %v3262 = vrot.slane %v2809, 6
    %v3264 = vmul.f32 %v3252, %v3262
    %v3265 = vadd.f32 %v3260, %v3264
    %v3266 = vpack.c.bf16 %v3113, %v3113
    %v3268 = vrot.slane %v3266, 1
    %3270 = vmatprep.subr.bf16.mxu0 0
    %3271 = vmatpush1.bf16.msra.mxu0 %v2846
    %3272 = vmatprep.subr.bf16.mxu0 0
    %3273 = vmatpush1.bf16.msra.mxu0 %v2847
    %3274 = vmatprep.subr.bf16.mxu0 0
    %3275 = vmatpush1.bf16.msra.mxu0 %v2848
    %3276 = vmatprep.subr.bf16.mxu0 0
    %3277 = vmatpush1.bf16.msra.mxu0 %v2849
    %3278 = vmatprep.subr.bf16.mxu0 0
    %3279 = vmatpush1.bf16.msra.mxu0 %v2850
    %3280 = vmatprep.subr.bf16.mxu0 0
    %3281 = vmatpush1.bf16.msra.mxu0 %v2851
    %3282 = vmatprep.subr.bf16.mxu0 0
    %3283 = vmatpush1.bf16.msra.mxu0 %v2852
    %3284 = vmatprep.subr.bf16.mxu0 0
    %3285 = vmatpush1.bf16.msra.mxu0 %v2853
    %3286 = vmatprep.subr.bf16.mxu0 0
    %3287 = vmatpush1.bf16.msra.mxu0 0
    %3288 = vmatprep.subr.bf16.mxu0 0
    %3289 = vmatpush1.bf16.msra.mxu0 0
    %3290 = vmatprep.subr.bf16.mxu0 0
    %3291 = vmatpush1.bf16.msra.mxu0 0
    %3292 = vmatprep.subr.bf16.mxu0 0
    %3293 = vmatpush1.bf16.msra.mxu0 0
    %3294 = vmatprep.subr.bf16.mxu0 0
    %3295 = vmatpush1.bf16.msra.mxu0 0
    %3296 = vmatprep.subr.bf16.mxu0 0
    %3297 = vmatpush1.bf16.msra.mxu0 0
    %3298 = vmatprep.subr.bf16.mxu0 0
    %3299 = vmatpush1.bf16.msra.mxu0 0
    %3300 = vmatprep.subr.bf16.mxu0 0
    %3301 = vmatpush1.bf16.msra.mxu0 0
    %3302 = vmatprep.mubr.bf16.mxu0 0
    %3303 = vmatmul.mubr.bf16.gmra.mrb[0].mxu0 %v3268
    %v3304 = vpop.f32.mrb[0].mxu0
    %v3305 = vadd.f32 %v2813, %v3304
    %v3306 = vpop.f32.mrb[0].mxu0
    %v3307 = vpop.f32.mrb[0].mxu0
    %v3308 = vpop.f32.mrb[0].mxu0
    %3309 = vdwg.mxu0
    %3310 = vmatprep.subr.bf16.mxu0 0
    %3311 = vmatpush1.bf16.msra.mxu0 %v2938
    %3312 = vmatprep.subr.bf16.mxu0 0
    %3313 = vmatpush1.bf16.msra.mxu0 %v2939
    %3314 = vmatprep.subr.bf16.mxu0 0
    %3315 = vmatpush1.bf16.msra.mxu0 %v2940
    %3316 = vmatprep.subr.bf16.mxu0 0
    %3317 = vmatpush1.bf16.msra.mxu0 %v2941
    %3318 = vmatprep.subr.bf16.mxu0 0
    %3319 = vmatpush1.bf16.msra.mxu0 %v2942
    %3320 = vmatprep.subr.bf16.mxu0 0
    %3321 = vmatpush1.bf16.msra.mxu0 %v2943
    %3322 = vmatprep.subr.bf16.mxu0 0
    %3323 = vmatpush1.bf16.msra.mxu0 %v2944
    %3324 = vmatprep.subr.bf16.mxu0 0
    %3325 = vmatpush1.bf16.msra.mxu0 %v2945
    %3326 = vmatprep.subr.bf16.mxu0 0
    %3327 = vmatpush1.bf16.msra.mxu0 0
    %3328 = vmatprep.subr.bf16.mxu0 0
    %3329 = vmatpush1.bf16.msra.mxu0 0
    %3330 = vmatprep.subr.bf16.mxu0 0
    %3331 = vmatpush1.bf16.msra.mxu0 0
    %3332 = vmatprep.subr.bf16.mxu0 0
    %3333 = vmatpush1.bf16.msra.mxu0 0
    %3334 = vmatprep.subr.bf16.mxu0 0
    %3335 = vmatpush1.bf16.msra.mxu0 0
    %3336 = vmatprep.subr.bf16.mxu0 0
    %3337 = vmatpush1.bf16.msra.mxu0 0
    %3338 = vmatprep.subr.bf16.mxu0 0
    %3339 = vmatpush1.bf16.msra.mxu0 0
    %3340 = vmatprep.subr.bf16.mxu0 0
    %3341 = vmatpush1.bf16.msra.mxu0 0
    %3342 = vmatprep.mubr.bf16.mxu0 0
    %3343 = vmatmul.mubr.bf16.gmra.mrb[0].mxu0 %v3268
    %v3344 = vpop.f32.mrb[0].mxu0
    %v3345 = vadd.f32 %v2905, %v3344
    %v3346 = vpop.f32.mrb[0].mxu0
    %v3347 = vpop.f32.mrb[0].mxu0
    %v3348 = vpop.f32.mrb[0].mxu0
    %3349 = vdwg.mxu0
    %3350 = vmatprep.subr.bf16.mxu0 0
    %3351 = vmatpush1.bf16.msra.mxu0 %v3030
    %3352 = vmatprep.subr.bf16.mxu0 0
    %3353 = vmatpush1.bf16.msra.mxu0 %v3031
    %3354 = vmatprep.subr.bf16.mxu0 0
    %3355 = vmatpush1.bf16.msra.mxu0 %v3032
    %3356 = vmatprep.subr.bf16.mxu0 0
    %3357 = vmatpush1.bf16.msra.mxu0 %v3033
    %3358 = vmatprep.subr.bf16.mxu0 0
    %3359 = vmatpush1.bf16.msra.mxu0 %v3034
    %3360 = vmatprep.subr.bf16.mxu0 0
    %3361 = vmatpush1.bf16.msra.mxu0 %v3035
    %3362 = vmatprep.subr.bf16.mxu0 0
    %3363 = vmatpush1.bf16.msra.mxu0 %v3036
    %3364 = vmatprep.subr.bf16.mxu0 0
    %3365 = vmatpush1.bf16.msra.mxu0 %v3037
    %3366 = vmatprep.subr.bf16.mxu0 0
    %3367 = vmatpush1.bf16.msra.mxu0 0
    %3368 = vmatprep.subr.bf16.mxu0 0
    %3369 = vmatpush1.bf16.msra.mxu0 0
    %3370 = vmatprep.subr.bf16.mxu0 0
    %3371 = vmatpush1.bf16.msra.mxu0 0
    %3372 = vmatprep.subr.bf16.mxu0 0
    %3373 = vmatpush1.bf16.msra.mxu0 0
    %3374 = vmatprep.subr.bf16.mxu0 0
    %3375 = vmatpush1.bf16.msra.mxu0 0
    %3376 = vmatprep.subr.bf16.mxu0 0
    %3377 = vmatpush1.bf16.msra.mxu0 0
    %3378 = vmatprep.subr.bf16.mxu0 0
    %3379 = vmatpush1.bf16.msra.mxu0 0
    %3380 = vmatprep.subr.bf16.mxu0 0
    %3381 = vmatpush1.bf16.msra.mxu0 0
    %3382 = vmatprep.mubr.bf16.mxu0 0
    %3383 = vmatmul.mubr.bf16.gmra.mrb[0].mxu0 %v3268
    %v3384 = vpop.f32.mrb[0].mxu0
    %v3385 = vadd.f32 %v2997, %v3384
    %v3386 = vpop.f32.mrb[0].mxu0
    %v3387 = vpop.f32.mrb[0].mxu0
    %v3388 = vpop.f32.mrb[0].mxu0
    %3389 = vdwg.mxu0
    %v3390 = vadd.f32 %v2190, %v3305
    %v3391 = vsub.f32 0.0, %v3390
    %v3392 = vmul.f32 %v3391, 1.442695
    %v3393 = vpow.pop %v3392
    %v3394 = vadd.f32 %v3393, 1.0
    %v3395 = vrcp.pop %v3394
    %v3396 = vadd.f32 %v2299, %v3345
    %v3397 = vsub.f32 0.0, %v3396
    %v3398 = vmul.f32 %v3397, 1.442695
    %v3399 = vpow.pop %v3398
    %v3400 = vadd.f32 %v3399, 1.0
    %v3401 = vrcp.pop %v3400
    %v3402 = vmul.f32 %v3395, %v3385
    %v3403 = vadd.f32 %v2408, %v3402
    %v3404 = vtanh.pop %v3403
    %v3405 = vsub.f32 1.0, %v3401
    %v3406 = vmul.f32 %v3405, %v3404
    %v3408 = vrot.slane %v3113, 2
    %v3410 = vmul.f32 %v3401, %v3408
    %v3411 = vadd.f32 %v3406, %v3410
    %v3413 = vrot.slane %v3411, 6
    %v3415 = vpack.c.bf16 %v3265, %v3265
    %v3416 = vpack.c.bf16 %v3413, %v3413
    %v3417 = vld [vmem:[#allocation2 + $0x600] sm:$0xf]
    %v3418 = vld [vmem:[#allocation2 + $0x604] sm:$0xf]
    %v3419 = vld [vmem:[#allocation2 + $0x608] sm:$0xf]
    %v3420 = vld [vmem:[#allocation2 + $0x60c] sm:$0xf]
    %v3421 = vld [vmem:[#allocation2 + $0x610] sm:$0xf]
    %v3422 = vld [vmem:[#allocation2 + $0x614] sm:$0xf]
    %v3423 = vld [vmem:[#allocation2 + $0x618] sm:$0xf]
    %v3424 = vld [vmem:[#allocation2 + $0x61c] sm:$0xf]
    %v3425 = vld [vmem:[#allocation2 + $0x620] sm:$0xf]
    %v3426 = vld [vmem:[#allocation2 + $0x624] sm:$0xf]
    %v3427 = vld [vmem:[#allocation2 + $0x628] sm:$0xf]
    %v3428 = vld [vmem:[#allocation2 + $0x62c] sm:$0xf]
    %v3429 = vld [vmem:[#allocation2 + $0x630] sm:$0xf]
    %v3430 = vld [vmem:[#allocation2 + $0x634] sm:$0xf]
    %v3431 = vld [vmem:[#allocation2 + $0x638] sm:$0xf]
    %v3432 = vld [vmem:[#allocation2 + $0x63c] sm:$0xf]
    %v3433 = vld [vmem:[#allocation2 + $0x640] sm:$0xf]
    %v3434 = vld [vmem:[#allocation2 + $0x644] sm:$0xf]
    %v3435 = vld [vmem:[#allocation2 + $0x648] sm:$0xf]
    %v3436 = vld [vmem:[#allocation2 + $0x64c] sm:$0xf]
    %v3437 = vld [vmem:[#allocation2 + $0x650] sm:$0xf]
    %v3438 = vld [vmem:[#allocation2 + $0x654] sm:$0xf]
    %v3439 = vld [vmem:[#allocation2 + $0x658] sm:$0xf]
    %v3440 = vld [vmem:[#allocation2 + $0x65c] sm:$0xf]
    %v3441 = vld [vmem:[#allocation2 + $0x660] sm:$0xf]
    %v3442 = vld [vmem:[#allocation2 + $0x664] sm:$0xf]
    %v3443 = vld [vmem:[#allocation2 + $0x668] sm:$0xf]
    %v3444 = vld [vmem:[#allocation2 + $0x66c] sm:$0xf]
    %v3445 = vld [vmem:[#allocation2 + $0x670] sm:$0xf]
    %v3446 = vld [vmem:[#allocation2 + $0x674] sm:$0xf]
    %v3447 = vld [vmem:[#allocation2 + $0x678] sm:$0xf]
    %v3448 = vld [vmem:[#allocation2 + $0x67c] sm:$0xf]
    %v3449 = vld [vmem:[%s3 + $0x10] sm:$0x1]
    %v3450 = vlaneseq
    %v3451 = vshrl.u32 %v3450, 7
    %v3452 = vsub.s32 0, %v3451
    %v3453 = vrot.slane %v3449, %v3452
    %v3456 = vrot.slane %v3415, 1
    %v3457 = vrot.slane %v3416, 1
    %v3492 = vunpack.c.l.b16 %v3417
    %v3493 = vunpack.c.l.b16 %v3418
    %v3494 = vunpack.c.l.b16 %v3419
    %v3495 = vunpack.c.l.b16 %v3420
    %v3496 = vunpack.c.l.b16 %v3421
    %v3497 = vunpack.c.l.b16 %v3422
    %v3498 = vunpack.c.l.b16 %v3423
    %v3499 = vunpack.c.l.b16 %v3424
    %v3500 = vunpack.c.l.b16 %v3425
    %v3501 = vunpack.c.l.b16 %v3426
    %v3502 = vunpack.c.l.b16 %v3427
    %v3503 = vunpack.c.l.b16 %v3428
    %v3504 = vunpack.c.l.b16 %v3429
    %v3505 = vunpack.c.l.b16 %v3430
    %v3506 = vunpack.c.l.b16 %v3431
    %v3507 = vunpack.c.l.b16 %v3432
    %v3508 = vunpack.c.l.b16 %v3433
    %v3509 = vunpack.c.l.b16 %v3434
    %v3510 = vunpack.c.l.b16 %v3435
    %v3511 = vunpack.c.l.b16 %v3436
    %v3512 = vunpack.c.l.b16 %v3437
    %v3513 = vunpack.c.l.b16 %v3438
    %v3514 = vunpack.c.l.b16 %v3439
    %v3515 = vunpack.c.l.b16 %v3440
    %v3516 = vunpack.c.l.b16 %v3441
    %v3517 = vunpack.c.l.b16 %v3442
    %v3518 = vunpack.c.l.b16 %v3443
    %v3519 = vunpack.c.l.b16 %v3444
    %v3520 = vunpack.c.l.b16 %v3445
    %v3521 = vunpack.c.l.b16 %v3446
    %v3522 = vunpack.c.l.b16 %v3447
    %v3523 = vunpack.c.l.b16 %v3448
    %v3524 = vpack.c.b16 %v3493, %v3492
    %v3525 = vpack.c.b16 %v3495, %v3494
    %v3526 = vpack.c.b16 %v3497, %v3496
    %v3527 = vpack.c.b16 %v3499, %v3498
    %v3528 = vpack.c.b16 %v3501, %v3500
    %v3529 = vpack.c.b16 %v3503, %v3502
    %v3530 = vpack.c.b16 %v3505, %v3504
    %v3531 = vpack.c.b16 %v3507, %v3506
    %v3532 = vpack.c.b16 %v3509, %v3508
    %v3533 = vpack.c.b16 %v3511, %v3510
    %v3534 = vpack.c.b16 %v3513, %v3512
    %v3535 = vpack.c.b16 %v3515, %v3514
    %v3536 = vpack.c.b16 %v3517, %v3516
    %v3537 = vpack.c.b16 %v3519, %v3518
    %v3538 = vpack.c.b16 %v3521, %v3520
    %v3539 = vpack.c.b16 %v3523, %v3522
    %3556 = vmatprep.subr.bf16.mxu0 0
    %3557 = vmatpush1.bf16.msra.mxu0 %v3524
    %3558 = vmatprep.subr.bf16.mxu0 0
    %3559 = vmatpush1.bf16.msra.mxu0 %v3525
    %3560 = vmatprep.subr.bf16.mxu0 0
    %3561 = vmatpush1.bf16.msra.mxu0 %v3526
    %3562 = vmatprep.subr.bf16.mxu0 0
    %3563 = vmatpush1.bf16.msra.mxu0 %v3527
    %3564 = vmatprep.subr.bf16.mxu0 0
    %3565 = vmatpush1.bf16.msra.mxu0 %v3528
    %3566 = vmatprep.subr.bf16.mxu0 0
    %3567 = vmatpush1.bf16.msra.mxu0 %v3529
    %3568 = vmatprep.subr.bf16.mxu0 0
    %3569 = vmatpush1.bf16.msra.mxu0 %v3530
    %3570 = vmatprep.subr.bf16.mxu0 0
    %3571 = vmatpush1.bf16.msra.mxu0 %v3531
    %3572 = vmatprep.subr.bf16.mxu0 0
    %3573 = vmatpush1.bf16.msra.mxu0 %v3532
    %3574 = vmatprep.subr.bf16.mxu0 0
    %3575 = vmatpush1.bf16.msra.mxu0 %v3533
    %3576 = vmatprep.subr.bf16.mxu0 0
    %3577 = vmatpush1.bf16.msra.mxu0 %v3534
    %3578 = vmatprep.subr.bf16.mxu0 0
    %3579 = vmatpush1.bf16.msra.mxu0 %v3535
    %3580 = vmatprep.subr.bf16.mxu0 0
    %3581 = vmatpush1.bf16.msra.mxu0 %v3536
    %3582 = vmatprep.subr.bf16.mxu0 0
    %3583 = vmatpush1.bf16.msra.mxu0 %v3537
    %3584 = vmatprep.subr.bf16.mxu0 0
    %3585 = vmatpush1.bf16.msra.mxu0 %v3538
    %3586 = vmatprep.subr.bf16.mxu0 0
    %3587 = vmatpush1.bf16.msra.mxu0 %v3539
    %3588 = vmatprep.mubr.bf16.mxu0 %v3457
    %3589 = vmatmul.mubr.bf16.gmra.mrb[0].mxu0 %v3456
    %v3590 = vpop.f32.mrb[0].mxu0
    %v3591 = vadd.f32 %v3453, %v3590
    %v3592 = vpop.f32.mrb[0].mxu0
    %v3593 = vpop.f32.mrb[0].mxu0
    %v3594 = vpop.f32.mrb[0].mxu0
    %3595 = vdwg.mxu0
    %v3596 = vld [vmem:[%s1] sm:$0x3]
    %v3597 = vpack.c.bf16 %v3596, %v3596
    %v3598 = vld [vmem:[#allocation2 + $0x680] sm:$0xf]
    %v3599 = vld [vmem:[#allocation2 + $0x684] sm:$0xf]
    %v3600 = vld [vmem:[#allocation2 + $0x688] sm:$0xf]
    %v3601 = vld [vmem:[#allocation2 + $0x68c] sm:$0xf]
    %v3602 = vld [vmem:[#allocation2 + $0x690] sm:$0xf]
    %v3603 = vld [vmem:[#allocation2 + $0x694] sm:$0xf]
    %v3604 = vld [vmem:[#allocation2 + $0x698] sm:$0xf]
    %v3605 = vld [vmem:[#allocation2 + $0x69c] sm:$0xf]
    %v3606 = vld [vmem:[#allocation2 + $0x6a0] sm:$0xf]
    %v3607 = vld [vmem:[#allocation2 + $0x6a4] sm:$0xf]
    %v3608 = vld [vmem:[#allocation2 + $0x6a8] sm:$0xf]
    %v3609 = vld [vmem:[#allocation2 + $0x6ac] sm:$0xf]
    %v3610 = vld [vmem:[#allocation2 + $0x6b0] sm:$0xf]
    %v3611 = vld [vmem:[#allocation2 + $0x6b4] sm:$0xf]
    %v3612 = vld [vmem:[#allocation2 + $0x6b8] sm:$0xf]
    %v3613 = vld [vmem:[#allocation2 + $0x6bc] sm:$0xf]
    %v3614 = vld [vmem:[%s3 + $0x11] sm:$0x1]
    %v3615 = vlaneseq
    %v3616 = vshrl.u32 %v3615, 7
    %v3617 = vsub.s32 0, %v3616
    %v3618 = vrot.slane %v3614, %v3617
    %v3635 = vunpack.c.l.b16 %v3598
    %v3636 = vunpack.c.l.b16 %v3599
    %v3637 = vunpack.c.l.b16 %v3600
    %v3638 = vunpack.c.l.b16 %v3601
    %v3639 = vunpack.c.l.b16 %v3602
    %v3640 = vunpack.c.l.b16 %v3603
    %v3641 = vunpack.c.l.b16 %v3604
    %v3642 = vunpack.c.l.b16 %v3605
    %v3643 = vunpack.c.l.b16 %v3606
    %v3644 = vunpack.c.l.b16 %v3607
    %v3645 = vunpack.c.l.b16 %v3608
    %v3646 = vunpack.c.l.b16 %v3609
    %v3647 = vunpack.c.l.b16 %v3610
    %v3648 = vunpack.c.l.b16 %v3611
    %v3649 = vunpack.c.l.b16 %v3612
    %v3650 = vunpack.c.l.b16 %v3613
    %v3651 = vpack.c.b16 %v3636, %v3635
    %v3652 = vpack.c.b16 %v3638, %v3637
    %v3653 = vpack.c.b16 %v3640, %v3639
    %v3654 = vpack.c.b16 %v3642, %v3641
    %v3655 = vpack.c.b16 %v3644, %v3643
    %v3656 = vpack.c.b16 %v3646, %v3645
    %v3657 = vpack.c.b16 %v3648, %v3647
    %v3658 = vpack.c.b16 %v3650, %v3649
    %3667 = vmatprep.subr.bf16.mxu0 0
    %3668 = vmatpush1.bf16.msra.mxu0 %v3651
    %3669 = vmatprep.subr.bf16.mxu0 0
    %3670 = vmatpush1.bf16.msra.mxu0 %v3652
    %3671 = vmatprep.subr.bf16.mxu0 0
    %3672 = vmatpush1.bf16.msra.mxu0 %v3653
    %3673 = vmatprep.subr.bf16.mxu0 0
    %3674 = vmatpush1.bf16.msra.mxu0 %v3654
    %3675 = vmatprep.subr.bf16.mxu0 0
    %3676 = vmatpush1.bf16.msra.mxu0 %v3655
    %3677 = vmatprep.subr.bf16.mxu0 0
    %3678 = vmatpush1.bf16.msra.mxu0 %v3656
    %3679 = vmatprep.subr.bf16.mxu0 0
    %3680 = vmatpush1.bf16.msra.mxu0 %v3657
    %3681 = vmatprep.subr.bf16.mxu0 0
    %3682 = vmatpush1.bf16.msra.mxu0 %v3658
    %3683 = vmatprep.subr.bf16.mxu0 0
    %3684 = vmatpush1.bf16.msra.mxu0 0
    %3685 = vmatprep.subr.bf16.mxu0 0
    %3686 = vmatpush1.bf16.msra.mxu0 0
    %3687 = vmatprep.subr.bf16.mxu0 0
    %3688 = vmatpush1.bf16.msra.mxu0 0
    %3689 = vmatprep.subr.bf16.mxu0 0
    %3690 = vmatpush1.bf16.msra.mxu0 0
    %3691 = vmatprep.subr.bf16.mxu0 0
    %3692 = vmatpush1.bf16.msra.mxu0 0
    %3693 = vmatprep.subr.bf16.mxu0 0
    %3694 = vmatpush1.bf16.msra.mxu0 0
    %3695 = vmatprep.subr.bf16.mxu0 0
    %3696 = vmatpush1.bf16.msra.mxu0 0
    %3697 = vmatprep.subr.bf16.mxu0 0
    %3698 = vmatpush1.bf16.msra.mxu0 0
    %3699 = vmatprep.mubr.bf16.mxu0 0
    %3700 = vmatmul.mubr.bf16.gmra.mrb[0].mxu0 %v3597
    %v3701 = vpop.f32.mrb[0].mxu0
    %v3702 = vadd.f32 %v3618, %v3701
    %v3703 = vpop.f32.mrb[0].mxu0
    %v3704 = vpop.f32.mrb[0].mxu0
    %v3705 = vpop.f32.mrb[0].mxu0
    %3706 = vdwg.mxu0
    %v3707 = vmax.f32 %v3702, 0.0
    %v3708 = vpack.c.bf16 %v3707, %v3707
    %v3709 = vld [vmem:[#allocation2 + $0x6c0] sm:$0xf]
    %v3710 = vld [vmem:[#allocation2 + $0x6c4] sm:$0xf]
    %v3711 = vld [vmem:[#allocation2 + $0x6c8] sm:$0xf]
    %v3712 = vld [vmem:[#allocation2 + $0x6cc] sm:$0xf]
    %v3713 = vld [vmem:[#allocation2 + $0x6d0] sm:$0xf]
    %v3714 = vld [vmem:[#allocation2 + $0x6d4] sm:$0xf]
    %v3715 = vld [vmem:[#allocation2 + $0x6d8] sm:$0xf]
    %v3716 = vld [vmem:[#allocation2 + $0x6dc] sm:$0xf]
    %v3717 = vld [vmem:[#allocation2 + $0x6e0] sm:$0xf]
    %v3718 = vld [vmem:[#allocation2 + $0x6e4] sm:$0xf]
    %v3719 = vld [vmem:[#allocation2 + $0x6e8] sm:$0xf]
    %v3720 = vld [vmem:[#allocation2 + $0x6ec] sm:$0xf]
    %v3721 = vld [vmem:[#allocation2 + $0x6f0] sm:$0xf]
    %v3722 = vld [vmem:[#allocation2 + $0x6f4] sm:$0xf]
    %v3723 = vld [vmem:[#allocation2 + $0x6f8] sm:$0xf]
    %v3724 = vld [vmem:[#allocation2 + $0x6fc] sm:$0xf]
    %v3725 = vld [vmem:[%s3 + $0x12] sm:$0x1]
    %v3726 = vlaneseq
    %v3727 = vshrl.u32 %v3726, 7
    %v3728 = vsub.s32 0, %v3727
    %v3729 = vrot.slane %v3725, %v3728
    %v3746 = vunpack.c.l.b16 %v3709
    %v3747 = vunpack.c.l.b16 %v3710
    %v3748 = vunpack.c.l.b16 %v3711
    %v3749 = vunpack.c.l.b16 %v3712
    %v3750 = vunpack.c.l.b16 %v3713
    %v3751 = vunpack.c.l.b16 %v3714
    %v3752 = vunpack.c.l.b16 %v3715
    %v3753 = vunpack.c.l.b16 %v3716
    %v3754 = vunpack.c.l.b16 %v3717
    %v3755 = vunpack.c.l.b16 %v3718
    %v3756 = vunpack.c.l.b16 %v3719
    %v3757 = vunpack.c.l.b16 %v3720
    %v3758 = vunpack.c.l.b16 %v3721
    %v3759 = vunpack.c.l.b16 %v3722
    %v3760 = vunpack.c.l.b16 %v3723
    %v3761 = vunpack.c.l.b16 %v3724
    %v3762 = vpack.c.b16 %v3747, %v3746
    %v3763 = vpack.c.b16 %v3749, %v3748
    %v3764 = vpack.c.b16 %v3751, %v3750
    %v3765 = vpack.c.b16 %v3753, %v3752
    %v3766 = vpack.c.b16 %v3755, %v3754
    %v3767 = vpack.c.b16 %v3757, %v3756
    %v3768 = vpack.c.b16 %v3759, %v3758
    %v3769 = vpack.c.b16 %v3761, %v3760
    %3778 = vmatprep.subr.bf16.mxu0 0
    %3779 = vmatpush1.bf16.msra.mxu0 %v3762
    %3780 = vmatprep.subr.bf16.mxu0 0
    %3781 = vmatpush1.bf16.msra.mxu0 %v3763
    %3782 = vmatprep.subr.bf16.mxu0 0
    %3783 = vmatpush1.bf16.msra.mxu0 %v3764
    %3784 = vmatprep.subr.bf16.mxu0 0
    %3785 = vmatpush1.bf16.msra.mxu0 %v3765
    %3786 = vmatprep.subr.bf16.mxu0 0
    %3787 = vmatpush1.bf16.msra.mxu0 %v3766
    %3788 = vmatprep.subr.bf16.mxu0 0
    %3789 = vmatpush1.bf16.msra.mxu0 %v3767
    %3790 = vmatprep.subr.bf16.mxu0 0
    %3791 = vmatpush1.bf16.msra.mxu0 %v3768
    %3792 = vmatprep.subr.bf16.mxu0 0
    %3793 = vmatpush1.bf16.msra.mxu0 %v3769
    %3794 = vmatprep.subr.bf16.mxu0 0
    %3795 = vmatpush1.bf16.msra.mxu0 0
    %3796 = vmatprep.subr.bf16.mxu0 0
    %3797 = vmatpush1.bf16.msra.mxu0 0
    %3798 = vmatprep.subr.bf16.mxu0 0
    %3799 = vmatpush1.bf16.msra.mxu0 0
    %3800 = vmatprep.subr.bf16.mxu0 0
    %3801 = vmatpush1.bf16.msra.mxu0 0
    %3802 = vmatprep.subr.bf16.mxu0 0
    %3803 = vmatpush1.bf16.msra.mxu0 0
    %3804 = vmatprep.subr.bf16.mxu0 0
    %3805 = vmatpush1.bf16.msra.mxu0 0
    %3806 = vmatprep.subr.bf16.mxu0 0
    %3807 = vmatpush1.bf16.msra.mxu0 0
    %3808 = vmatprep.subr.bf16.mxu0 0
    %3809 = vmatpush1.bf16.msra.mxu0 0
    %3810 = vmatprep.mubr.bf16.mxu0 0
    %3811 = vmatmul.mubr.bf16.gmra.mrb[0].mxu0 %v3708
    %v3812 = vpop.f32.mrb[0].mxu0
    %v3813 = vadd.f32 %v3729, %v3812
    %v3814 = vpop.f32.mrb[0].mxu0
    %v3815 = vpop.f32.mrb[0].mxu0
    %v3816 = vpop.f32.mrb[0].mxu0
    %3817 = vdwg.mxu0
    %v3818 = vmax.f32 %v3813, 0.0
    %v3819 = vpack.c.bf16 %v3818, %v3818
    %v3820 = vld [vmem:[#allocation2 + $0x700] sm:$0xf]
    %v3821 = vld [vmem:[#allocation2 + $0x704] sm:$0xf]
    %v3822 = vld [vmem:[#allocation2 + $0x708] sm:$0xf]
    %v3823 = vld [vmem:[#allocation2 + $0x70c] sm:$0xf]
    %v3824 = vld [vmem:[#allocation2 + $0x710] sm:$0xf]
    %v3825 = vld [vmem:[#allocation2 + $0x714] sm:$0xf]
    %v3826 = vld [vmem:[#allocation2 + $0x718] sm:$0xf]
    %v3827 = vld [vmem:[#allocation2 + $0x71c] sm:$0xf]
    %v3828 = vld [vmem:[#allocation2 + $0x720] sm:$0xf]
    %v3829 = vld [vmem:[#allocation2 + $0x724] sm:$0xf]
    %v3830 = vld [vmem:[#allocation2 + $0x728] sm:$0xf]
    %v3831 = vld [vmem:[#allocation2 + $0x72c] sm:$0xf]
    %v3832 = vld [vmem:[#allocation2 + $0x730] sm:$0xf]
    %v3833 = vld [vmem:[#allocation2 + $0x734] sm:$0xf]
    %v3834 = vld [vmem:[#allocation2 + $0x738] sm:$0xf]
    %v3835 = vld [vmem:[#allocation2 + $0x73c] sm:$0xf]
    %v3836 = vld [vmem:[%s3 + $0x13] sm:$0x1]
    %v3837 = vlaneseq
    %v3838 = vshrl.u32 %v3837, 7
    %v3839 = vsub.s32 0, %v3838
    %v3840 = vrot.slane %v3836, %v3839
    %v3857 = vunpack.c.l.b16 %v3820
    %v3858 = vunpack.c.l.b16 %v3821
    %v3859 = vunpack.c.l.b16 %v3822
    %v3860 = vunpack.c.l.b16 %v3823
    %v3861 = vunpack.c.l.b16 %v3824
    %v3862 = vunpack.c.l.b16 %v3825
    %v3863 = vunpack.c.l.b16 %v3826
    %v3864 = vunpack.c.l.b16 %v3827
    %v3865 = vunpack.c.l.b16 %v3828
    %v3866 = vunpack.c.l.b16 %v3829
    %v3867 = vunpack.c.l.b16 %v3830
    %v3868 = vunpack.c.l.b16 %v3831
    %v3869 = vunpack.c.l.b16 %v3832
    %v3870 = vunpack.c.l.b16 %v3833
    %v3871 = vunpack.c.l.b16 %v3834
    %v3872 = vunpack.c.l.b16 %v3835
    %v3873 = vpack.c.b16 %v3858, %v3857
    %v3874 = vpack.c.b16 %v3860, %v3859
    %v3875 = vpack.c.b16 %v3862, %v3861
    %v3876 = vpack.c.b16 %v3864, %v3863
    %v3877 = vpack.c.b16 %v3866, %v3865
    %v3878 = vpack.c.b16 %v3868, %v3867
    %v3879 = vpack.c.b16 %v3870, %v3869
    %v3880 = vpack.c.b16 %v3872, %v3871
    %3889 = vmatprep.subr.bf16.mxu0 0
    %3890 = vmatpush1.bf16.msra.mxu0 %v3873
    %3891 = vmatprep.subr.bf16.mxu0 0
    %3892 = vmatpush1.bf16.msra.mxu0 %v3874
    %3893 = vmatprep.subr.bf16.mxu0 0
    %3894 = vmatpush1.bf16.msra.mxu0 %v3875
    %3895 = vmatprep.subr.bf16.mxu0 0
    %3896 = vmatpush1.bf16.msra.mxu0 %v3876
    %3897 = vmatprep.subr.bf16.mxu0 0
    %3898 = vmatpush1.bf16.msra.mxu0 %v3877
    %3899 = vmatprep.subr.bf16.mxu0 0
    %3900 = vmatpush1.bf16.msra.mxu0 %v3878
    %3901 = vmatprep.subr.bf16.mxu0 0
    %3902 = vmatpush1.bf16.msra.mxu0 %v3879
    %3903 = vmatprep.subr.bf16.mxu0 0
    %3904 = vmatpush1.bf16.msra.mxu0 %v3880
    %3905 = vmatprep.subr.bf16.mxu0 0
    %3906 = vmatpush1.bf16.msra.mxu0 0
    %3907 = vmatprep.subr.bf16.mxu0 0
    %3908 = vmatpush1.bf16.msra.mxu0 0
    %3909 = vmatprep.subr.bf16.mxu0 0
    %3910 = vmatpush1.bf16.msra.mxu0 0
    %3911 = vmatprep.subr.bf16.mxu0 0
    %3912 = vmatpush1.bf16.msra.mxu0 0
    %3913 = vmatprep.subr.bf16.mxu0 0
    %3914 = vmatpush1.bf16.msra.mxu0 0
    %3915 = vmatprep.subr.bf16.mxu0 0
    %3916 = vmatpush1.bf16.msra.mxu0 0
    %3917 = vmatprep.subr.bf16.mxu0 0
    %3918 = vmatpush1.bf16.msra.mxu0 0
    %3919 = vmatprep.subr.bf16.mxu0 0
    %3920 = vmatpush1.bf16.msra.mxu0 0
    %3921 = vmatprep.mubr.bf16.mxu0 0
    %3922 = vmatmul.mubr.bf16.gmra.mrb[0].mxu0 %v3819
    %v3923 = vpop.f32.mrb[0].mxu0
    %v3924 = vadd.f32 %v3840, %v3923
    %v3925 = vpop.f32.mrb[0].mxu0
    %v3926 = vpop.f32.mrb[0].mxu0
    %v3927 = vpop.f32.mrb[0].mxu0
    %3928 = vdwg.mxu0
    %v3929 = vpack.c.bf16 %v3591, %v3591
    %v3930 = vld [vmem:[#allocation2 + $0x740] sm:$0xf]
    %v3931 = vld [vmem:[#allocation2 + $0x744] sm:$0xf]
    %v3932 = vld [vmem:[#allocation2 + $0x748] sm:$0xf]
    %v3933 = vld [vmem:[#allocation2 + $0x74c] sm:$0xf]
    %v3934 = vld [vmem:[#allocation2 + $0x750] sm:$0xf]
    %v3935 = vld [vmem:[#allocation2 + $0x754] sm:$0xf]
    %v3936 = vld [vmem:[#allocation2 + $0x758] sm:$0xf]
    %v3937 = vld [vmem:[#allocation2 + $0x75c] sm:$0xf]
    %v3938 = vld [vmem:[#allocation2 + $0x760] sm:$0xf]
    %v3939 = vld [vmem:[#allocation2 + $0x764] sm:$0xf]
    %v3940 = vld [vmem:[#allocation2 + $0x768] sm:$0xf]
    %v3941 = vld [vmem:[#allocation2 + $0x76c] sm:$0xf]
    %v3942 = vld [vmem:[#allocation2 + $0x770] sm:$0xf]
    %v3943 = vld [vmem:[#allocation2 + $0x774] sm:$0xf]
    %v3944 = vld [vmem:[#allocation2 + $0x778] sm:$0xf]
    %v3945 = vld [vmem:[#allocation2 + $0x77c] sm:$0xf]
    %v3946 = vpack.c.bf16 %v3924, %v3924
    %v3947 = vld [vmem:[#allocation2 + $0x780] sm:$0xf]
    %v3948 = vld [vmem:[#allocation2 + $0x784] sm:$0xf]
    %v3949 = vld [vmem:[#allocation2 + $0x788] sm:$0xf]
    %v3950 = vld [vmem:[#allocation2 + $0x78c] sm:$0xf]
    %v3951 = vld [vmem:[#allocation2 + $0x790] sm:$0xf]
    %v3952 = vld [vmem:[#allocation2 + $0x794] sm:$0xf]
    %v3953 = vld [vmem:[#allocation2 + $0x798] sm:$0xf]
    %v3954 = vld [vmem:[#allocation2 + $0x79c] sm:$0xf]
    %v3955 = vld [vmem:[#allocation2 + $0x7a0] sm:$0xf]
    %v3956 = vld [vmem:[#allocation2 + $0x7a4] sm:$0xf]
    %v3957 = vld [vmem:[#allocation2 + $0x7a8] sm:$0xf]
    %v3958 = vld [vmem:[#allocation2 + $0x7ac] sm:$0xf]
    %v3959 = vld [vmem:[#allocation2 + $0x7b0] sm:$0xf]
    %v3960 = vld [vmem:[#allocation2 + $0x7b4] sm:$0xf]
    %v3961 = vld [vmem:[#allocation2 + $0x7b8] sm:$0xf]
    %v3962 = vld [vmem:[#allocation2 + $0x7bc] sm:$0xf]
    %v3979 = vunpack.c.l.b16 %v3947
    %v3980 = vunpack.c.l.b16 %v3948
    %v3981 = vunpack.c.l.b16 %v3949
    %v3982 = vunpack.c.l.b16 %v3950
    %v3983 = vunpack.c.l.b16 %v3951
    %v3984 = vunpack.c.l.b16 %v3952
    %v3985 = vunpack.c.l.b16 %v3953
    %v3986 = vunpack.c.l.b16 %v3954
    %v3987 = vunpack.c.l.b16 %v3955
    %v3988 = vunpack.c.l.b16 %v3956
    %v3989 = vunpack.c.l.b16 %v3957
    %v3990 = vunpack.c.l.b16 %v3958
    %v3991 = vunpack.c.l.b16 %v3959
    %v3992 = vunpack.c.l.b16 %v3960
    %v3993 = vunpack.c.l.b16 %v3961
    %v3994 = vunpack.c.l.b16 %v3962
    %v3995 = vpack.c.b16 %v3980, %v3979
    %v3996 = vpack.c.b16 %v3982, %v3981
    %v3997 = vpack.c.b16 %v3984, %v3983
    %v3998 = vpack.c.b16 %v3986, %v3985
    %v3999 = vpack.c.b16 %v3988, %v3987
    %v4000 = vpack.c.b16 %v3990, %v3989
    %v4001 = vpack.c.b16 %v3992, %v3991
    %v4002 = vpack.c.b16 %v3994, %v3993
    %4011 = vmatprep.subr.bf16.mxu0 0
    %4012 = vmatpush1.bf16.msra.mxu0 %v3995
    %4013 = vmatprep.subr.bf16.mxu0 0
    %4014 = vmatpush1.bf16.msra.mxu0 %v3996
    %4015 = vmatprep.subr.bf16.mxu0 0
    %4016 = vmatpush1.bf16.msra.mxu0 %v3997
    %4017 = vmatprep.subr.bf16.mxu0 0
    %4018 = vmatpush1.bf16.msra.mxu0 %v3998
    %4019 = vmatprep.subr.bf16.mxu0 0
    %4020 = vmatpush1.bf16.msra.mxu0 %v3999
    %4021 = vmatprep.subr.bf16.mxu0 0
    %4022 = vmatpush1.bf16.msra.mxu0 %v4000
    %4023 = vmatprep.subr.bf16.mxu0 0
    %4024 = vmatpush1.bf16.msra.mxu0 %v4001
    %4025 = vmatprep.subr.bf16.mxu0 0
    %4026 = vmatpush1.bf16.msra.mxu0 %v4002
    %4027 = vmatprep.subr.bf16.mxu0 0
    %4028 = vmatpush1.bf16.msra.mxu0 0
    %4029 = vmatprep.subr.bf16.mxu0 0
    %4030 = vmatpush1.bf16.msra.mxu0 0
    %4031 = vmatprep.subr.bf16.mxu0 0
    %4032 = vmatpush1.bf16.msra.mxu0 0
    %4033 = vmatprep.subr.bf16.mxu0 0
    %4034 = vmatpush1.bf16.msra.mxu0 0
    %4035 = vmatprep.subr.bf16.mxu0 0
    %4036 = vmatpush1.bf16.msra.mxu0 0
    %4037 = vmatprep.subr.bf16.mxu0 0
    %4038 = vmatpush1.bf16.msra.mxu0 0
    %4039 = vmatprep.subr.bf16.mxu0 0
    %4040 = vmatpush1.bf16.msra.mxu0 0
    %4041 = vmatprep.subr.bf16.mxu0 0
    %4042 = vmatpush1.bf16.msra.mxu0 0
    %4043 = vmatprep.mubr.bf16.mxu0 0
    %4044 = vmatmul.mubr.bf16.gmra.mrb[0].mxu0 %v3946
    %v4045 = vpop.f32.mrb[0].mxu0
    %v4046 = vadd.f32 0.0, %v4045
    %v4047 = vpop.f32.mrb[0].mxu0
    %v4048 = vpop.f32.mrb[0].mxu0
    %v4049 = vpop.f32.mrb[0].mxu0
    %4050 = vdwg.mxu0
    %v4067 = vunpack.c.l.b16 %v3930
    %v4068 = vunpack.c.l.b16 %v3931
    %v4069 = vunpack.c.l.b16 %v3932
    %v4070 = vunpack.c.l.b16 %v3933
    %v4071 = vunpack.c.l.b16 %v3934
    %v4072 = vunpack.c.l.b16 %v3935
    %v4073 = vunpack.c.l.b16 %v3936
    %v4074 = vunpack.c.l.b16 %v3937
    %v4075 = vunpack.c.l.b16 %v3938
    %v4076 = vunpack.c.l.b16 %v3939
    %v4077 = vunpack.c.l.b16 %v3940
    %v4078 = vunpack.c.l.b16 %v3941
    %v4079 = vunpack.c.l.b16 %v3942
    %v4080 = vunpack.c.l.b16 %v3943
    %v4081 = vunpack.c.l.b16 %v3944
    %v4082 = vunpack.c.l.b16 %v3945
    %v4083 = vpack.c.b16 %v4068, %v4067
    %v4084 = vpack.c.b16 %v4070, %v4069
    %v4085 = vpack.c.b16 %v4072, %v4071
    %v4086 = vpack.c.b16 %v4074, %v4073
    %v4087 = vpack.c.b16 %v4076, %v4075
    %v4088 = vpack.c.b16 %v4078, %v4077
    %v4089 = vpack.c.b16 %v4080, %v4079
    %v4090 = vpack.c.b16 %v4082, %v4081
    %4099 = vmatprep.subr.bf16.mxu0 0
    %4100 = vmatpush1.bf16.msra.mxu0 %v4083
    %4101 = vmatprep.subr.bf16.mxu0 0
    %4102 = vmatpush1.bf16.msra.mxu0 %v4084
    %4103 = vmatprep.subr.bf16.mxu0 0
    %4104 = vmatpush1.bf16.msra.mxu0 %v4085
    %4105 = vmatprep.subr.bf16.mxu0 0
    %4106 = vmatpush1.bf16.msra.mxu0 %v4086
    %4107 = vmatprep.subr.bf16.mxu0 0
    %4108 = vmatpush1.bf16.msra.mxu0 %v4087
    %4109 = vmatprep.subr.bf16.mxu0 0
    %4110 = vmatpush1.bf16.msra.mxu0 %v4088
    %4111 = vmatprep.subr.bf16.mxu0 0
    %4112 = vmatpush1.bf16.msra.mxu0 %v4089
    %4113 = vmatprep.subr.bf16.mxu0 0
    %4114 = vmatpush1.bf16.msra.mxu0 %v4090
    %4115 = vmatprep.subr.bf16.mxu0 0
    %4116 = vmatpush1.bf16.msra.mxu0 0
    %4117 = vmatprep.subr.bf16.mxu0 0
    %4118 = vmatpush1.bf16.msra.mxu0 0
    %4119 = vmatprep.subr.bf16.mxu0 0
    %4120 = vmatpush1.bf16.msra.mxu0 0
    %4121 = vmatprep.subr.bf16.mxu0 0
    %4122 = vmatpush1.bf16.msra.mxu0 0
    %4123 = vmatprep.subr.bf16.mxu0 0
    %4124 = vmatpush1.bf16.msra.mxu0 0
    %4125 = vmatprep.subr.bf16.mxu0 0
    %4126 = vmatpush1.bf16.msra.mxu0 0
    %4127 = vmatprep.subr.bf16.mxu0 0
    %4128 = vmatpush1.bf16.msra.mxu0 0
    %4129 = vmatprep.subr.bf16.mxu0 0
    %4130 = vmatpush1.bf16.msra.mxu0 0
    %4131 = vmatprep.mubr.bf16.mxu0 0
    %4132 = vmatmul.mubr.bf16.gmra.mrb[0].mxu0 %v3929
    %v4133 = vpop.f32.mrb[0].mxu0
    %v4134 = vadd.f32 %v4046, %v4133
    %v4135 = vpop.f32.mrb[0].mxu0
    %v4136 = vpop.f32.mrb[0].mxu0
    %v4137 = vpop.f32.mrb[0].mxu0
    %4138 = vdwg.mxu0
    %v4139 = vld [vmem:[%s3 + $0x14] sm:$0x1]
    %v4140 = vlaneseq
    %v4141 = vshrl.u32 %v4140, 7
    %v4142 = vsub.s32 0, %v4141
    %v4143 = vrot.slane %v4139, %v4142
    %v4144 = vadd.f32 %v4134, %v4143
    %v4145 = vmax.f32 %v4144, 0.0
    %v4146 = vpack.c.bf16 %v4145, %v4145
    %v4147 = vld [vmem:[#allocation2 + $0x7c0] sm:$0xf]
    %v4148 = vld [vmem:[#allocation2 + $0x7c4] sm:$0xf]
    %v4149 = vld [vmem:[#allocation2 + $0x7c8] sm:$0xf]
    %v4150 = vld [vmem:[#allocation2 + $0x7cc] sm:$0xf]
    %v4151 = vld [vmem:[#allocation2 + $0x7d0] sm:$0xf]
    %v4152 = vld [vmem:[#allocation2 + $0x7d4] sm:$0xf]
    %v4153 = vld [vmem:[#allocation2 + $0x7d8] sm:$0xf]
    %v4154 = vld [vmem:[#allocation2 + $0x7dc] sm:$0xf]
    %v4155 = vld [vmem:[#allocation2 + $0x7e0] sm:$0xf]
    %v4156 = vld [vmem:[#allocation2 + $0x7e4] sm:$0xf]
    %v4157 = vld [vmem:[#allocation2 + $0x7e8] sm:$0xf]
    %v4158 = vld [vmem:[#allocation2 + $0x7ec] sm:$0xf]
    %v4159 = vld [vmem:[#allocation2 + $0x7f0] sm:$0xf]
    %v4160 = vld [vmem:[#allocation2 + $0x7f4] sm:$0xf]
    %v4161 = vld [vmem:[#allocation2 + $0x7f8] sm:$0xf]
    %v4162 = vld [vmem:[#allocation2 + $0x7fc] sm:$0xf]
    %v4163 = vld [vmem:[%s3 + $0x15] sm:$0x1]
    %v4164 = vlaneseq
    %v4165 = vshrl.u32 %v4164, 7
    %v4166 = vsub.s32 0, %v4165
    %v4167 = vrot.slane %v4163, %v4166
    %v4184 = vunpack.c.l.b16 %v4147
    %v4185 = vunpack.c.l.b16 %v4148
    %v4186 = vunpack.c.l.b16 %v4149
    %v4187 = vunpack.c.l.b16 %v4150
    %v4188 = vunpack.c.l.b16 %v4151
    %v4189 = vunpack.c.l.b16 %v4152
    %v4190 = vunpack.c.l.b16 %v4153
    %v4191 = vunpack.c.l.b16 %v4154
    %v4192 = vunpack.c.l.b16 %v4155
    %v4193 = vunpack.c.l.b16 %v4156
    %v4194 = vunpack.c.l.b16 %v4157
    %v4195 = vunpack.c.l.b16 %v4158
    %v4196 = vunpack.c.l.b16 %v4159
    %v4197 = vunpack.c.l.b16 %v4160
    %v4198 = vunpack.c.l.b16 %v4161
    %v4199 = vunpack.c.l.b16 %v4162
    %v4200 = vpack.c.b16 %v4185, %v4184
    %v4201 = vpack.c.b16 %v4187, %v4186
    %v4202 = vpack.c.b16 %v4189, %v4188
    %v4203 = vpack.c.b16 %v4191, %v4190
    %v4204 = vpack.c.b16 %v4193, %v4192
    %v4205 = vpack.c.b16 %v4195, %v4194
    %v4206 = vpack.c.b16 %v4197, %v4196
    %v4207 = vpack.c.b16 %v4199, %v4198
    %4216 = vmatprep.subr.bf16.mxu0 0
    %4217 = vmatpush1.bf16.msra.mxu0 %v4200
    %4218 = vmatprep.subr.bf16.mxu0 0
    %4219 = vmatpush1.bf16.msra.mxu0 %v4201
    %4220 = vmatprep.subr.bf16.mxu0 0
    %4221 = vmatpush1.bf16.msra.mxu0 %v4202
    %4222 = vmatprep.subr.bf16.mxu0 0
    %4223 = vmatpush1.bf16.msra.mxu0 %v4203
    %4224 = vmatprep.subr.bf16.mxu0 0
    %4225 = vmatpush1.bf16.msra.mxu0 %v4204
    %4226 = vmatprep.subr.bf16.mxu0 0
    %4227 = vmatpush1.bf16.msra.mxu0 %v4205
    %4228 = vmatprep.subr.bf16.mxu0 0
    %4229 = vmatpush1.bf16.msra.mxu0 %v4206
    %4230 = vmatprep.subr.bf16.mxu0 0
    %4231 = vmatpush1.bf16.msra.mxu0 %v4207
    %4232 = vmatprep.subr.bf16.mxu0 0
    %4233 = vmatpush1.bf16.msra.mxu0 0
    %4234 = vmatprep.subr.bf16.mxu0 0
    %4235 = vmatpush1.bf16.msra.mxu0 0
    %4236 = vmatprep.subr.bf16.mxu0 0
    %4237 = vmatpush1.bf16.msra.mxu0 0
    %4238 = vmatprep.subr.bf16.mxu0 0
    %4239 = vmatpush1.bf16.msra.mxu0 0
    %4240 = vmatprep.subr.bf16.mxu0 0
    %4241 = vmatpush1.bf16.msra.mxu0 0
    %4242 = vmatprep.subr.bf16.mxu0 0
    %4243 = vmatpush1.bf16.msra.mxu0 0
    %4244 = vmatprep.subr.bf16.mxu0 0
    %4245 = vmatpush1.bf16.msra.mxu0 0
    %4246 = vmatprep.subr.bf16.mxu0 0
    %4247 = vmatpush1.bf16.msra.mxu0 0
    %4248 = vmatprep.mubr.bf16.mxu0 0
    %4249 = vmatmul.mubr.bf16.gmra.mrb[0].mxu0 %v4146
    %v4250 = vpop.f32.mrb[0].mxu0
    %v4251 = vadd.f32 %v4167, %v4250
    %v4252 = vpop.f32.mrb[0].mxu0
    %v4253 = vpop.f32.mrb[0].mxu0
    %v4254 = vpop.f32.mrb[0].mxu0
    %4255 = vdwg.mxu0
    %4256 = vst [vmem:[#allocation5] sm:$0x3] %v4251
    // Predicated region
    $region22: #{gene_interaction_forward.1} parent=1 // pred_check
      _
    $region23: #{gene_interaction_forward.1} parent=1 // pred_check_branch
      %4258 = sbr.rel (0) target = $region25
    $region24: #{gene_interaction_forward.1} parent=1 // pred_region
      %s4260 = ssub.s32 32, 32
      %4261 = vsyncadd [#allocation4], %s4260
      %s4263 = sshll.u32 [#allocation5], 4
      %s4264 = int_to_ptr.vmem [resolvable:$true] %s4263
      %4266 = dma.vmem_to_hbm [thread:$0]  %s4264, 32, %s4, [#allocation4]
    $region25: #{gene_interaction_forward.1} parent=1 // pred_fallthru
      _
    // Predicated region
    $region26: #{gene_interaction_forward.1} parent=1 // pred_check
      _
    $region27: #{gene_interaction_forward.1} parent=1 // pred_check_branch
      %4268 = sbr.rel (0) target = $region29
    $region28: #{gene_interaction_forward.1} parent=1 // pred_region
      %4269 = dma.done [#allocation4], 32
    $region29: #{gene_interaction_forward.1} parent=1 // pred_fallthru
      _
    %4270 = vsyncpa [#allocation3], 1
    %4271 = vsyncpa [#allocation4], 1

</llo_original>
